<compile_context>
chip_gen: v6e
topology: v6e:2x2x1
jax: 0.10.0
libtpu: 0.0.40
codegen_flags: <defaults>
</compile_context>

<pallas_src>
import functools

import jax
import jax.numpy as jnp
from jax import lax
from jax.experimental import pallas as pl
from jax.experimental.pallas import tpu as pltpu


def _round_up(x, m):
    return -(-x // m) * m


def _cdiv(a, b):
    return -(-a // b)


def _vmem_capacity_bytes():
    """Physical VMEM per TensorCore; conservative (v7x-sized) default."""
    try:
        return int(pltpu.get_tpu_info().vmem_capacity_bytes)
    except Exception:
        return 64 * 1024 * 1024


def _temp_bytes(P, C, Rp):
    """Rough per-bilerp live f32 temporaries: one-hots, MXU output, products."""
    return (3 * C + 6 * Rp) * P * 4


def _pick_point_tile(HW, B, C, Rp, field_bytes_total, vmem_cap):
    """Point-tile size: always a multiple of 128, VMEM/generation-aware."""
    small_vmem = vmem_cap < (100 << 20)            # v7x-class (64 MiB) parts
    p_max = 512 if small_vmem else 1024            # bigger tiles on v5e/v6e
    budget = min(int(0.6 * vmem_cap), 96 << 20)
    P = min(p_max, _round_up(HW, 128))
    while P > 128 and field_bytes_total + 2 * _temp_bytes(P, C, Rp) > budget:
        P //= 2
    # Keep at least 2 grid cells so a second TensorCore (v7x) has work.
    if B * _cdiv(HW, P) < 2 and HW > 128:
        P = max(128, _round_up(_cdiv(HW, 2), 128))
    return P


def _field_block_spec(block_shape, index_map, single_buffer):
    # The field block index is constant along the point-tile axis, so on
    # VMEM-tight parts a single buffer suffices (one exposed DMA per batch
    # change) and halves the largest VMEM residents.
    if single_buffer and hasattr(pl, "Buffered"):
        try:
            return pl.BlockSpec(block_shape, index_map,
                                pipeline_mode=pl.Buffered(1))
        except TypeError:
            pass
    return pl.BlockSpec(block_shape, index_map)


def _ivp_loss_kernel(vf_true_ref, vf_pred_ref, out_ref, *,
                     W, P, dx, n_steps, C, R, Rp, x_contracted,
                     unroll, use_bf16_dot):
    # vf_*_ref: (1, 2*Rp, C) f32.  Rows [0:Rp] = x-displacement channel,
    # rows [Rp:2*Rp] = y-displacement channel (reduced axis zero-padded to Rp).
    vt2 = vf_true_ref[0]   # (2*Rp, C)
    vp2 = vf_pred_ref[0]
    if use_bf16_dot:
        vt2 = vt2.astype(jnp.bfloat16)
        vp2 = vp2.astype(jnp.bfloat16)

    # Hoisted f32 iotas (built once per grid cell, reused by all 16 bilerps).
    cg = lax.broadcasted_iota(jnp.int32, (C, P), 0).astype(jnp.float32)
    rg = lax.broadcasted_iota(jnp.int32, (Rp, P), 0).astype(jnp.float32)

    # Initial values for this tile of P sample points (flat index -> (x, y)).
    # Padded points (pid >= H*W) have y >= H; their clamped interpolation
    # weights net to zero so they freeze and contribute exactly 0.
    t_idx = pl.program_id(1)
    pid = lax.broadcasted_iota(jnp.int32, (1, P), 1) + t_idx * P
    pid_f = pid.astype(jnp.float32)
    w_f = jnp.float32(W)
    py0 = jnp.floor(pid_f * jnp.float32(1.0 / W))
    px0 = pid_f - py0 * w_f
    # One-step correction for float-division rounding (off by at most 1).
    hi = px0 >= w_f
    lo = px0 < 0.0
    py0 = py0 + jnp.where(hi, 1.0, 0.0) - jnp.where(lo, 1.0, 0.0)
    px0 = px0 - jnp.where(hi, w_f, 0.0) + jnp.where(lo, w_f, 0.0)

    cmax = jnp.float32(C - 1)   # contracted-axis clamp
    rmax = jnp.float32(R - 1)   # reduced-axis clamp (unpadded extent)

    def bilerp(vf2, px, py):
        # px, py: (1, P) float image coords (x = column in [0,W), y = row in [0,H)).
        u = px if x_contracted else py   # contracted-axis coordinate
        v = py if x_contracted else px   # reduced-axis coordinate
        u0 = jnp.floor(u)
        v0 = jnp.floor(v)
        u0c = jnp.clip(u0, 0.0, cmax)
        u1c = jnp.clip(u0 + 1.0, 0.0, cmax)
        v0c = jnp.clip(v0, 0.0, rmax)
        v1c = jnp.clip(v0 + 1.0, 0.0, rmax)
        # Separable corner weights from the *clamped* corner coords.
        wu0 = u1c - u
        wu1 = u - u0c
        wv0 = v1c - v
        wv1 = v - v0c
        # One-hot weight matrices; coincident (clamped) corners sum to zero,
        # reproducing the gather semantics (zero field at/out of the border).
        c1h = jnp.where(cg == u0c, wu0, 0.0) + jnp.where(cg == u1c, wu1, 0.0)  # (C, P)
        r1h = jnp.where(rg == v0c, wv0, 0.0) + jnp.where(rg == v1c, wv1, 0.0)  # (Rp, P)
        if use_bf16_dot:
            c1h = c1h.astype(jnp.bfloat16)
        # Contracted-axis gather on the MXU, then reduced-axis multiply-reduce.
        tmp = jnp.dot(vf2, c1h, preferred_element_type=jnp.float32)            # (2*Rp, P)
        ux = jnp.sum(tmp[:Rp, :] * r1h, axis=0, keepdims=True)                 # x-displacement
        uy = jnp.sum(tmp[Rp:, :] * r1h, axis=0, keepdims=True)                 # y-displacement
        return ux, uy

    # Euler integration (default solver).
    # TODO(synk): 'midpoint' / 'runge_kutta' solvers and 'nearest_batched'
    # interpolation (non-default configs) are not implemented.
    def step(_, carry):
        pxt, pyt, pxp, pyp, acc = carry
        uxt, uyt = bilerp(vt2, pxt, pyt)
        uxp, uyp = bilerp(vp2, pxp, pyp)
        pxt = pxt + dx * uxt
        pyt = pyt + dx * uyt
        pxp = pxp + dx * uxp
        pyp = pyp + dx * uyp
        ddx = pxt - pxp
        ddy = pyt - pyp
        return pxt, pyt, pxp, pyp, acc + ddx * ddx + ddy * ddy

    init = (px0, py0, px0, py0, jnp.zeros((1, P), jnp.float32))
    _, _, _, _, acc = lax.fori_loop(0, n_steps, step, init, unroll=unroll)

    # Lane-dense per-(batch, tile) partial losses; reduced in the wrapper.
    out_ref[0, 0] = acc


def ivp_loss(vf_pred, vf_true, *, dx=0.5, n_steps=8, solver='euler',
             mode='bilinear_batched', use_bf16_dot=False):
    """Pallas implementation of IVPLoss.forward (euler / bilinear_batched)."""
    if solver != 'euler' or mode != 'bilinear_batched':
        # TODO(synk): other solvers / nearest interpolation not implemented.
        raise NotImplementedError(
            "Pallas IVPLoss only implements solver='euler', mode='bilinear_batched'")
    B, Ch, H, W = vf_pred.shape
    assert Ch == 2 and vf_true.shape == vf_pred.shape
    HW = H * W

    vf_pred_f = vf_pred.astype(jnp.float32)
    vf_true_f = vf_true.astype(jnp.float32)

    # Contract the larger spatial axis on the MXU; the smaller one becomes the
    # VPU multiply-reduce axis.
    x_contracted = not (H > W)
    if x_contracted:
        C, R = W, H
    else:
        C, R = H, W
        vf_pred_f = jnp.swapaxes(vf_pred_f, 2, 3)   # (B, 2, W, H)
        vf_true_f = jnp.swapaxes(vf_true_f, 2, 3)
    # Pad the reduced axis to a multiple of 8 so the channel split in the
    # kernel lands on f32 sublane-tile boundaries (free views, no copies).
    Rp = _round_up(R, 8)
    if Rp != R:
        pad = ((0, 0), (0, 0), (0, Rp - R), (0, 0))
        vf_pred_f = jnp.pad(vf_pred_f, pad)
        vf_true_f = jnp.pad(vf_true_f, pad)
    vf_pred_f = vf_pred_f.reshape(B, 2 * Rp, C)
    vf_true_f = vf_true_f.reshape(B, 2 * Rp, C)

    vmem_cap = _vmem_capacity_bytes()
    field_block_bytes = 2 * Rp * C * 4
    single_buffer = field_block_bytes >= (2 << 20) and vmem_cap < (100 << 20)
    n_buf = 1 if single_buffer else 2
    field_bytes_total = 2 * n_buf * field_block_bytes

    P = _pick_point_tile(HW, B, C, Rp, field_bytes_total, vmem_cap)
    n_tiles = _cdiv(HW, P)          # padded points contribute exactly 0
    unroll = _temp_bytes(P, C, Rp) < (2 << 20)

    # Explicit VMEM budget (fields + live temporaries + headroom), capped per
    # generation (~100 MiB on 128 MiB parts, ~56 MiB on 64 MiB parts).
    needed = field_bytes_total + 3 * _temp_bytes(P, C, Rp) + (4 << 20)
    cap = (56 << 20) if vmem_cap < (100 << 20) else (100 << 20)
    vmem_limit = int(max(32 << 20, min(needed, cap)))

    kernel = functools.partial(
        _ivp_loss_kernel, W=W, P=P, dx=float(dx), n_steps=int(n_steps),
        C=C, R=R, Rp=Rp, x_contracted=x_contracted,
        unroll=unroll, use_bf16_dot=use_bf16_dot)

    in_specs = [
        _field_block_spec((1, 2 * Rp, C), lambda b, t: (b, 0, 0), single_buffer),
        _field_block_spec((1, 2 * Rp, C), lambda b, t: (b, 0, 0), single_buffer),
    ]

    partials = pl.pallas_call(
        kernel,
        out_shape=jax.ShapeDtypeStruct((B, n_tiles, 1, P), jnp.float32),
        grid_spec=pltpu.PrefetchScalarGridSpec(
            num_scalar_prefetch=0,
            grid=(B, n_tiles),
            in_specs=in_specs,
            out_specs=pl.BlockSpec((1, 1, 1, P), lambda b, t: (b, t, 0, 0)),
        ),
        compiler_params=pltpu.CompilerParams(
            dimension_semantics=("parallel", "parallel"),
            vmem_limit_bytes=vmem_limit),
    )(vf_true_f, vf_pred_f)

    # MSE over the full (n_steps+1, B, 2, H, W) trajectory stack.
    denom = float((n_steps + 1) * B * 2 * H * W)
    return jnp.sum(partials) / denom


def ivp_loss_ref(vf_pred, vf_true, *, dx=0.5, n_steps=8):
    """Pure-JAX reference (same math, direct gather)."""
    B, Ch, H, W = vf_pred.shape
    HW = H * W

    def bilerp(vf, px, py):  # vf: (2, H, W); px, py: (HW,)
        x0 = jnp.floor(px)
        y0 = jnp.floor(py)
        x1 = x0 + 1.0
        y1 = y0 + 1.0
        x0c = jnp.clip(x0, 0.0, W - 1.0)
        x1c = jnp.clip(x1, 0.0, W - 1.0)
        y0c = jnp.clip(y0, 0.0, H - 1.0)
        y1c = jnp.clip(y1, 0.0, H - 1.0)
        wa = (x1c - px) * (y1c - py)
        wb = (x1c - px) * (py - y0c)
        wc = (px - x0c) * (y1c - py)
        wd = (px - x0c) * (py - y0c)
        x0i, x1i = x0c.astype(jnp.int32), x1c.astype(jnp.int32)
        y0i, y1i = y0c.astype(jnp.int32), y1c.astype(jnp.int32)
        Ia = vf[:, y0i, x0i]
        Ib = vf[:, y1i, x0i]
        Ic = vf[:, y0i, x1i]
        Id = vf[:, y1i, x1i]
        return wa * Ia + wb * Ib + wc * Ic + wd * Id  # (2, HW)

    idxs = jnp.arange(HW)
    px0 = (idxs % W).astype(jnp.float32)
    py0 = (idxs // W).astype(jnp.float32)
    total = jnp.float32(0.0)
    for b in range(B):
        vt = vf_true[b].astype(jnp.float32)
        vp = vf_pred[b].astype(jnp.float32)
        pxt, pyt, pxp, pyp = px0, py0, px0, py0
        for _ in range(n_steps):
            ut = bilerp(vt, pxt, pyt)
            up = bilerp(vp, pxp, pyp)
            pxt = pxt + dx * ut[0]
            pyt = pyt + dx * ut[1]
            pxp = pxp + dx * up[0]
            pyp = pyp + dx * up[1]
            total = total + jnp.sum((pxt - pxp) ** 2) + jnp.sum((pyt - pyp) ** 2)
    return total / ((n_steps + 1) * B * 2 * H * W)


if __name__ == "__main__":
    key = jax.random.PRNGKey(0)

    # Case 1: square shape (matches the module's (B, 2, H, W) signature).
    k1, k2 = jax.random.split(key)
    B, Ch, H, W = 2, 2, 16, 16
    vf_pred = jax.random.normal(k1, (B, Ch, H, W), dtype=jnp.float32)
    vf_true = jax.random.normal(k2, (B, Ch, H, W), dtype=jnp.float32)
    loss = ivp_loss(vf_pred, vf_true)
    jax.block_until_ready(loss)
    ref = ivp_loss_ref(vf_pred, vf_true)
    assert jnp.allclose(loss, ref, rtol=1e-4, atol=1e-4), (loss, ref)

    # Case 2: H > W, non-128-divisible point count -> exercises the transpose,
    # reduced-axis padding and point-padding paths.
    k3, k4 = jax.random.split(k1)
    B2, H2, W2 = 1, 20, 12
    vf_pred2 = jax.random.normal(k3, (B2, 2, H2, W2), dtype=jnp.float32)
    vf_true2 = jax.random.normal(k4, (B2, 2, H2, W2), dtype=jnp.float32)
    loss2 = ivp_loss(vf_pred2, vf_true2)
    jax.block_until_ready(loss2)
    ref2 = ivp_loss_ref(vf_pred2, vf_true2)
    assert jnp.allclose(loss2, ref2, rtol=1e-4, atol=1e-4), (loss2, ref2)

    print("KERNEL_OK")
</pallas_src>

<mosaic_0001>
module attributes {stable_mosaic.version = 11 : i64} {
  func.func @_ivp_loss_kernel(%arg0: i32, %arg1: i32, %arg2: memref<1x32x16xf32, #tpu.memory_space<vmem>>, %arg3: memref<1x32x16xf32, #tpu.memory_space<vmem>>, %arg4: memref<1x1x1x256xf32, #tpu.memory_space<vmem>>) attributes {dimension_semantics = [#tpu.dimension_semantics<parallel>, #tpu.dimension_semantics<parallel>], iteration_bounds = array<i64: 2, 1>, scalar_prefetch = 0 : i64, scratch_operands = 0 : i64, tpu.core_type = #tpu.core_type<tc>, window_params = [{transform_indices = @transform_0, window_bounds = array<i64: 1, 32, 16>}, {transform_indices = @transform_1, window_bounds = array<i64: 1, 32, 16>}, {transform_indices = @transform_2, window_bounds = array<i64: 1, 1, 1, 256>}]} {
    %c0 = arith.constant 0 : index
    %c0_0 = arith.constant 0 : index
    %c0_1 = arith.constant 0 : index
    %0 = vector.load %arg2[%c0, %c0_0, %c0_1] : memref<1x32x16xf32, #tpu.memory_space<vmem>>, vector<1x32x16xf32>
    %1 = vector.shape_cast %0 : vector<1x32x16xf32> to vector<32x16xf32>
    %c0_2 = arith.constant 0 : index
    %c0_3 = arith.constant 0 : index
    %c0_4 = arith.constant 0 : index
    %2 = vector.load %arg3[%c0_2, %c0_3, %c0_4] : memref<1x32x16xf32, #tpu.memory_space<vmem>>, vector<1x32x16xf32>
    %3 = vector.shape_cast %2 : vector<1x32x16xf32> to vector<32x16xf32>
    %4 = tpu.iota {dimensions = array<i32: 0>} : vector<16x256xi32>
    %5 = arith.sitofp %4 : vector<16x256xi32> to vector<16x256xf32>
    %6 = tpu.iota {dimensions = array<i32: 0>} : vector<16x256xi32>
    %7 = arith.sitofp %6 : vector<16x256xi32> to vector<16x256xf32>
    %8 = tpu.iota {dimensions = array<i32: 1>} : vector<1x256xi32>
    %c256_i32 = arith.constant 256 : i32
    %9 = arith.muli %arg1, %c256_i32 : i32
    %10 = vector.broadcast %9 : i32 to vector<1x256xi32>
    %11 = arith.addi %8, %10 : vector<1x256xi32>
    %12 = arith.sitofp %11 : vector<1x256xi32> to vector<1x256xf32>
    %cst = arith.constant 6.250000e-02 : f32
    %13 = vector.broadcast %cst : f32 to vector<1x256xf32>
    %14 = arith.mulf %12, %13 : vector<1x256xf32>
    %15 = math.floor %14 : vector<1x256xf32>
    %cst_5 = arith.constant 1.600000e+01 : f32
    %16 = vector.broadcast %cst_5 : f32 to vector<1x256xf32>
    %17 = arith.mulf %15, %16 : vector<1x256xf32>
    %18 = arith.subf %12, %17 : vector<1x256xf32>
    %cst_6 = arith.constant 1.600000e+01 : f32
    %19 = vector.broadcast %cst_6 : f32 to vector<1x256xf32>
    %20 = arith.cmpf oge, %18, %19 : vector<1x256xf32>
    %cst_7 = arith.constant 0.000000e+00 : f32
    %21 = vector.broadcast %cst_7 : f32 to vector<1x256xf32>
    %22 = arith.cmpf olt, %18, %21 : vector<1x256xf32>
    %cst_8 = arith.constant 1.000000e+00 : f32
    %cst_9 = arith.constant 0.000000e+00 : f32
    %23 = vector.broadcast %cst_8 : f32 to vector<1x256xf32>
    %24 = vector.broadcast %cst_9 : f32 to vector<1x256xf32>
    %25 = arith.select %20, %23, %24 : vector<1x256xi1>, vector<1x256xf32>
    %26 = arith.addf %15, %25 : vector<1x256xf32>
    %cst_10 = arith.constant 1.000000e+00 : f32
    %cst_11 = arith.constant 0.000000e+00 : f32
    %27 = vector.broadcast %cst_10 : f32 to vector<1x256xf32>
    %28 = vector.broadcast %cst_11 : f32 to vector<1x256xf32>
    %29 = arith.select %22, %27, %28 : vector<1x256xi1>, vector<1x256xf32>
    %30 = arith.subf %26, %29 : vector<1x256xf32>
    %cst_12 = arith.constant 1.600000e+01 : f32
    %cst_13 = arith.constant 0.000000e+00 : f32
    %31 = vector.broadcast %cst_12 : f32 to vector<1x256xf32>
    %32 = vector.broadcast %cst_13 : f32 to vector<1x256xf32>
    %33 = arith.select %20, %31, %32 : vector<1x256xi1>, vector<1x256xf32>
    %34 = arith.subf %18, %33 : vector<1x256xf32>
    %cst_14 = arith.constant 1.600000e+01 : f32
    %cst_15 = arith.constant 0.000000e+00 : f32
    %35 = vector.broadcast %cst_14 : f32 to vector<1x256xf32>
    %36 = vector.broadcast %cst_15 : f32 to vector<1x256xf32>
    %37 = arith.select %22, %35, %36 : vector<1x256xi1>, vector<1x256xf32>
    %38 = arith.addf %34, %37 : vector<1x256xf32>
    %cst_16 = arith.constant 0.000000e+00 : f32
    %39 = vector.broadcast %cst_16 : f32 to vector<1x256xf32>
    %cst_17 = arith.constant 1.500000e+01 : f32
    %cst_18 = arith.constant 1.500000e+01 : f32
    %c0_i32 = arith.constant 0 : i32
    %40 = math.floor %38 : vector<1x256xf32>
    %41 = math.floor %30 : vector<1x256xf32>
    %cst_19 = arith.constant 0.000000e+00 : f32
    %42 = vector.broadcast %cst_19 : f32 to vector<1x256xf32>
    %43 = arith.maximumf %42, %40 : vector<1x256xf32>
    %44 = vector.broadcast %cst_17 : f32 to vector<1x256xf32>
    %45 = arith.minimumf %44, %43 : vector<1x256xf32>
    %cst_20 = arith.constant 1.000000e+00 : f32
    %46 = vector.broadcast %cst_20 : f32 to vector<1x256xf32>
    %47 = arith.addf %40, %46 : vector<1x256xf32>
    %cst_21 = arith.constant 0.000000e+00 : f32
    %48 = vector.broadcast %cst_21 : f32 to vector<1x256xf32>
    %49 = arith.maximumf %48, %47 : vector<1x256xf32>
    %50 = vector.broadcast %cst_17 : f32 to vector<1x256xf32>
    %51 = arith.minimumf %50, %49 : vector<1x256xf32>
    %cst_22 = arith.constant 0.000000e+00 : f32
    %52 = vector.broadcast %cst_22 : f32 to vector<1x256xf32>
    %53 = arith.maximumf %52, %41 : vector<1x256xf32>
    %54 = vector.broadcast %cst_18 : f32 to vector<1x256xf32>
    %55 = arith.minimumf %54, %53 : vector<1x256xf32>
    %cst_23 = arith.constant 1.000000e+00 : f32
    %56 = vector.broadcast %cst_23 : f32 to vector<1x256xf32>
    %57 = arith.addf %41, %56 : vector<1x256xf32>
    %cst_24 = arith.constant 0.000000e+00 : f32
    %58 = vector.broadcast %cst_24 : f32 to vector<1x256xf32>
    %59 = arith.maximumf %58, %57 : vector<1x256xf32>
    %60 = vector.broadcast %cst_18 : f32 to vector<1x256xf32>
    %61 = arith.minimumf %60, %59 : vector<1x256xf32>
    %62 = arith.subf %51, %38 : vector<1x256xf32>
    %63 = arith.subf %38, %45 : vector<1x256xf32>
    %64 = arith.subf %61, %30 : vector<1x256xf32>
    %65 = arith.subf %30, %55 : vector<1x256xf32>
    %66 = vector.broadcast %45 : vector<1x256xf32> to vector<16x256xf32>
    %67 = arith.cmpf oeq, %5, %66 : vector<16x256xf32>
    %cst_25 = arith.constant 0.000000e+00 : f32
    %68 = vector.shape_cast %62 : vector<1x256xf32> to vector<1x256xf32>
    %69 = vector.broadcast %68 : vector<1x256xf32> to vector<16x256xf32>
    %70 = vector.broadcast %cst_25 : f32 to vector<16x256xf32>
    %71 = arith.select %67, %69, %70 : vector<16x256xi1>, vector<16x256xf32>
    %72 = vector.broadcast %51 : vector<1x256xf32> to vector<16x256xf32>
    %73 = arith.cmpf oeq, %5, %72 : vector<16x256xf32>
    %cst_26 = arith.constant 0.000000e+00 : f32
    %74 = vector.shape_cast %63 : vector<1x256xf32> to vector<1x256xf32>
    %75 = vector.broadcast %74 : vector<1x256xf32> to vector<16x256xf32>
    %76 = vector.broadcast %cst_26 : f32 to vector<16x256xf32>
    %77 = arith.select %73, %75, %76 : vector<16x256xi1>, vector<16x256xf32>
    %78 = arith.addf %71, %77 : vector<16x256xf32>
    %79 = vector.broadcast %55 : vector<1x256xf32> to vector<16x256xf32>
    %80 = arith.cmpf oeq, %7, %79 : vector<16x256xf32>
    %cst_27 = arith.constant 0.000000e+00 : f32
    %81 = vector.shape_cast %64 : vector<1x256xf32> to vector<1x256xf32>
    %82 = vector.broadcast %81 : vector<1x256xf32> to vector<16x256xf32>
    %83 = vector.broadcast %cst_27 : f32 to vector<16x256xf32>
    %84 = arith.select %80, %82, %83 : vector<16x256xi1>, vector<16x256xf32>
    %85 = vector.broadcast %61 : vector<1x256xf32> to vector<16x256xf32>
    %86 = arith.cmpf oeq, %7, %85 : vector<16x256xf32>
    %cst_28 = arith.constant 0.000000e+00 : f32
    %87 = vector.shape_cast %65 : vector<1x256xf32> to vector<1x256xf32>
    %88 = vector.broadcast %87 : vector<1x256xf32> to vector<16x256xf32>
    %89 = vector.broadcast %cst_28 : f32 to vector<16x256xf32>
    %90 = arith.select %86, %88, %89 : vector<16x256xi1>, vector<16x256xf32>
    %91 = arith.addf %84, %90 : vector<16x256xf32>
    %cst_29 = arith.constant dense<0.000000e+00> : vector<32x256xf32>
    %92 = tpu.matmul %1, %78, %cst_29 {dimension_numbers = #tpu.dot_dimension_numbers<[1], [0], [0], [1], [0, 0, 1, 1], [], []>} : vector<32x16xf32>, vector<16x256xf32>, vector<32x256xf32> -> vector<32x256xf32>
    %93 = vector.extract_strided_slice %92 {offsets = [0, 0], sizes = [16, 256], strides = [1, 1]} : vector<32x256xf32> to vector<16x256xf32>
    %94 = arith.mulf %93, %91 : vector<16x256xf32>
    %cst_30 = arith.constant dense<0.000000e+00> : vector<256xf32>
    %95 = vector.multi_reduction <add>, %94, %cst_30 [0] : vector<16x256xf32> to vector<256xf32>
    %96 = vector.shape_cast %95 : vector<256xf32> to vector<1x256xf32>
    %97 = vector.extract_strided_slice %92 {offsets = [16, 0], sizes = [16, 256], strides = [1, 1]} : vector<32x256xf32> to vector<16x256xf32>
    %98 = arith.mulf %97, %91 : vector<16x256xf32>
    %cst_31 = arith.constant dense<0.000000e+00> : vector<256xf32>
    %99 = vector.multi_reduction <add>, %98, %cst_31 [0] : vector<16x256xf32> to vector<256xf32>
    %100 = vector.shape_cast %99 : vector<256xf32> to vector<1x256xf32>
    %101 = math.floor %38 : vector<1x256xf32>
    %102 = math.floor %30 : vector<1x256xf32>
    %cst_32 = arith.constant 0.000000e+00 : f32
    %103 = vector.broadcast %cst_32 : f32 to vector<1x256xf32>
    %104 = arith.maximumf %103, %101 : vector<1x256xf32>
    %105 = vector.broadcast %cst_17 : f32 to vector<1x256xf32>
    %106 = arith.minimumf %105, %104 : vector<1x256xf32>
    %cst_33 = arith.constant 1.000000e+00 : f32
    %107 = vector.broadcast %cst_33 : f32 to vector<1x256xf32>
    %108 = arith.addf %101, %107 : vector<1x256xf32>
    %cst_34 = arith.constant 0.000000e+00 : f32
    %109 = vector.broadcast %cst_34 : f32 to vector<1x256xf32>
    %110 = arith.maximumf %109, %108 : vector<1x256xf32>
    %111 = vector.broadcast %cst_17 : f32 to vector<1x256xf32>
    %112 = arith.minimumf %111, %110 : vector<1x256xf32>
    %cst_35 = arith.constant 0.000000e+00 : f32
    %113 = vector.broadcast %cst_35 : f32 to vector<1x256xf32>
    %114 = arith.maximumf %113, %102 : vector<1x256xf32>
    %115 = vector.broadcast %cst_18 : f32 to vector<1x256xf32>
    %116 = arith.minimumf %115, %114 : vector<1x256xf32>
    %cst_36 = arith.constant 1.000000e+00 : f32
    %117 = vector.broadcast %cst_36 : f32 to vector<1x256xf32>
    %118 = arith.addf %102, %117 : vector<1x256xf32>
    %cst_37 = arith.constant 0.000000e+00 : f32
    %119 = vector.broadcast %cst_37 : f32 to vector<1x256xf32>
    %120 = arith.maximumf %119, %118 : vector<1x256xf32>
    %121 = vector.broadcast %cst_18 : f32 to vector<1x256xf32>
    %122 = arith.minimumf %121, %120 : vector<1x256xf32>
    %123 = arith.subf %112, %38 : vector<1x256xf32>
    %124 = arith.subf %38, %106 : vector<1x256xf32>
    %125 = arith.subf %122, %30 : vector<1x256xf32>
    %126 = arith.subf %30, %116 : vector<1x256xf32>
    %127 = vector.broadcast %106 : vector<1x256xf32> to vector<16x256xf32>
    %128 = arith.cmpf oeq, %5, %127 : vector<16x256xf32>
    %cst_38 = arith.constant 0.000000e+00 : f32
    %129 = vector.shape_cast %123 : vector<1x256xf32> to vector<1x256xf32>
    %130 = vector.broadcast %129 : vector<1x256xf32> to vector<16x256xf32>
    %131 = vector.broadcast %cst_38 : f32 to vector<16x256xf32>
    %132 = arith.select %128, %130, %131 : vector<16x256xi1>, vector<16x256xf32>
    %133 = vector.broadcast %112 : vector<1x256xf32> to vector<16x256xf32>
    %134 = arith.cmpf oeq, %5, %133 : vector<16x256xf32>
    %cst_39 = arith.constant 0.000000e+00 : f32
    %135 = vector.shape_cast %124 : vector<1x256xf32> to vector<1x256xf32>
    %136 = vector.broadcast %135 : vector<1x256xf32> to vector<16x256xf32>
    %137 = vector.broadcast %cst_39 : f32 to vector<16x256xf32>
    %138 = arith.select %134, %136, %137 : vector<16x256xi1>, vector<16x256xf32>
    %139 = arith.addf %132, %138 : vector<16x256xf32>
    %140 = vector.broadcast %116 : vector<1x256xf32> to vector<16x256xf32>
    %141 = arith.cmpf oeq, %7, %140 : vector<16x256xf32>
    %cst_40 = arith.constant 0.000000e+00 : f32
    %142 = vector.shape_cast %125 : vector<1x256xf32> to vector<1x256xf32>
    %143 = vector.broadcast %142 : vector<1x256xf32> to vector<16x256xf32>
    %144 = vector.broadcast %cst_40 : f32 to vector<16x256xf32>
    %145 = arith.select %141, %143, %144 : vector<16x256xi1>, vector<16x256xf32>
    %146 = vector.broadcast %122 : vector<1x256xf32> to vector<16x256xf32>
    %147 = arith.cmpf oeq, %7, %146 : vector<16x256xf32>
    %cst_41 = arith.constant 0.000000e+00 : f32
    %148 = vector.shape_cast %126 : vector<1x256xf32> to vector<1x256xf32>
    %149 = vector.broadcast %148 : vector<1x256xf32> to vector<16x256xf32>
    %150 = vector.broadcast %cst_41 : f32 to vector<16x256xf32>
    %151 = arith.select %147, %149, %150 : vector<16x256xi1>, vector<16x256xf32>
    %152 = arith.addf %145, %151 : vector<16x256xf32>
    %cst_42 = arith.constant dense<0.000000e+00> : vector<32x256xf32>
    %153 = tpu.matmul %3, %139, %cst_42 {dimension_numbers = #tpu.dot_dimension_numbers<[1], [0], [0], [1], [0, 0, 1, 1], [], []>} : vector<32x16xf32>, vector<16x256xf32>, vector<32x256xf32> -> vector<32x256xf32>
    %154 = vector.extract_strided_slice %153 {offsets = [0, 0], sizes = [16, 256], strides = [1, 1]} : vector<32x256xf32> to vector<16x256xf32>
    %155 = arith.mulf %154, %152 : vector<16x256xf32>
    %cst_43 = arith.constant dense<0.000000e+00> : vector<256xf32>
    %156 = vector.multi_reduction <add>, %155, %cst_43 [0] : vector<16x256xf32> to vector<256xf32>
    %157 = vector.shape_cast %156 : vector<256xf32> to vector<1x256xf32>
    %158 = vector.extract_strided_slice %153 {offsets = [16, 0], sizes = [16, 256], strides = [1, 1]} : vector<32x256xf32> to vector<16x256xf32>
    %159 = arith.mulf %158, %152 : vector<16x256xf32>
    %cst_44 = arith.constant dense<0.000000e+00> : vector<256xf32>
    %160 = vector.multi_reduction <add>, %159, %cst_44 [0] : vector<16x256xf32> to vector<256xf32>
    %161 = vector.shape_cast %160 : vector<256xf32> to vector<1x256xf32>
    %cst_45 = arith.constant 5.000000e-01 : f32
    %162 = vector.broadcast %cst_45 : f32 to vector<1x256xf32>
    %163 = arith.mulf %162, %96 : vector<1x256xf32>
    %164 = arith.addf %38, %163 : vector<1x256xf32>
    %cst_46 = arith.constant 5.000000e-01 : f32
    %165 = vector.broadcast %cst_46 : f32 to vector<1x256xf32>
    %166 = arith.mulf %165, %100 : vector<1x256xf32>
    %167 = arith.addf %30, %166 : vector<1x256xf32>
    %cst_47 = arith.constant 5.000000e-01 : f32
    %168 = vector.broadcast %cst_47 : f32 to vector<1x256xf32>
    %169 = arith.mulf %168, %157 : vector<1x256xf32>
    %170 = arith.addf %38, %169 : vector<1x256xf32>
    %cst_48 = arith.constant 5.000000e-01 : f32
    %171 = vector.broadcast %cst_48 : f32 to vector<1x256xf32>
    %172 = arith.mulf %171, %161 : vector<1x256xf32>
    %173 = arith.addf %30, %172 : vector<1x256xf32>
    %174 = arith.subf %164, %170 : vector<1x256xf32>
    %175 = arith.subf %167, %173 : vector<1x256xf32>
    %176 = arith.mulf %174, %174 : vector<1x256xf32>
    %177 = arith.addf %39, %176 : vector<1x256xf32>
    %178 = arith.mulf %175, %175 : vector<1x256xf32>
    %179 = arith.addf %177, %178 : vector<1x256xf32>
    %c1_i32 = arith.constant 1 : i32
    %180 = math.floor %164 : vector<1x256xf32>
    %181 = math.floor %167 : vector<1x256xf32>
    %cst_49 = arith.constant 0.000000e+00 : f32
    %182 = vector.broadcast %cst_49 : f32 to vector<1x256xf32>
    %183 = arith.maximumf %182, %180 : vector<1x256xf32>
    %184 = vector.broadcast %cst_17 : f32 to vector<1x256xf32>
    %185 = arith.minimumf %184, %183 : vector<1x256xf32>
    %cst_50 = arith.constant 1.000000e+00 : f32
    %186 = vector.broadcast %cst_50 : f32 to vector<1x256xf32>
    %187 = arith.addf %180, %186 : vector<1x256xf32>
    %cst_51 = arith.constant 0.000000e+00 : f32
    %188 = vector.broadcast %cst_51 : f32 to vector<1x256xf32>
    %189 = arith.maximumf %188, %187 : vector<1x256xf32>
    %190 = vector.broadcast %cst_17 : f32 to vector<1x256xf32>
    %191 = arith.minimumf %190, %189 : vector<1x256xf32>
    %cst_52 = arith.constant 0.000000e+00 : f32
    %192 = vector.broadcast %cst_52 : f32 to vector<1x256xf32>
    %193 = arith.maximumf %192, %181 : vector<1x256xf32>
    %194 = vector.broadcast %cst_18 : f32 to vector<1x256xf32>
    %195 = arith.minimumf %194, %193 : vector<1x256xf32>
    %cst_53 = arith.constant 1.000000e+00 : f32
    %196 = vector.broadcast %cst_53 : f32 to vector<1x256xf32>
    %197 = arith.addf %181, %196 : vector<1x256xf32>
    %cst_54 = arith.constant 0.000000e+00 : f32
    %198 = vector.broadcast %cst_54 : f32 to vector<1x256xf32>
    %199 = arith.maximumf %198, %197 : vector<1x256xf32>
    %200 = vector.broadcast %cst_18 : f32 to vector<1x256xf32>
    %201 = arith.minimumf %200, %199 : vector<1x256xf32>
    %202 = arith.subf %191, %164 : vector<1x256xf32>
    %203 = arith.subf %164, %185 : vector<1x256xf32>
    %204 = arith.subf %201, %167 : vector<1x256xf32>
    %205 = arith.subf %167, %195 : vector<1x256xf32>
    %206 = vector.broadcast %185 : vector<1x256xf32> to vector<16x256xf32>
    %207 = arith.cmpf oeq, %5, %206 : vector<16x256xf32>
    %cst_55 = arith.constant 0.000000e+00 : f32
    %208 = vector.shape_cast %202 : vector<1x256xf32> to vector<1x256xf32>
    %209 = vector.broadcast %208 : vector<1x256xf32> to vector<16x256xf32>
    %210 = vector.broadcast %cst_55 : f32 to vector<16x256xf32>
    %211 = arith.select %207, %209, %210 : vector<16x256xi1>, vector<16x256xf32>
    %212 = vector.broadcast %191 : vector<1x256xf32> to vector<16x256xf32>
    %213 = arith.cmpf oeq, %5, %212 : vector<16x256xf32>
    %cst_56 = arith.constant 0.000000e+00 : f32
    %214 = vector.shape_cast %203 : vector<1x256xf32> to vector<1x256xf32>
    %215 = vector.broadcast %214 : vector<1x256xf32> to vector<16x256xf32>
    %216 = vector.broadcast %cst_56 : f32 to vector<16x256xf32>
    %217 = arith.select %213, %215, %216 : vector<16x256xi1>, vector<16x256xf32>
    %218 = arith.addf %211, %217 : vector<16x256xf32>
    %219 = vector.broadcast %195 : vector<1x256xf32> to vector<16x256xf32>
    %220 = arith.cmpf oeq, %7, %219 : vector<16x256xf32>
    %cst_57 = arith.constant 0.000000e+00 : f32
    %221 = vector.shape_cast %204 : vector<1x256xf32> to vector<1x256xf32>
    %222 = vector.broadcast %221 : vector<1x256xf32> to vector<16x256xf32>
    %223 = vector.broadcast %cst_57 : f32 to vector<16x256xf32>
    %224 = arith.select %220, %222, %223 : vector<16x256xi1>, vector<16x256xf32>
    %225 = vector.broadcast %201 : vector<1x256xf32> to vector<16x256xf32>
    %226 = arith.cmpf oeq, %7, %225 : vector<16x256xf32>
    %cst_58 = arith.constant 0.000000e+00 : f32
    %227 = vector.shape_cast %205 : vector<1x256xf32> to vector<1x256xf32>
    %228 = vector.broadcast %227 : vector<1x256xf32> to vector<16x256xf32>
    %229 = vector.broadcast %cst_58 : f32 to vector<16x256xf32>
    %230 = arith.select %226, %228, %229 : vector<16x256xi1>, vector<16x256xf32>
    %231 = arith.addf %224, %230 : vector<16x256xf32>
    %cst_59 = arith.constant dense<0.000000e+00> : vector<32x256xf32>
    %232 = tpu.matmul %1, %218, %cst_59 {dimension_numbers = #tpu.dot_dimension_numbers<[1], [0], [0], [1], [0, 0, 1, 1], [], []>} : vector<32x16xf32>, vector<16x256xf32>, vector<32x256xf32> -> vector<32x256xf32>
    %233 = vector.extract_strided_slice %232 {offsets = [0, 0], sizes = [16, 256], strides = [1, 1]} : vector<32x256xf32> to vector<16x256xf32>
    %234 = arith.mulf %233, %231 : vector<16x256xf32>
    %cst_60 = arith.constant dense<0.000000e+00> : vector<256xf32>
    %235 = vector.multi_reduction <add>, %234, %cst_60 [0] : vector<16x256xf32> to vector<256xf32>
    %236 = vector.shape_cast %235 : vector<256xf32> to vector<1x256xf32>
    %237 = vector.extract_strided_slice %232 {offsets = [16, 0], sizes = [16, 256], strides = [1, 1]} : vector<32x256xf32> to vector<16x256xf32>
    %238 = arith.mulf %237, %231 : vector<16x256xf32>
    %cst_61 = arith.constant dense<0.000000e+00> : vector<256xf32>
    %239 = vector.multi_reduction <add>, %238, %cst_61 [0] : vector<16x256xf32> to vector<256xf32>
    %240 = vector.shape_cast %239 : vector<256xf32> to vector<1x256xf32>
    %241 = math.floor %170 : vector<1x256xf32>
    %242 = math.floor %173 : vector<1x256xf32>
    %cst_62 = arith.constant 0.000000e+00 : f32
    %243 = vector.broadcast %cst_62 : f32 to vector<1x256xf32>
    %244 = arith.maximumf %243, %241 : vector<1x256xf32>
    %245 = vector.broadcast %cst_17 : f32 to vector<1x256xf32>
    %246 = arith.minimumf %245, %244 : vector<1x256xf32>
    %cst_63 = arith.constant 1.000000e+00 : f32
    %247 = vector.broadcast %cst_63 : f32 to vector<1x256xf32>
    %248 = arith.addf %241, %247 : vector<1x256xf32>
    %cst_64 = arith.constant 0.000000e+00 : f32
    %249 = vector.broadcast %cst_64 : f32 to vector<1x256xf32>
    %250 = arith.maximumf %249, %248 : vector<1x256xf32>
    %251 = vector.broadcast %cst_17 : f32 to vector<1x256xf32>
    %252 = arith.minimumf %251, %250 : vector<1x256xf32>
    %cst_65 = arith.constant 0.000000e+00 : f32
    %253 = vector.broadcast %cst_65 : f32 to vector<1x256xf32>
    %254 = arith.maximumf %253, %242 : vector<1x256xf32>
    %255 = vector.broadcast %cst_18 : f32 to vector<1x256xf32>
    %256 = arith.minimumf %255, %254 : vector<1x256xf32>
    %cst_66 = arith.constant 1.000000e+00 : f32
    %257 = vector.broadcast %cst_66 : f32 to vector<1x256xf32>
    %258 = arith.addf %242, %257 : vector<1x256xf32>
    %cst_67 = arith.constant 0.000000e+00 : f32
    %259 = vector.broadcast %cst_67 : f32 to vector<1x256xf32>
    %260 = arith.maximumf %259, %258 : vector<1x256xf32>
    %261 = vector.broadcast %cst_18 : f32 to vector<1x256xf32>
    %262 = arith.minimumf %261, %260 : vector<1x256xf32>
    %263 = arith.subf %252, %170 : vector<1x256xf32>
    %264 = arith.subf %170, %246 : vector<1x256xf32>
    %265 = arith.subf %262, %173 : vector<1x256xf32>
    %266 = arith.subf %173, %256 : vector<1x256xf32>
    %267 = vector.broadcast %246 : vector<1x256xf32> to vector<16x256xf32>
    %268 = arith.cmpf oeq, %5, %267 : vector<16x256xf32>
    %cst_68 = arith.constant 0.000000e+00 : f32
    %269 = vector.shape_cast %263 : vector<1x256xf32> to vector<1x256xf32>
    %270 = vector.broadcast %269 : vector<1x256xf32> to vector<16x256xf32>
    %271 = vector.broadcast %cst_68 : f32 to vector<16x256xf32>
    %272 = arith.select %268, %270, %271 : vector<16x256xi1>, vector<16x256xf32>
    %273 = vector.broadcast %252 : vector<1x256xf32> to vector<16x256xf32>
    %274 = arith.cmpf oeq, %5, %273 : vector<16x256xf32>
    %cst_69 = arith.constant 0.000000e+00 : f32
    %275 = vector.shape_cast %264 : vector<1x256xf32> to vector<1x256xf32>
    %276 = vector.broadcast %275 : vector<1x256xf32> to vector<16x256xf32>
    %277 = vector.broadcast %cst_69 : f32 to vector<16x256xf32>
    %278 = arith.select %274, %276, %277 : vector<16x256xi1>, vector<16x256xf32>
    %279 = arith.addf %272, %278 : vector<16x256xf32>
    %280 = vector.broadcast %256 : vector<1x256xf32> to vector<16x256xf32>
    %281 = arith.cmpf oeq, %7, %280 : vector<16x256xf32>
    %cst_70 = arith.constant 0.000000e+00 : f32
    %282 = vector.shape_cast %265 : vector<1x256xf32> to vector<1x256xf32>
    %283 = vector.broadcast %282 : vector<1x256xf32> to vector<16x256xf32>
    %284 = vector.broadcast %cst_70 : f32 to vector<16x256xf32>
    %285 = arith.select %281, %283, %284 : vector<16x256xi1>, vector<16x256xf32>
    %286 = vector.broadcast %262 : vector<1x256xf32> to vector<16x256xf32>
    %287 = arith.cmpf oeq, %7, %286 : vector<16x256xf32>
    %cst_71 = arith.constant 0.000000e+00 : f32
    %288 = vector.shape_cast %266 : vector<1x256xf32> to vector<1x256xf32>
    %289 = vector.broadcast %288 : vector<1x256xf32> to vector<16x256xf32>
    %290 = vector.broadcast %cst_71 : f32 to vector<16x256xf32>
    %291 = arith.select %287, %289, %290 : vector<16x256xi1>, vector<16x256xf32>
    %292 = arith.addf %285, %291 : vector<16x256xf32>
    %cst_72 = arith.constant dense<0.000000e+00> : vector<32x256xf32>
    %293 = tpu.matmul %3, %279, %cst_72 {dimension_numbers = #tpu.dot_dimension_numbers<[1], [0], [0], [1], [0, 0, 1, 1], [], []>} : vector<32x16xf32>, vector<16x256xf32>, vector<32x256xf32> -> vector<32x256xf32>
    %294 = vector.extract_strided_slice %293 {offsets = [0, 0], sizes = [16, 256], strides = [1, 1]} : vector<32x256xf32> to vector<16x256xf32>
    %295 = arith.mulf %294, %292 : vector<16x256xf32>
    %cst_73 = arith.constant dense<0.000000e+00> : vector<256xf32>
    %296 = vector.multi_reduction <add>, %295, %cst_73 [0] : vector<16x256xf32> to vector<256xf32>
    %297 = vector.shape_cast %296 : vector<256xf32> to vector<1x256xf32>
    %298 = vector.extract_strided_slice %293 {offsets = [16, 0], sizes = [16, 256], strides = [1, 1]} : vector<32x256xf32> to vector<16x256xf32>
    %299 = arith.mulf %298, %292 : vector<16x256xf32>
    %cst_74 = arith.constant dense<0.000000e+00> : vector<256xf32>
    %300 = vector.multi_reduction <add>, %299, %cst_74 [0] : vector<16x256xf32> to vector<256xf32>
    %301 = vector.shape_cast %300 : vector<256xf32> to vector<1x256xf32>
    %cst_75 = arith.constant 5.000000e-01 : f32
    %302 = vector.broadcast %cst_75 : f32 to vector<1x256xf32>
    %303 = arith.mulf %302, %236 : vector<1x256xf32>
    %304 = arith.addf %164, %303 : vector<1x256xf32>
    %cst_76 = arith.constant 5.000000e-01 : f32
    %305 = vector.broadcast %cst_76 : f32 to vector<1x256xf32>
    %306 = arith.mulf %305, %240 : vector<1x256xf32>
    %307 = arith.addf %167, %306 : vector<1x256xf32>
    %cst_77 = arith.constant 5.000000e-01 : f32
    %308 = vector.broadcast %cst_77 : f32 to vector<1x256xf32>
    %309 = arith.mulf %308, %297 : vector<1x256xf32>
    %310 = arith.addf %170, %309 : vector<1x256xf32>
    %cst_78 = arith.constant 5.000000e-01 : f32
    %311 = vector.broadcast %cst_78 : f32 to vector<1x256xf32>
    %312 = arith.mulf %311, %301 : vector<1x256xf32>
    %313 = arith.addf %173, %312 : vector<1x256xf32>
    %314 = arith.subf %304, %310 : vector<1x256xf32>
    %315 = arith.subf %307, %313 : vector<1x256xf32>
    %316 = arith.mulf %314, %314 : vector<1x256xf32>
    %317 = arith.addf %179, %316 : vector<1x256xf32>
    %318 = arith.mulf %315, %315 : vector<1x256xf32>
    %319 = arith.addf %317, %318 : vector<1x256xf32>
    %c2_i32 = arith.constant 2 : i32
    %320 = math.floor %304 : vector<1x256xf32>
    %321 = math.floor %307 : vector<1x256xf32>
    %cst_79 = arith.constant 0.000000e+00 : f32
    %322 = vector.broadcast %cst_79 : f32 to vector<1x256xf32>
    %323 = arith.maximumf %322, %320 : vector<1x256xf32>
    %324 = vector.broadcast %cst_17 : f32 to vector<1x256xf32>
    %325 = arith.minimumf %324, %323 : vector<1x256xf32>
    %cst_80 = arith.constant 1.000000e+00 : f32
    %326 = vector.broadcast %cst_80 : f32 to vector<1x256xf32>
    %327 = arith.addf %320, %326 : vector<1x256xf32>
    %cst_81 = arith.constant 0.000000e+00 : f32
    %328 = vector.broadcast %cst_81 : f32 to vector<1x256xf32>
    %329 = arith.maximumf %328, %327 : vector<1x256xf32>
    %330 = vector.broadcast %cst_17 : f32 to vector<1x256xf32>
    %331 = arith.minimumf %330, %329 : vector<1x256xf32>
    %cst_82 = arith.constant 0.000000e+00 : f32
    %332 = vector.broadcast %cst_82 : f32 to vector<1x256xf32>
    %333 = arith.maximumf %332, %321 : vector<1x256xf32>
    %334 = vector.broadcast %cst_18 : f32 to vector<1x256xf32>
    %335 = arith.minimumf %334, %333 : vector<1x256xf32>
    %cst_83 = arith.constant 1.000000e+00 : f32
    %336 = vector.broadcast %cst_83 : f32 to vector<1x256xf32>
    %337 = arith.addf %321, %336 : vector<1x256xf32>
    %cst_84 = arith.constant 0.000000e+00 : f32
    %338 = vector.broadcast %cst_84 : f32 to vector<1x256xf32>
    %339 = arith.maximumf %338, %337 : vector<1x256xf32>
    %340 = vector.broadcast %cst_18 : f32 to vector<1x256xf32>
    %341 = arith.minimumf %340, %339 : vector<1x256xf32>
    %342 = arith.subf %331, %304 : vector<1x256xf32>
    %343 = arith.subf %304, %325 : vector<1x256xf32>
    %344 = arith.subf %341, %307 : vector<1x256xf32>
    %345 = arith.subf %307, %335 : vector<1x256xf32>
    %346 = vector.broadcast %325 : vector<1x256xf32> to vector<16x256xf32>
    %347 = arith.cmpf oeq, %5, %346 : vector<16x256xf32>
    %cst_85 = arith.constant 0.000000e+00 : f32
    %348 = vector.shape_cast %342 : vector<1x256xf32> to vector<1x256xf32>
    %349 = vector.broadcast %348 : vector<1x256xf32> to vector<16x256xf32>
    %350 = vector.broadcast %cst_85 : f32 to vector<16x256xf32>
    %351 = arith.select %347, %349, %350 : vector<16x256xi1>, vector<16x256xf32>
    %352 = vector.broadcast %331 : vector<1x256xf32> to vector<16x256xf32>
    %353 = arith.cmpf oeq, %5, %352 : vector<16x256xf32>
    %cst_86 = arith.constant 0.000000e+00 : f32
    %354 = vector.shape_cast %343 : vector<1x256xf32> to vector<1x256xf32>
    %355 = vector.broadcast %354 : vector<1x256xf32> to vector<16x256xf32>
    %356 = vector.broadcast %cst_86 : f32 to vector<16x256xf32>
    %357 = arith.select %353, %355, %356 : vector<16x256xi1>, vector<16x256xf32>
    %358 = arith.addf %351, %357 : vector<16x256xf32>
    %359 = vector.broadcast %335 : vector<1x256xf32> to vector<16x256xf32>
    %360 = arith.cmpf oeq, %7, %359 : vector<16x256xf32>
    %cst_87 = arith.constant 0.000000e+00 : f32
    %361 = vector.shape_cast %344 : vector<1x256xf32> to vector<1x256xf32>
    %362 = vector.broadcast %361 : vector<1x256xf32> to vector<16x256xf32>
    %363 = vector.broadcast %cst_87 : f32 to vector<16x256xf32>
    %364 = arith.select %360, %362, %363 : vector<16x256xi1>, vector<16x256xf32>
    %365 = vector.broadcast %341 : vector<1x256xf32> to vector<16x256xf32>
    %366 = arith.cmpf oeq, %7, %365 : vector<16x256xf32>
    %cst_88 = arith.constant 0.000000e+00 : f32
    %367 = vector.shape_cast %345 : vector<1x256xf32> to vector<1x256xf32>
    %368 = vector.broadcast %367 : vector<1x256xf32> to vector<16x256xf32>
    %369 = vector.broadcast %cst_88 : f32 to vector<16x256xf32>
    %370 = arith.select %366, %368, %369 : vector<16x256xi1>, vector<16x256xf32>
    %371 = arith.addf %364, %370 : vector<16x256xf32>
    %cst_89 = arith.constant dense<0.000000e+00> : vector<32x256xf32>
    %372 = tpu.matmul %1, %358, %cst_89 {dimension_numbers = #tpu.dot_dimension_numbers<[1], [0], [0], [1], [0, 0, 1, 1], [], []>} : vector<32x16xf32>, vector<16x256xf32>, vector<32x256xf32> -> vector<32x256xf32>
    %373 = vector.extract_strided_slice %372 {offsets = [0, 0], sizes = [16, 256], strides = [1, 1]} : vector<32x256xf32> to vector<16x256xf32>
    %374 = arith.mulf %373, %371 : vector<16x256xf32>
    %cst_90 = arith.constant dense<0.000000e+00> : vector<256xf32>
    %375 = vector.multi_reduction <add>, %374, %cst_90 [0] : vector<16x256xf32> to vector<256xf32>
    %376 = vector.shape_cast %375 : vector<256xf32> to vector<1x256xf32>
    %377 = vector.extract_strided_slice %372 {offsets = [16, 0], sizes = [16, 256], strides = [1, 1]} : vector<32x256xf32> to vector<16x256xf32>
    %378 = arith.mulf %377, %371 : vector<16x256xf32>
    %cst_91 = arith.constant dense<0.000000e+00> : vector<256xf32>
    %379 = vector.multi_reduction <add>, %378, %cst_91 [0] : vector<16x256xf32> to vector<256xf32>
    %380 = vector.shape_cast %379 : vector<256xf32> to vector<1x256xf32>
    %381 = math.floor %310 : vector<1x256xf32>
    %382 = math.floor %313 : vector<1x256xf32>
    %cst_92 = arith.constant 0.000000e+00 : f32
    %383 = vector.broadcast %cst_92 : f32 to vector<1x256xf32>
    %384 = arith.maximumf %383, %381 : vector<1x256xf32>
    %385 = vector.broadcast %cst_17 : f32 to vector<1x256xf32>
    %386 = arith.minimumf %385, %384 : vector<1x256xf32>
    %cst_93 = arith.constant 1.000000e+00 : f32
    %387 = vector.broadcast %cst_93 : f32 to vector<1x256xf32>
    %388 = arith.addf %381, %387 : vector<1x256xf32>
    %cst_94 = arith.constant 0.000000e+00 : f32
    %389 = vector.broadcast %cst_94 : f32 to vector<1x256xf32>
    %390 = arith.maximumf %389, %388 : vector<1x256xf32>
    %391 = vector.broadcast %cst_17 : f32 to vector<1x256xf32>
    %392 = arith.minimumf %391, %390 : vector<1x256xf32>
    %cst_95 = arith.constant 0.000000e+00 : f32
    %393 = vector.broadcast %cst_95 : f32 to vector<1x256xf32>
    %394 = arith.maximumf %393, %382 : vector<1x256xf32>
    %395 = vector.broadcast %cst_18 : f32 to vector<1x256xf32>
    %396 = arith.minimumf %395, %394 : vector<1x256xf32>
    %cst_96 = arith.constant 1.000000e+00 : f32
    %397 = vector.broadcast %cst_96 : f32 to vector<1x256xf32>
    %398 = arith.addf %382, %397 : vector<1x256xf32>
    %cst_97 = arith.constant 0.000000e+00 : f32
    %399 = vector.broadcast %cst_97 : f32 to vector<1x256xf32>
    %400 = arith.maximumf %399, %398 : vector<1x256xf32>
    %401 = vector.broadcast %cst_18 : f32 to vector<1x256xf32>
    %402 = arith.minimumf %401, %400 : vector<1x256xf32>
    %403 = arith.subf %392, %310 : vector<1x256xf32>
    %404 = arith.subf %310, %386 : vector<1x256xf32>
    %405 = arith.subf %402, %313 : vector<1x256xf32>
    %406 = arith.subf %313, %396 : vector<1x256xf32>
    %407 = vector.broadcast %386 : vector<1x256xf32> to vector<16x256xf32>
    %408 = arith.cmpf oeq, %5, %407 : vector<16x256xf32>
    %cst_98 = arith.constant 0.000000e+00 : f32
    %409 = vector.shape_cast %403 : vector<1x256xf32> to vector<1x256xf32>
    %410 = vector.broadcast %409 : vector<1x256xf32> to vector<16x256xf32>
    %411 = vector.broadcast %cst_98 : f32 to vector<16x256xf32>
    %412 = arith.select %408, %410, %411 : vector<16x256xi1>, vector<16x256xf32>
    %413 = vector.broadcast %392 : vector<1x256xf32> to vector<16x256xf32>
    %414 = arith.cmpf oeq, %5, %413 : vector<16x256xf32>
    %cst_99 = arith.constant 0.000000e+00 : f32
    %415 = vector.shape_cast %404 : vector<1x256xf32> to vector<1x256xf32>
    %416 = vector.broadcast %415 : vector<1x256xf32> to vector<16x256xf32>
    %417 = vector.broadcast %cst_99 : f32 to vector<16x256xf32>
    %418 = arith.select %414, %416, %417 : vector<16x256xi1>, vector<16x256xf32>
    %419 = arith.addf %412, %418 : vector<16x256xf32>
    %420 = vector.broadcast %396 : vector<1x256xf32> to vector<16x256xf32>
    %421 = arith.cmpf oeq, %7, %420 : vector<16x256xf32>
    %cst_100 = arith.constant 0.000000e+00 : f32
    %422 = vector.shape_cast %405 : vector<1x256xf32> to vector<1x256xf32>
    %423 = vector.broadcast %422 : vector<1x256xf32> to vector<16x256xf32>
    %424 = vector.broadcast %cst_100 : f32 to vector<16x256xf32>
    %425 = arith.select %421, %423, %424 : vector<16x256xi1>, vector<16x256xf32>
    %426 = vector.broadcast %402 : vector<1x256xf32> to vector<16x256xf32>
    %427 = arith.cmpf oeq, %7, %426 : vector<16x256xf32>
    %cst_101 = arith.constant 0.000000e+00 : f32
    %428 = vector.shape_cast %406 : vector<1x256xf32> to vector<1x256xf32>
    %429 = vector.broadcast %428 : vector<1x256xf32> to vector<16x256xf32>
    %430 = vector.broadcast %cst_101 : f32 to vector<16x256xf32>
    %431 = arith.select %427, %429, %430 : vector<16x256xi1>, vector<16x256xf32>
    %432 = arith.addf %425, %431 : vector<16x256xf32>
    %cst_102 = arith.constant dense<0.000000e+00> : vector<32x256xf32>
    %433 = tpu.matmul %3, %419, %cst_102 {dimension_numbers = #tpu.dot_dimension_numbers<[1], [0], [0], [1], [0, 0, 1, 1], [], []>} : vector<32x16xf32>, vector<16x256xf32>, vector<32x256xf32> -> vector<32x256xf32>
    %434 = vector.extract_strided_slice %433 {offsets = [0, 0], sizes = [16, 256], strides = [1, 1]} : vector<32x256xf32> to vector<16x256xf32>
    %435 = arith.mulf %434, %432 : vector<16x256xf32>
    %cst_103 = arith.constant dense<0.000000e+00> : vector<256xf32>
    %436 = vector.multi_reduction <add>, %435, %cst_103 [0] : vector<16x256xf32> to vector<256xf32>
    %437 = vector.shape_cast %436 : vector<256xf32> to vector<1x256xf32>
    %438 = vector.extract_strided_slice %433 {offsets = [16, 0], sizes = [16, 256], strides = [1, 1]} : vector<32x256xf32> to vector<16x256xf32>
    %439 = arith.mulf %438, %432 : vector<16x256xf32>
    %cst_104 = arith.constant dense<0.000000e+00> : vector<256xf32>
    %440 = vector.multi_reduction <add>, %439, %cst_104 [0] : vector<16x256xf32> to vector<256xf32>
    %441 = vector.shape_cast %440 : vector<256xf32> to vector<1x256xf32>
    %cst_105 = arith.constant 5.000000e-01 : f32
    %442 = vector.broadcast %cst_105 : f32 to vector<1x256xf32>
    %443 = arith.mulf %442, %376 : vector<1x256xf32>
    %444 = arith.addf %304, %443 : vector<1x256xf32>
    %cst_106 = arith.constant 5.000000e-01 : f32
    %445 = vector.broadcast %cst_106 : f32 to vector<1x256xf32>
    %446 = arith.mulf %445, %380 : vector<1x256xf32>
    %447 = arith.addf %307, %446 : vector<1x256xf32>
    %cst_107 = arith.constant 5.000000e-01 : f32
    %448 = vector.broadcast %cst_107 : f32 to vector<1x256xf32>
    %449 = arith.mulf %448, %437 : vector<1x256xf32>
    %450 = arith.addf %310, %449 : vector<1x256xf32>
    %cst_108 = arith.constant 5.000000e-01 : f32
    %451 = vector.broadcast %cst_108 : f32 to vector<1x256xf32>
    %452 = arith.mulf %451, %441 : vector<1x256xf32>
    %453 = arith.addf %313, %452 : vector<1x256xf32>
    %454 = arith.subf %444, %450 : vector<1x256xf32>
    %455 = arith.subf %447, %453 : vector<1x256xf32>
    %456 = arith.mulf %454, %454 : vector<1x256xf32>
    %457 = arith.addf %319, %456 : vector<1x256xf32>
    %458 = arith.mulf %455, %455 : vector<1x256xf32>
    %459 = arith.addf %457, %458 : vector<1x256xf32>
    %c3_i32 = arith.constant 3 : i32
    %460 = math.floor %444 : vector<1x256xf32>
    %461 = math.floor %447 : vector<1x256xf32>
    %cst_109 = arith.constant 0.000000e+00 : f32
    %462 = vector.broadcast %cst_109 : f32 to vector<1x256xf32>
    %463 = arith.maximumf %462, %460 : vector<1x256xf32>
    %464 = vector.broadcast %cst_17 : f32 to vector<1x256xf32>
    %465 = arith.minimumf %464, %463 : vector<1x256xf32>
    %cst_110 = arith.constant 1.000000e+00 : f32
    %466 = vector.broadcast %cst_110 : f32 to vector<1x256xf32>
    %467 = arith.addf %460, %466 : vector<1x256xf32>
    %cst_111 = arith.constant 0.000000e+00 : f32
    %468 = vector.broadcast %cst_111 : f32 to vector<1x256xf32>
    %469 = arith.maximumf %468, %467 : vector<1x256xf32>
    %470 = vector.broadcast %cst_17 : f32 to vector<1x256xf32>
    %471 = arith.minimumf %470, %469 : vector<1x256xf32>
    %cst_112 = arith.constant 0.000000e+00 : f32
    %472 = vector.broadcast %cst_112 : f32 to vector<1x256xf32>
    %473 = arith.maximumf %472, %461 : vector<1x256xf32>
    %474 = vector.broadcast %cst_18 : f32 to vector<1x256xf32>
    %475 = arith.minimumf %474, %473 : vector<1x256xf32>
    %cst_113 = arith.constant 1.000000e+00 : f32
    %476 = vector.broadcast %cst_113 : f32 to vector<1x256xf32>
    %477 = arith.addf %461, %476 : vector<1x256xf32>
    %cst_114 = arith.constant 0.000000e+00 : f32
    %478 = vector.broadcast %cst_114 : f32 to vector<1x256xf32>
    %479 = arith.maximumf %478, %477 : vector<1x256xf32>
    %480 = vector.broadcast %cst_18 : f32 to vector<1x256xf32>
    %481 = arith.minimumf %480, %479 : vector<1x256xf32>
    %482 = arith.subf %471, %444 : vector<1x256xf32>
    %483 = arith.subf %444, %465 : vector<1x256xf32>
    %484 = arith.subf %481, %447 : vector<1x256xf32>
    %485 = arith.subf %447, %475 : vector<1x256xf32>
    %486 = vector.broadcast %465 : vector<1x256xf32> to vector<16x256xf32>
    %487 = arith.cmpf oeq, %5, %486 : vector<16x256xf32>
    %cst_115 = arith.constant 0.000000e+00 : f32
    %488 = vector.shape_cast %482 : vector<1x256xf32> to vector<1x256xf32>
    %489 = vector.broadcast %488 : vector<1x256xf32> to vector<16x256xf32>
    %490 = vector.broadcast %cst_115 : f32 to vector<16x256xf32>
    %491 = arith.select %487, %489, %490 : vector<16x256xi1>, vector<16x256xf32>
    %492 = vector.broadcast %471 : vector<1x256xf32> to vector<16x256xf32>
    %493 = arith.cmpf oeq, %5, %492 : vector<16x256xf32>
    %cst_116 = arith.constant 0.000000e+00 : f32
    %494 = vector.shape_cast %483 : vector<1x256xf32> to vector<1x256xf32>
    %495 = vector.broadcast %494 : vector<1x256xf32> to vector<16x256xf32>
    %496 = vector.broadcast %cst_116 : f32 to vector<16x256xf32>
    %497 = arith.select %493, %495, %496 : vector<16x256xi1>, vector<16x256xf32>
    %498 = arith.addf %491, %497 : vector<16x256xf32>
    %499 = vector.broadcast %475 : vector<1x256xf32> to vector<16x256xf32>
    %500 = arith.cmpf oeq, %7, %499 : vector<16x256xf32>
    %cst_117 = arith.constant 0.000000e+00 : f32
    %501 = vector.shape_cast %484 : vector<1x256xf32> to vector<1x256xf32>
    %502 = vector.broadcast %501 : vector<1x256xf32> to vector<16x256xf32>
    %503 = vector.broadcast %cst_117 : f32 to vector<16x256xf32>
    %504 = arith.select %500, %502, %503 : vector<16x256xi1>, vector<16x256xf32>
    %505 = vector.broadcast %481 : vector<1x256xf32> to vector<16x256xf32>
    %506 = arith.cmpf oeq, %7, %505 : vector<16x256xf32>
    %cst_118 = arith.constant 0.000000e+00 : f32
    %507 = vector.shape_cast %485 : vector<1x256xf32> to vector<1x256xf32>
    %508 = vector.broadcast %507 : vector<1x256xf32> to vector<16x256xf32>
    %509 = vector.broadcast %cst_118 : f32 to vector<16x256xf32>
    %510 = arith.select %506, %508, %509 : vector<16x256xi1>, vector<16x256xf32>
    %511 = arith.addf %504, %510 : vector<16x256xf32>
    %cst_119 = arith.constant dense<0.000000e+00> : vector<32x256xf32>
    %512 = tpu.matmul %1, %498, %cst_119 {dimension_numbers = #tpu.dot_dimension_numbers<[1], [0], [0], [1], [0, 0, 1, 1], [], []>} : vector<32x16xf32>, vector<16x256xf32>, vector<32x256xf32> -> vector<32x256xf32>
    %513 = vector.extract_strided_slice %512 {offsets = [0, 0], sizes = [16, 256], strides = [1, 1]} : vector<32x256xf32> to vector<16x256xf32>
    %514 = arith.mulf %513, %511 : vector<16x256xf32>
    %cst_120 = arith.constant dense<0.000000e+00> : vector<256xf32>
    %515 = vector.multi_reduction <add>, %514, %cst_120 [0] : vector<16x256xf32> to vector<256xf32>
    %516 = vector.shape_cast %515 : vector<256xf32> to vector<1x256xf32>
    %517 = vector.extract_strided_slice %512 {offsets = [16, 0], sizes = [16, 256], strides = [1, 1]} : vector<32x256xf32> to vector<16x256xf32>
    %518 = arith.mulf %517, %511 : vector<16x256xf32>
    %cst_121 = arith.constant dense<0.000000e+00> : vector<256xf32>
    %519 = vector.multi_reduction <add>, %518, %cst_121 [0] : vector<16x256xf32> to vector<256xf32>
    %520 = vector.shape_cast %519 : vector<256xf32> to vector<1x256xf32>
    %521 = math.floor %450 : vector<1x256xf32>
    %522 = math.floor %453 : vector<1x256xf32>
    %cst_122 = arith.constant 0.000000e+00 : f32
    %523 = vector.broadcast %cst_122 : f32 to vector<1x256xf32>
    %524 = arith.maximumf %523, %521 : vector<1x256xf32>
    %525 = vector.broadcast %cst_17 : f32 to vector<1x256xf32>
    %526 = arith.minimumf %525, %524 : vector<1x256xf32>
    %cst_123 = arith.constant 1.000000e+00 : f32
    %527 = vector.broadcast %cst_123 : f32 to vector<1x256xf32>
    %528 = arith.addf %521, %527 : vector<1x256xf32>
    %cst_124 = arith.constant 0.000000e+00 : f32
    %529 = vector.broadcast %cst_124 : f32 to vector<1x256xf32>
    %530 = arith.maximumf %529, %528 : vector<1x256xf32>
    %531 = vector.broadcast %cst_17 : f32 to vector<1x256xf32>
    %532 = arith.minimumf %531, %530 : vector<1x256xf32>
    %cst_125 = arith.constant 0.000000e+00 : f32
    %533 = vector.broadcast %cst_125 : f32 to vector<1x256xf32>
    %534 = arith.maximumf %533, %522 : vector<1x256xf32>
    %535 = vector.broadcast %cst_18 : f32 to vector<1x256xf32>
    %536 = arith.minimumf %535, %534 : vector<1x256xf32>
    %cst_126 = arith.constant 1.000000e+00 : f32
    %537 = vector.broadcast %cst_126 : f32 to vector<1x256xf32>
    %538 = arith.addf %522, %537 : vector<1x256xf32>
    %cst_127 = arith.constant 0.000000e+00 : f32
    %539 = vector.broadcast %cst_127 : f32 to vector<1x256xf32>
    %540 = arith.maximumf %539, %538 : vector<1x256xf32>
    %541 = vector.broadcast %cst_18 : f32 to vector<1x256xf32>
    %542 = arith.minimumf %541, %540 : vector<1x256xf32>
    %543 = arith.subf %532, %450 : vector<1x256xf32>
    %544 = arith.subf %450, %526 : vector<1x256xf32>
    %545 = arith.subf %542, %453 : vector<1x256xf32>
    %546 = arith.subf %453, %536 : vector<1x256xf32>
    %547 = vector.broadcast %526 : vector<1x256xf32> to vector<16x256xf32>
    %548 = arith.cmpf oeq, %5, %547 : vector<16x256xf32>
    %cst_128 = arith.constant 0.000000e+00 : f32
    %549 = vector.shape_cast %543 : vector<1x256xf32> to vector<1x256xf32>
    %550 = vector.broadcast %549 : vector<1x256xf32> to vector<16x256xf32>
    %551 = vector.broadcast %cst_128 : f32 to vector<16x256xf32>
    %552 = arith.select %548, %550, %551 : vector<16x256xi1>, vector<16x256xf32>
    %553 = vector.broadcast %532 : vector<1x256xf32> to vector<16x256xf32>
    %554 = arith.cmpf oeq, %5, %553 : vector<16x256xf32>
    %cst_129 = arith.constant 0.000000e+00 : f32
    %555 = vector.shape_cast %544 : vector<1x256xf32> to vector<1x256xf32>
    %556 = vector.broadcast %555 : vector<1x256xf32> to vector<16x256xf32>
    %557 = vector.broadcast %cst_129 : f32 to vector<16x256xf32>
    %558 = arith.select %554, %556, %557 : vector<16x256xi1>, vector<16x256xf32>
    %559 = arith.addf %552, %558 : vector<16x256xf32>
    %560 = vector.broadcast %536 : vector<1x256xf32> to vector<16x256xf32>
    %561 = arith.cmpf oeq, %7, %560 : vector<16x256xf32>
    %cst_130 = arith.constant 0.000000e+00 : f32
    %562 = vector.shape_cast %545 : vector<1x256xf32> to vector<1x256xf32>
    %563 = vector.broadcast %562 : vector<1x256xf32> to vector<16x256xf32>
    %564 = vector.broadcast %cst_130 : f32 to vector<16x256xf32>
    %565 = arith.select %561, %563, %564 : vector<16x256xi1>, vector<16x256xf32>
    %566 = vector.broadcast %542 : vector<1x256xf32> to vector<16x256xf32>
    %567 = arith.cmpf oeq, %7, %566 : vector<16x256xf32>
    %cst_131 = arith.constant 0.000000e+00 : f32
    %568 = vector.shape_cast %546 : vector<1x256xf32> to vector<1x256xf32>
    %569 = vector.broadcast %568 : vector<1x256xf32> to vector<16x256xf32>
    %570 = vector.broadcast %cst_131 : f32 to vector<16x256xf32>
    %571 = arith.select %567, %569, %570 : vector<16x256xi1>, vector<16x256xf32>
    %572 = arith.addf %565, %571 : vector<16x256xf32>
    %cst_132 = arith.constant dense<0.000000e+00> : vector<32x256xf32>
    %573 = tpu.matmul %3, %559, %cst_132 {dimension_numbers = #tpu.dot_dimension_numbers<[1], [0], [0], [1], [0, 0, 1, 1], [], []>} : vector<32x16xf32>, vector<16x256xf32>, vector<32x256xf32> -> vector<32x256xf32>
    %574 = vector.extract_strided_slice %573 {offsets = [0, 0], sizes = [16, 256], strides = [1, 1]} : vector<32x256xf32> to vector<16x256xf32>
    %575 = arith.mulf %574, %572 : vector<16x256xf32>
    %cst_133 = arith.constant dense<0.000000e+00> : vector<256xf32>
    %576 = vector.multi_reduction <add>, %575, %cst_133 [0] : vector<16x256xf32> to vector<256xf32>
    %577 = vector.shape_cast %576 : vector<256xf32> to vector<1x256xf32>
    %578 = vector.extract_strided_slice %573 {offsets = [16, 0], sizes = [16, 256], strides = [1, 1]} : vector<32x256xf32> to vector<16x256xf32>
    %579 = arith.mulf %578, %572 : vector<16x256xf32>
    %cst_134 = arith.constant dense<0.000000e+00> : vector<256xf32>
    %580 = vector.multi_reduction <add>, %579, %cst_134 [0] : vector<16x256xf32> to vector<256xf32>
    %581 = vector.shape_cast %580 : vector<256xf32> to vector<1x256xf32>
    %cst_135 = arith.constant 5.000000e-01 : f32
    %582 = vector.broadcast %cst_135 : f32 to vector<1x256xf32>
    %583 = arith.mulf %582, %516 : vector<1x256xf32>
    %584 = arith.addf %444, %583 : vector<1x256xf32>
    %cst_136 = arith.constant 5.000000e-01 : f32
    %585 = vector.broadcast %cst_136 : f32 to vector<1x256xf32>
    %586 = arith.mulf %585, %520 : vector<1x256xf32>
    %587 = arith.addf %447, %586 : vector<1x256xf32>
    %cst_137 = arith.constant 5.000000e-01 : f32
    %588 = vector.broadcast %cst_137 : f32 to vector<1x256xf32>
    %589 = arith.mulf %588, %577 : vector<1x256xf32>
    %590 = arith.addf %450, %589 : vector<1x256xf32>
    %cst_138 = arith.constant 5.000000e-01 : f32
    %591 = vector.broadcast %cst_138 : f32 to vector<1x256xf32>
    %592 = arith.mulf %591, %581 : vector<1x256xf32>
    %593 = arith.addf %453, %592 : vector<1x256xf32>
    %594 = arith.subf %584, %590 : vector<1x256xf32>
    %595 = arith.subf %587, %593 : vector<1x256xf32>
    %596 = arith.mulf %594, %594 : vector<1x256xf32>
    %597 = arith.addf %459, %596 : vector<1x256xf32>
    %598 = arith.mulf %595, %595 : vector<1x256xf32>
    %599 = arith.addf %597, %598 : vector<1x256xf32>
    %c4_i32 = arith.constant 4 : i32
    %600 = math.floor %584 : vector<1x256xf32>
    %601 = math.floor %587 : vector<1x256xf32>
    %cst_139 = arith.constant 0.000000e+00 : f32
    %602 = vector.broadcast %cst_139 : f32 to vector<1x256xf32>
    %603 = arith.maximumf %602, %600 : vector<1x256xf32>
    %604 = vector.broadcast %cst_17 : f32 to vector<1x256xf32>
    %605 = arith.minimumf %604, %603 : vector<1x256xf32>
    %cst_140 = arith.constant 1.000000e+00 : f32
    %606 = vector.broadcast %cst_140 : f32 to vector<1x256xf32>
    %607 = arith.addf %600, %606 : vector<1x256xf32>
    %cst_141 = arith.constant 0.000000e+00 : f32
    %608 = vector.broadcast %cst_141 : f32 to vector<1x256xf32>
    %609 = arith.maximumf %608, %607 : vector<1x256xf32>
    %610 = vector.broadcast %cst_17 : f32 to vector<1x256xf32>
    %611 = arith.minimumf %610, %609 : vector<1x256xf32>
    %cst_142 = arith.constant 0.000000e+00 : f32
    %612 = vector.broadcast %cst_142 : f32 to vector<1x256xf32>
    %613 = arith.maximumf %612, %601 : vector<1x256xf32>
    %614 = vector.broadcast %cst_18 : f32 to vector<1x256xf32>
    %615 = arith.minimumf %614, %613 : vector<1x256xf32>
    %cst_143 = arith.constant 1.000000e+00 : f32
    %616 = vector.broadcast %cst_143 : f32 to vector<1x256xf32>
    %617 = arith.addf %601, %616 : vector<1x256xf32>
    %cst_144 = arith.constant 0.000000e+00 : f32
    %618 = vector.broadcast %cst_144 : f32 to vector<1x256xf32>
    %619 = arith.maximumf %618, %617 : vector<1x256xf32>
    %620 = vector.broadcast %cst_18 : f32 to vector<1x256xf32>
    %621 = arith.minimumf %620, %619 : vector<1x256xf32>
    %622 = arith.subf %611, %584 : vector<1x256xf32>
    %623 = arith.subf %584, %605 : vector<1x256xf32>
    %624 = arith.subf %621, %587 : vector<1x256xf32>
    %625 = arith.subf %587, %615 : vector<1x256xf32>
    %626 = vector.broadcast %605 : vector<1x256xf32> to vector<16x256xf32>
    %627 = arith.cmpf oeq, %5, %626 : vector<16x256xf32>
    %cst_145 = arith.constant 0.000000e+00 : f32
    %628 = vector.shape_cast %622 : vector<1x256xf32> to vector<1x256xf32>
    %629 = vector.broadcast %628 : vector<1x256xf32> to vector<16x256xf32>
    %630 = vector.broadcast %cst_145 : f32 to vector<16x256xf32>
    %631 = arith.select %627, %629, %630 : vector<16x256xi1>, vector<16x256xf32>
    %632 = vector.broadcast %611 : vector<1x256xf32> to vector<16x256xf32>
    %633 = arith.cmpf oeq, %5, %632 : vector<16x256xf32>
    %cst_146 = arith.constant 0.000000e+00 : f32
    %634 = vector.shape_cast %623 : vector<1x256xf32> to vector<1x256xf32>
    %635 = vector.broadcast %634 : vector<1x256xf32> to vector<16x256xf32>
    %636 = vector.broadcast %cst_146 : f32 to vector<16x256xf32>
    %637 = arith.select %633, %635, %636 : vector<16x256xi1>, vector<16x256xf32>
    %638 = arith.addf %631, %637 : vector<16x256xf32>
    %639 = vector.broadcast %615 : vector<1x256xf32> to vector<16x256xf32>
    %640 = arith.cmpf oeq, %7, %639 : vector<16x256xf32>
    %cst_147 = arith.constant 0.000000e+00 : f32
    %641 = vector.shape_cast %624 : vector<1x256xf32> to vector<1x256xf32>
    %642 = vector.broadcast %641 : vector<1x256xf32> to vector<16x256xf32>
    %643 = vector.broadcast %cst_147 : f32 to vector<16x256xf32>
    %644 = arith.select %640, %642, %643 : vector<16x256xi1>, vector<16x256xf32>
    %645 = vector.broadcast %621 : vector<1x256xf32> to vector<16x256xf32>
    %646 = arith.cmpf oeq, %7, %645 : vector<16x256xf32>
    %cst_148 = arith.constant 0.000000e+00 : f32
    %647 = vector.shape_cast %625 : vector<1x256xf32> to vector<1x256xf32>
    %648 = vector.broadcast %647 : vector<1x256xf32> to vector<16x256xf32>
    %649 = vector.broadcast %cst_148 : f32 to vector<16x256xf32>
    %650 = arith.select %646, %648, %649 : vector<16x256xi1>, vector<16x256xf32>
    %651 = arith.addf %644, %650 : vector<16x256xf32>
    %cst_149 = arith.constant dense<0.000000e+00> : vector<32x256xf32>
    %652 = tpu.matmul %1, %638, %cst_149 {dimension_numbers = #tpu.dot_dimension_numbers<[1], [0], [0], [1], [0, 0, 1, 1], [], []>} : vector<32x16xf32>, vector<16x256xf32>, vector<32x256xf32> -> vector<32x256xf32>
    %653 = vector.extract_strided_slice %652 {offsets = [0, 0], sizes = [16, 256], strides = [1, 1]} : vector<32x256xf32> to vector<16x256xf32>
    %654 = arith.mulf %653, %651 : vector<16x256xf32>
    %cst_150 = arith.constant dense<0.000000e+00> : vector<256xf32>
    %655 = vector.multi_reduction <add>, %654, %cst_150 [0] : vector<16x256xf32> to vector<256xf32>
    %656 = vector.shape_cast %655 : vector<256xf32> to vector<1x256xf32>
    %657 = vector.extract_strided_slice %652 {offsets = [16, 0], sizes = [16, 256], strides = [1, 1]} : vector<32x256xf32> to vector<16x256xf32>
    %658 = arith.mulf %657, %651 : vector<16x256xf32>
    %cst_151 = arith.constant dense<0.000000e+00> : vector<256xf32>
    %659 = vector.multi_reduction <add>, %658, %cst_151 [0] : vector<16x256xf32> to vector<256xf32>
    %660 = vector.shape_cast %659 : vector<256xf32> to vector<1x256xf32>
    %661 = math.floor %590 : vector<1x256xf32>
    %662 = math.floor %593 : vector<1x256xf32>
    %cst_152 = arith.constant 0.000000e+00 : f32
    %663 = vector.broadcast %cst_152 : f32 to vector<1x256xf32>
    %664 = arith.maximumf %663, %661 : vector<1x256xf32>
    %665 = vector.broadcast %cst_17 : f32 to vector<1x256xf32>
    %666 = arith.minimumf %665, %664 : vector<1x256xf32>
    %cst_153 = arith.constant 1.000000e+00 : f32
    %667 = vector.broadcast %cst_153 : f32 to vector<1x256xf32>
    %668 = arith.addf %661, %667 : vector<1x256xf32>
    %cst_154 = arith.constant 0.000000e+00 : f32
    %669 = vector.broadcast %cst_154 : f32 to vector<1x256xf32>
    %670 = arith.maximumf %669, %668 : vector<1x256xf32>
    %671 = vector.broadcast %cst_17 : f32 to vector<1x256xf32>
    %672 = arith.minimumf %671, %670 : vector<1x256xf32>
    %cst_155 = arith.constant 0.000000e+00 : f32
    %673 = vector.broadcast %cst_155 : f32 to vector<1x256xf32>
    %674 = arith.maximumf %673, %662 : vector<1x256xf32>
    %675 = vector.broadcast %cst_18 : f32 to vector<1x256xf32>
    %676 = arith.minimumf %675, %674 : vector<1x256xf32>
    %cst_156 = arith.constant 1.000000e+00 : f32
    %677 = vector.broadcast %cst_156 : f32 to vector<1x256xf32>
    %678 = arith.addf %662, %677 : vector<1x256xf32>
    %cst_157 = arith.constant 0.000000e+00 : f32
    %679 = vector.broadcast %cst_157 : f32 to vector<1x256xf32>
    %680 = arith.maximumf %679, %678 : vector<1x256xf32>
    %681 = vector.broadcast %cst_18 : f32 to vector<1x256xf32>
    %682 = arith.minimumf %681, %680 : vector<1x256xf32>
    %683 = arith.subf %672, %590 : vector<1x256xf32>
    %684 = arith.subf %590, %666 : vector<1x256xf32>
    %685 = arith.subf %682, %593 : vector<1x256xf32>
    %686 = arith.subf %593, %676 : vector<1x256xf32>
    %687 = vector.broadcast %666 : vector<1x256xf32> to vector<16x256xf32>
    %688 = arith.cmpf oeq, %5, %687 : vector<16x256xf32>
    %cst_158 = arith.constant 0.000000e+00 : f32
    %689 = vector.shape_cast %683 : vector<1x256xf32> to vector<1x256xf32>
    %690 = vector.broadcast %689 : vector<1x256xf32> to vector<16x256xf32>
    %691 = vector.broadcast %cst_158 : f32 to vector<16x256xf32>
    %692 = arith.select %688, %690, %691 : vector<16x256xi1>, vector<16x256xf32>
    %693 = vector.broadcast %672 : vector<1x256xf32> to vector<16x256xf32>
    %694 = arith.cmpf oeq, %5, %693 : vector<16x256xf32>
    %cst_159 = arith.constant 0.000000e+00 : f32
    %695 = vector.shape_cast %684 : vector<1x256xf32> to vector<1x256xf32>
    %696 = vector.broadcast %695 : vector<1x256xf32> to vector<16x256xf32>
    %697 = vector.broadcast %cst_159 : f32 to vector<16x256xf32>
    %698 = arith.select %694, %696, %697 : vector<16x256xi1>, vector<16x256xf32>
    %699 = arith.addf %692, %698 : vector<16x256xf32>
    %700 = vector.broadcast %676 : vector<1x256xf32> to vector<16x256xf32>
    %701 = arith.cmpf oeq, %7, %700 : vector<16x256xf32>
    %cst_160 = arith.constant 0.000000e+00 : f32
    %702 = vector.shape_cast %685 : vector<1x256xf32> to vector<1x256xf32>
    %703 = vector.broadcast %702 : vector<1x256xf32> to vector<16x256xf32>
    %704 = vector.broadcast %cst_160 : f32 to vector<16x256xf32>
    %705 = arith.select %701, %703, %704 : vector<16x256xi1>, vector<16x256xf32>
    %706 = vector.broadcast %682 : vector<1x256xf32> to vector<16x256xf32>
    %707 = arith.cmpf oeq, %7, %706 : vector<16x256xf32>
    %cst_161 = arith.constant 0.000000e+00 : f32
    %708 = vector.shape_cast %686 : vector<1x256xf32> to vector<1x256xf32>
    %709 = vector.broadcast %708 : vector<1x256xf32> to vector<16x256xf32>
    %710 = vector.broadcast %cst_161 : f32 to vector<16x256xf32>
    %711 = arith.select %707, %709, %710 : vector<16x256xi1>, vector<16x256xf32>
    %712 = arith.addf %705, %711 : vector<16x256xf32>
    %cst_162 = arith.constant dense<0.000000e+00> : vector<32x256xf32>
    %713 = tpu.matmul %3, %699, %cst_162 {dimension_numbers = #tpu.dot_dimension_numbers<[1], [0], [0], [1], [0, 0, 1, 1], [], []>} : vector<32x16xf32>, vector<16x256xf32>, vector<32x256xf32> -> vector<32x256xf32>
    %714 = vector.extract_strided_slice %713 {offsets = [0, 0], sizes = [16, 256], strides = [1, 1]} : vector<32x256xf32> to vector<16x256xf32>
    %715 = arith.mulf %714, %712 : vector<16x256xf32>
    %cst_163 = arith.constant dense<0.000000e+00> : vector<256xf32>
    %716 = vector.multi_reduction <add>, %715, %cst_163 [0] : vector<16x256xf32> to vector<256xf32>
    %717 = vector.shape_cast %716 : vector<256xf32> to vector<1x256xf32>
    %718 = vector.extract_strided_slice %713 {offsets = [16, 0], sizes = [16, 256], strides = [1, 1]} : vector<32x256xf32> to vector<16x256xf32>
    %719 = arith.mulf %718, %712 : vector<16x256xf32>
    %cst_164 = arith.constant dense<0.000000e+00> : vector<256xf32>
    %720 = vector.multi_reduction <add>, %719, %cst_164 [0] : vector<16x256xf32> to vector<256xf32>
    %721 = vector.shape_cast %720 : vector<256xf32> to vector<1x256xf32>
    %cst_165 = arith.constant 5.000000e-01 : f32
    %722 = vector.broadcast %cst_165 : f32 to vector<1x256xf32>
    %723 = arith.mulf %722, %656 : vector<1x256xf32>
    %724 = arith.addf %584, %723 : vector<1x256xf32>
    %cst_166 = arith.constant 5.000000e-01 : f32
    %725 = vector.broadcast %cst_166 : f32 to vector<1x256xf32>
    %726 = arith.mulf %725, %660 : vector<1x256xf32>
    %727 = arith.addf %587, %726 : vector<1x256xf32>
    %cst_167 = arith.constant 5.000000e-01 : f32
    %728 = vector.broadcast %cst_167 : f32 to vector<1x256xf32>
    %729 = arith.mulf %728, %717 : vector<1x256xf32>
    %730 = arith.addf %590, %729 : vector<1x256xf32>
    %cst_168 = arith.constant 5.000000e-01 : f32
    %731 = vector.broadcast %cst_168 : f32 to vector<1x256xf32>
    %732 = arith.mulf %731, %721 : vector<1x256xf32>
    %733 = arith.addf %593, %732 : vector<1x256xf32>
    %734 = arith.subf %724, %730 : vector<1x256xf32>
    %735 = arith.subf %727, %733 : vector<1x256xf32>
    %736 = arith.mulf %734, %734 : vector<1x256xf32>
    %737 = arith.addf %599, %736 : vector<1x256xf32>
    %738 = arith.mulf %735, %735 : vector<1x256xf32>
    %739 = arith.addf %737, %738 : vector<1x256xf32>
    %c5_i32 = arith.constant 5 : i32
    %740 = math.floor %724 : vector<1x256xf32>
    %741 = math.floor %727 : vector<1x256xf32>
    %cst_169 = arith.constant 0.000000e+00 : f32
    %742 = vector.broadcast %cst_169 : f32 to vector<1x256xf32>
    %743 = arith.maximumf %742, %740 : vector<1x256xf32>
    %744 = vector.broadcast %cst_17 : f32 to vector<1x256xf32>
    %745 = arith.minimumf %744, %743 : vector<1x256xf32>
    %cst_170 = arith.constant 1.000000e+00 : f32
    %746 = vector.broadcast %cst_170 : f32 to vector<1x256xf32>
    %747 = arith.addf %740, %746 : vector<1x256xf32>
    %cst_171 = arith.constant 0.000000e+00 : f32
    %748 = vector.broadcast %cst_171 : f32 to vector<1x256xf32>
    %749 = arith.maximumf %748, %747 : vector<1x256xf32>
    %750 = vector.broadcast %cst_17 : f32 to vector<1x256xf32>
    %751 = arith.minimumf %750, %749 : vector<1x256xf32>
    %cst_172 = arith.constant 0.000000e+00 : f32
    %752 = vector.broadcast %cst_172 : f32 to vector<1x256xf32>
    %753 = arith.maximumf %752, %741 : vector<1x256xf32>
    %754 = vector.broadcast %cst_18 : f32 to vector<1x256xf32>
    %755 = arith.minimumf %754, %753 : vector<1x256xf32>
    %cst_173 = arith.constant 1.000000e+00 : f32
    %756 = vector.broadcast %cst_173 : f32 to vector<1x256xf32>
    %757 = arith.addf %741, %756 : vector<1x256xf32>
    %cst_174 = arith.constant 0.000000e+00 : f32
    %758 = vector.broadcast %cst_174 : f32 to vector<1x256xf32>
    %759 = arith.maximumf %758, %757 : vector<1x256xf32>
    %760 = vector.broadcast %cst_18 : f32 to vector<1x256xf32>
    %761 = arith.minimumf %760, %759 : vector<1x256xf32>
    %762 = arith.subf %751, %724 : vector<1x256xf32>
    %763 = arith.subf %724, %745 : vector<1x256xf32>
    %764 = arith.subf %761, %727 : vector<1x256xf32>
    %765 = arith.subf %727, %755 : vector<1x256xf32>
    %766 = vector.broadcast %745 : vector<1x256xf32> to vector<16x256xf32>
    %767 = arith.cmpf oeq, %5, %766 : vector<16x256xf32>
    %cst_175 = arith.constant 0.000000e+00 : f32
    %768 = vector.shape_cast %762 : vector<1x256xf32> to vector<1x256xf32>
    %769 = vector.broadcast %768 : vector<1x256xf32> to vector<16x256xf32>
    %770 = vector.broadcast %cst_175 : f32 to vector<16x256xf32>
    %771 = arith.select %767, %769, %770 : vector<16x256xi1>, vector<16x256xf32>
    %772 = vector.broadcast %751 : vector<1x256xf32> to vector<16x256xf32>
    %773 = arith.cmpf oeq, %5, %772 : vector<16x256xf32>
    %cst_176 = arith.constant 0.000000e+00 : f32
    %774 = vector.shape_cast %763 : vector<1x256xf32> to vector<1x256xf32>
    %775 = vector.broadcast %774 : vector<1x256xf32> to vector<16x256xf32>
    %776 = vector.broadcast %cst_176 : f32 to vector<16x256xf32>
    %777 = arith.select %773, %775, %776 : vector<16x256xi1>, vector<16x256xf32>
    %778 = arith.addf %771, %777 : vector<16x256xf32>
    %779 = vector.broadcast %755 : vector<1x256xf32> to vector<16x256xf32>
    %780 = arith.cmpf oeq, %7, %779 : vector<16x256xf32>
    %cst_177 = arith.constant 0.000000e+00 : f32
    %781 = vector.shape_cast %764 : vector<1x256xf32> to vector<1x256xf32>
    %782 = vector.broadcast %781 : vector<1x256xf32> to vector<16x256xf32>
    %783 = vector.broadcast %cst_177 : f32 to vector<16x256xf32>
    %784 = arith.select %780, %782, %783 : vector<16x256xi1>, vector<16x256xf32>
    %785 = vector.broadcast %761 : vector<1x256xf32> to vector<16x256xf32>
    %786 = arith.cmpf oeq, %7, %785 : vector<16x256xf32>
    %cst_178 = arith.constant 0.000000e+00 : f32
    %787 = vector.shape_cast %765 : vector<1x256xf32> to vector<1x256xf32>
    %788 = vector.broadcast %787 : vector<1x256xf32> to vector<16x256xf32>
    %789 = vector.broadcast %cst_178 : f32 to vector<16x256xf32>
    %790 = arith.select %786, %788, %789 : vector<16x256xi1>, vector<16x256xf32>
    %791 = arith.addf %784, %790 : vector<16x256xf32>
    %cst_179 = arith.constant dense<0.000000e+00> : vector<32x256xf32>
    %792 = tpu.matmul %1, %778, %cst_179 {dimension_numbers = #tpu.dot_dimension_numbers<[1], [0], [0], [1], [0, 0, 1, 1], [], []>} : vector<32x16xf32>, vector<16x256xf32>, vector<32x256xf32> -> vector<32x256xf32>
    %793 = vector.extract_strided_slice %792 {offsets = [0, 0], sizes = [16, 256], strides = [1, 1]} : vector<32x256xf32> to vector<16x256xf32>
    %794 = arith.mulf %793, %791 : vector<16x256xf32>
    %cst_180 = arith.constant dense<0.000000e+00> : vector<256xf32>
    %795 = vector.multi_reduction <add>, %794, %cst_180 [0] : vector<16x256xf32> to vector<256xf32>
    %796 = vector.shape_cast %795 : vector<256xf32> to vector<1x256xf32>
    %797 = vector.extract_strided_slice %792 {offsets = [16, 0], sizes = [16, 256], strides = [1, 1]} : vector<32x256xf32> to vector<16x256xf32>
    %798 = arith.mulf %797, %791 : vector<16x256xf32>
    %cst_181 = arith.constant dense<0.000000e+00> : vector<256xf32>
    %799 = vector.multi_reduction <add>, %798, %cst_181 [0] : vector<16x256xf32> to vector<256xf32>
    %800 = vector.shape_cast %799 : vector<256xf32> to vector<1x256xf32>
    %801 = math.floor %730 : vector<1x256xf32>
    %802 = math.floor %733 : vector<1x256xf32>
    %cst_182 = arith.constant 0.000000e+00 : f32
    %803 = vector.broadcast %cst_182 : f32 to vector<1x256xf32>
    %804 = arith.maximumf %803, %801 : vector<1x256xf32>
    %805 = vector.broadcast %cst_17 : f32 to vector<1x256xf32>
    %806 = arith.minimumf %805, %804 : vector<1x256xf32>
    %cst_183 = arith.constant 1.000000e+00 : f32
    %807 = vector.broadcast %cst_183 : f32 to vector<1x256xf32>
    %808 = arith.addf %801, %807 : vector<1x256xf32>
    %cst_184 = arith.constant 0.000000e+00 : f32
    %809 = vector.broadcast %cst_184 : f32 to vector<1x256xf32>
    %810 = arith.maximumf %809, %808 : vector<1x256xf32>
    %811 = vector.broadcast %cst_17 : f32 to vector<1x256xf32>
    %812 = arith.minimumf %811, %810 : vector<1x256xf32>
    %cst_185 = arith.constant 0.000000e+00 : f32
    %813 = vector.broadcast %cst_185 : f32 to vector<1x256xf32>
    %814 = arith.maximumf %813, %802 : vector<1x256xf32>
    %815 = vector.broadcast %cst_18 : f32 to vector<1x256xf32>
    %816 = arith.minimumf %815, %814 : vector<1x256xf32>
    %cst_186 = arith.constant 1.000000e+00 : f32
    %817 = vector.broadcast %cst_186 : f32 to vector<1x256xf32>
    %818 = arith.addf %802, %817 : vector<1x256xf32>
    %cst_187 = arith.constant 0.000000e+00 : f32
    %819 = vector.broadcast %cst_187 : f32 to vector<1x256xf32>
    %820 = arith.maximumf %819, %818 : vector<1x256xf32>
    %821 = vector.broadcast %cst_18 : f32 to vector<1x256xf32>
    %822 = arith.minimumf %821, %820 : vector<1x256xf32>
    %823 = arith.subf %812, %730 : vector<1x256xf32>
    %824 = arith.subf %730, %806 : vector<1x256xf32>
    %825 = arith.subf %822, %733 : vector<1x256xf32>
    %826 = arith.subf %733, %816 : vector<1x256xf32>
    %827 = vector.broadcast %806 : vector<1x256xf32> to vector<16x256xf32>
    %828 = arith.cmpf oeq, %5, %827 : vector<16x256xf32>
    %cst_188 = arith.constant 0.000000e+00 : f32
    %829 = vector.shape_cast %823 : vector<1x256xf32> to vector<1x256xf32>
    %830 = vector.broadcast %829 : vector<1x256xf32> to vector<16x256xf32>
    %831 = vector.broadcast %cst_188 : f32 to vector<16x256xf32>
    %832 = arith.select %828, %830, %831 : vector<16x256xi1>, vector<16x256xf32>
    %833 = vector.broadcast %812 : vector<1x256xf32> to vector<16x256xf32>
    %834 = arith.cmpf oeq, %5, %833 : vector<16x256xf32>
    %cst_189 = arith.constant 0.000000e+00 : f32
    %835 = vector.shape_cast %824 : vector<1x256xf32> to vector<1x256xf32>
    %836 = vector.broadcast %835 : vector<1x256xf32> to vector<16x256xf32>
    %837 = vector.broadcast %cst_189 : f32 to vector<16x256xf32>
    %838 = arith.select %834, %836, %837 : vector<16x256xi1>, vector<16x256xf32>
    %839 = arith.addf %832, %838 : vector<16x256xf32>
    %840 = vector.broadcast %816 : vector<1x256xf32> to vector<16x256xf32>
    %841 = arith.cmpf oeq, %7, %840 : vector<16x256xf32>
    %cst_190 = arith.constant 0.000000e+00 : f32
    %842 = vector.shape_cast %825 : vector<1x256xf32> to vector<1x256xf32>
    %843 = vector.broadcast %842 : vector<1x256xf32> to vector<16x256xf32>
    %844 = vector.broadcast %cst_190 : f32 to vector<16x256xf32>
    %845 = arith.select %841, %843, %844 : vector<16x256xi1>, vector<16x256xf32>
    %846 = vector.broadcast %822 : vector<1x256xf32> to vector<16x256xf32>
    %847 = arith.cmpf oeq, %7, %846 : vector<16x256xf32>
    %cst_191 = arith.constant 0.000000e+00 : f32
    %848 = vector.shape_cast %826 : vector<1x256xf32> to vector<1x256xf32>
    %849 = vector.broadcast %848 : vector<1x256xf32> to vector<16x256xf32>
    %850 = vector.broadcast %cst_191 : f32 to vector<16x256xf32>
    %851 = arith.select %847, %849, %850 : vector<16x256xi1>, vector<16x256xf32>
    %852 = arith.addf %845, %851 : vector<16x256xf32>
    %cst_192 = arith.constant dense<0.000000e+00> : vector<32x256xf32>
    %853 = tpu.matmul %3, %839, %cst_192 {dimension_numbers = #tpu.dot_dimension_numbers<[1], [0], [0], [1], [0, 0, 1, 1], [], []>} : vector<32x16xf32>, vector<16x256xf32>, vector<32x256xf32> -> vector<32x256xf32>
    %854 = vector.extract_strided_slice %853 {offsets = [0, 0], sizes = [16, 256], strides = [1, 1]} : vector<32x256xf32> to vector<16x256xf32>
    %855 = arith.mulf %854, %852 : vector<16x256xf32>
    %cst_193 = arith.constant dense<0.000000e+00> : vector<256xf32>
    %856 = vector.multi_reduction <add>, %855, %cst_193 [0] : vector<16x256xf32> to vector<256xf32>
    %857 = vector.shape_cast %856 : vector<256xf32> to vector<1x256xf32>
    %858 = vector.extract_strided_slice %853 {offsets = [16, 0], sizes = [16, 256], strides = [1, 1]} : vector<32x256xf32> to vector<16x256xf32>
    %859 = arith.mulf %858, %852 : vector<16x256xf32>
    %cst_194 = arith.constant dense<0.000000e+00> : vector<256xf32>
    %860 = vector.multi_reduction <add>, %859, %cst_194 [0] : vector<16x256xf32> to vector<256xf32>
    %861 = vector.shape_cast %860 : vector<256xf32> to vector<1x256xf32>
    %cst_195 = arith.constant 5.000000e-01 : f32
    %862 = vector.broadcast %cst_195 : f32 to vector<1x256xf32>
    %863 = arith.mulf %862, %796 : vector<1x256xf32>
    %864 = arith.addf %724, %863 : vector<1x256xf32>
    %cst_196 = arith.constant 5.000000e-01 : f32
    %865 = vector.broadcast %cst_196 : f32 to vector<1x256xf32>
    %866 = arith.mulf %865, %800 : vector<1x256xf32>
    %867 = arith.addf %727, %866 : vector<1x256xf32>
    %cst_197 = arith.constant 5.000000e-01 : f32
    %868 = vector.broadcast %cst_197 : f32 to vector<1x256xf32>
    %869 = arith.mulf %868, %857 : vector<1x256xf32>
    %870 = arith.addf %730, %869 : vector<1x256xf32>
    %cst_198 = arith.constant 5.000000e-01 : f32
    %871 = vector.broadcast %cst_198 : f32 to vector<1x256xf32>
    %872 = arith.mulf %871, %861 : vector<1x256xf32>
    %873 = arith.addf %733, %872 : vector<1x256xf32>
    %874 = arith.subf %864, %870 : vector<1x256xf32>
    %875 = arith.subf %867, %873 : vector<1x256xf32>
    %876 = arith.mulf %874, %874 : vector<1x256xf32>
    %877 = arith.addf %739, %876 : vector<1x256xf32>
    %878 = arith.mulf %875, %875 : vector<1x256xf32>
    %879 = arith.addf %877, %878 : vector<1x256xf32>
    %c6_i32 = arith.constant 6 : i32
    %880 = math.floor %864 : vector<1x256xf32>
    %881 = math.floor %867 : vector<1x256xf32>
    %cst_199 = arith.constant 0.000000e+00 : f32
    %882 = vector.broadcast %cst_199 : f32 to vector<1x256xf32>
    %883 = arith.maximumf %882, %880 : vector<1x256xf32>
    %884 = vector.broadcast %cst_17 : f32 to vector<1x256xf32>
    %885 = arith.minimumf %884, %883 : vector<1x256xf32>
    %cst_200 = arith.constant 1.000000e+00 : f32
    %886 = vector.broadcast %cst_200 : f32 to vector<1x256xf32>
    %887 = arith.addf %880, %886 : vector<1x256xf32>
    %cst_201 = arith.constant 0.000000e+00 : f32
    %888 = vector.broadcast %cst_201 : f32 to vector<1x256xf32>
    %889 = arith.maximumf %888, %887 : vector<1x256xf32>
    %890 = vector.broadcast %cst_17 : f32 to vector<1x256xf32>
    %891 = arith.minimumf %890, %889 : vector<1x256xf32>
    %cst_202 = arith.constant 0.000000e+00 : f32
    %892 = vector.broadcast %cst_202 : f32 to vector<1x256xf32>
    %893 = arith.maximumf %892, %881 : vector<1x256xf32>
    %894 = vector.broadcast %cst_18 : f32 to vector<1x256xf32>
    %895 = arith.minimumf %894, %893 : vector<1x256xf32>
    %cst_203 = arith.constant 1.000000e+00 : f32
    %896 = vector.broadcast %cst_203 : f32 to vector<1x256xf32>
    %897 = arith.addf %881, %896 : vector<1x256xf32>
    %cst_204 = arith.constant 0.000000e+00 : f32
    %898 = vector.broadcast %cst_204 : f32 to vector<1x256xf32>
    %899 = arith.maximumf %898, %897 : vector<1x256xf32>
    %900 = vector.broadcast %cst_18 : f32 to vector<1x256xf32>
    %901 = arith.minimumf %900, %899 : vector<1x256xf32>
    %902 = arith.subf %891, %864 : vector<1x256xf32>
    %903 = arith.subf %864, %885 : vector<1x256xf32>
    %904 = arith.subf %901, %867 : vector<1x256xf32>
    %905 = arith.subf %867, %895 : vector<1x256xf32>
    %906 = vector.broadcast %885 : vector<1x256xf32> to vector<16x256xf32>
    %907 = arith.cmpf oeq, %5, %906 : vector<16x256xf32>
    %cst_205 = arith.constant 0.000000e+00 : f32
    %908 = vector.shape_cast %902 : vector<1x256xf32> to vector<1x256xf32>
    %909 = vector.broadcast %908 : vector<1x256xf32> to vector<16x256xf32>
    %910 = vector.broadcast %cst_205 : f32 to vector<16x256xf32>
    %911 = arith.select %907, %909, %910 : vector<16x256xi1>, vector<16x256xf32>
    %912 = vector.broadcast %891 : vector<1x256xf32> to vector<16x256xf32>
    %913 = arith.cmpf oeq, %5, %912 : vector<16x256xf32>
    %cst_206 = arith.constant 0.000000e+00 : f32
    %914 = vector.shape_cast %903 : vector<1x256xf32> to vector<1x256xf32>
    %915 = vector.broadcast %914 : vector<1x256xf32> to vector<16x256xf32>
    %916 = vector.broadcast %cst_206 : f32 to vector<16x256xf32>
    %917 = arith.select %913, %915, %916 : vector<16x256xi1>, vector<16x256xf32>
    %918 = arith.addf %911, %917 : vector<16x256xf32>
    %919 = vector.broadcast %895 : vector<1x256xf32> to vector<16x256xf32>
    %920 = arith.cmpf oeq, %7, %919 : vector<16x256xf32>
    %cst_207 = arith.constant 0.000000e+00 : f32
    %921 = vector.shape_cast %904 : vector<1x256xf32> to vector<1x256xf32>
    %922 = vector.broadcast %921 : vector<1x256xf32> to vector<16x256xf32>
    %923 = vector.broadcast %cst_207 : f32 to vector<16x256xf32>
    %924 = arith.select %920, %922, %923 : vector<16x256xi1>, vector<16x256xf32>
    %925 = vector.broadcast %901 : vector<1x256xf32> to vector<16x256xf32>
    %926 = arith.cmpf oeq, %7, %925 : vector<16x256xf32>
    %cst_208 = arith.constant 0.000000e+00 : f32
    %927 = vector.shape_cast %905 : vector<1x256xf32> to vector<1x256xf32>
    %928 = vector.broadcast %927 : vector<1x256xf32> to vector<16x256xf32>
    %929 = vector.broadcast %cst_208 : f32 to vector<16x256xf32>
    %930 = arith.select %926, %928, %929 : vector<16x256xi1>, vector<16x256xf32>
    %931 = arith.addf %924, %930 : vector<16x256xf32>
    %cst_209 = arith.constant dense<0.000000e+00> : vector<32x256xf32>
    %932 = tpu.matmul %1, %918, %cst_209 {dimension_numbers = #tpu.dot_dimension_numbers<[1], [0], [0], [1], [0, 0, 1, 1], [], []>} : vector<32x16xf32>, vector<16x256xf32>, vector<32x256xf32> -> vector<32x256xf32>
    %933 = vector.extract_strided_slice %932 {offsets = [0, 0], sizes = [16, 256], strides = [1, 1]} : vector<32x256xf32> to vector<16x256xf32>
    %934 = arith.mulf %933, %931 : vector<16x256xf32>
    %cst_210 = arith.constant dense<0.000000e+00> : vector<256xf32>
    %935 = vector.multi_reduction <add>, %934, %cst_210 [0] : vector<16x256xf32> to vector<256xf32>
    %936 = vector.shape_cast %935 : vector<256xf32> to vector<1x256xf32>
    %937 = vector.extract_strided_slice %932 {offsets = [16, 0], sizes = [16, 256], strides = [1, 1]} : vector<32x256xf32> to vector<16x256xf32>
    %938 = arith.mulf %937, %931 : vector<16x256xf32>
    %cst_211 = arith.constant dense<0.000000e+00> : vector<256xf32>
    %939 = vector.multi_reduction <add>, %938, %cst_211 [0] : vector<16x256xf32> to vector<256xf32>
    %940 = vector.shape_cast %939 : vector<256xf32> to vector<1x256xf32>
    %941 = math.floor %870 : vector<1x256xf32>
    %942 = math.floor %873 : vector<1x256xf32>
    %cst_212 = arith.constant 0.000000e+00 : f32
    %943 = vector.broadcast %cst_212 : f32 to vector<1x256xf32>
    %944 = arith.maximumf %943, %941 : vector<1x256xf32>
    %945 = vector.broadcast %cst_17 : f32 to vector<1x256xf32>
    %946 = arith.minimumf %945, %944 : vector<1x256xf32>
    %cst_213 = arith.constant 1.000000e+00 : f32
    %947 = vector.broadcast %cst_213 : f32 to vector<1x256xf32>
    %948 = arith.addf %941, %947 : vector<1x256xf32>
    %cst_214 = arith.constant 0.000000e+00 : f32
    %949 = vector.broadcast %cst_214 : f32 to vector<1x256xf32>
    %950 = arith.maximumf %949, %948 : vector<1x256xf32>
    %951 = vector.broadcast %cst_17 : f32 to vector<1x256xf32>
    %952 = arith.minimumf %951, %950 : vector<1x256xf32>
    %cst_215 = arith.constant 0.000000e+00 : f32
    %953 = vector.broadcast %cst_215 : f32 to vector<1x256xf32>
    %954 = arith.maximumf %953, %942 : vector<1x256xf32>
    %955 = vector.broadcast %cst_18 : f32 to vector<1x256xf32>
    %956 = arith.minimumf %955, %954 : vector<1x256xf32>
    %cst_216 = arith.constant 1.000000e+00 : f32
    %957 = vector.broadcast %cst_216 : f32 to vector<1x256xf32>
    %958 = arith.addf %942, %957 : vector<1x256xf32>
    %cst_217 = arith.constant 0.000000e+00 : f32
    %959 = vector.broadcast %cst_217 : f32 to vector<1x256xf32>
    %960 = arith.maximumf %959, %958 : vector<1x256xf32>
    %961 = vector.broadcast %cst_18 : f32 to vector<1x256xf32>
    %962 = arith.minimumf %961, %960 : vector<1x256xf32>
    %963 = arith.subf %952, %870 : vector<1x256xf32>
    %964 = arith.subf %870, %946 : vector<1x256xf32>
    %965 = arith.subf %962, %873 : vector<1x256xf32>
    %966 = arith.subf %873, %956 : vector<1x256xf32>
    %967 = vector.broadcast %946 : vector<1x256xf32> to vector<16x256xf32>
    %968 = arith.cmpf oeq, %5, %967 : vector<16x256xf32>
    %cst_218 = arith.constant 0.000000e+00 : f32
    %969 = vector.shape_cast %963 : vector<1x256xf32> to vector<1x256xf32>
    %970 = vector.broadcast %969 : vector<1x256xf32> to vector<16x256xf32>
    %971 = vector.broadcast %cst_218 : f32 to vector<16x256xf32>
    %972 = arith.select %968, %970, %971 : vector<16x256xi1>, vector<16x256xf32>
    %973 = vector.broadcast %952 : vector<1x256xf32> to vector<16x256xf32>
    %974 = arith.cmpf oeq, %5, %973 : vector<16x256xf32>
    %cst_219 = arith.constant 0.000000e+00 : f32
    %975 = vector.shape_cast %964 : vector<1x256xf32> to vector<1x256xf32>
    %976 = vector.broadcast %975 : vector<1x256xf32> to vector<16x256xf32>
    %977 = vector.broadcast %cst_219 : f32 to vector<16x256xf32>
    %978 = arith.select %974, %976, %977 : vector<16x256xi1>, vector<16x256xf32>
    %979 = arith.addf %972, %978 : vector<16x256xf32>
    %980 = vector.broadcast %956 : vector<1x256xf32> to vector<16x256xf32>
    %981 = arith.cmpf oeq, %7, %980 : vector<16x256xf32>
    %cst_220 = arith.constant 0.000000e+00 : f32
    %982 = vector.shape_cast %965 : vector<1x256xf32> to vector<1x256xf32>
    %983 = vector.broadcast %982 : vector<1x256xf32> to vector<16x256xf32>
    %984 = vector.broadcast %cst_220 : f32 to vector<16x256xf32>
    %985 = arith.select %981, %983, %984 : vector<16x256xi1>, vector<16x256xf32>
    %986 = vector.broadcast %962 : vector<1x256xf32> to vector<16x256xf32>
    %987 = arith.cmpf oeq, %7, %986 : vector<16x256xf32>
    %cst_221 = arith.constant 0.000000e+00 : f32
    %988 = vector.shape_cast %966 : vector<1x256xf32> to vector<1x256xf32>
    %989 = vector.broadcast %988 : vector<1x256xf32> to vector<16x256xf32>
    %990 = vector.broadcast %cst_221 : f32 to vector<16x256xf32>
    %991 = arith.select %987, %989, %990 : vector<16x256xi1>, vector<16x256xf32>
    %992 = arith.addf %985, %991 : vector<16x256xf32>
    %cst_222 = arith.constant dense<0.000000e+00> : vector<32x256xf32>
    %993 = tpu.matmul %3, %979, %cst_222 {dimension_numbers = #tpu.dot_dimension_numbers<[1], [0], [0], [1], [0, 0, 1, 1], [], []>} : vector<32x16xf32>, vector<16x256xf32>, vector<32x256xf32> -> vector<32x256xf32>
    %994 = vector.extract_strided_slice %993 {offsets = [0, 0], sizes = [16, 256], strides = [1, 1]} : vector<32x256xf32> to vector<16x256xf32>
    %995 = arith.mulf %994, %992 : vector<16x256xf32>
    %cst_223 = arith.constant dense<0.000000e+00> : vector<256xf32>
    %996 = vector.multi_reduction <add>, %995, %cst_223 [0] : vector<16x256xf32> to vector<256xf32>
    %997 = vector.shape_cast %996 : vector<256xf32> to vector<1x256xf32>
    %998 = vector.extract_strided_slice %993 {offsets = [16, 0], sizes = [16, 256], strides = [1, 1]} : vector<32x256xf32> to vector<16x256xf32>
    %999 = arith.mulf %998, %992 : vector<16x256xf32>
    %cst_224 = arith.constant dense<0.000000e+00> : vector<256xf32>
    %1000 = vector.multi_reduction <add>, %999, %cst_224 [0] : vector<16x256xf32> to vector<256xf32>
    %1001 = vector.shape_cast %1000 : vector<256xf32> to vector<1x256xf32>
    %cst_225 = arith.constant 5.000000e-01 : f32
    %1002 = vector.broadcast %cst_225 : f32 to vector<1x256xf32>
    %1003 = arith.mulf %1002, %936 : vector<1x256xf32>
    %1004 = arith.addf %864, %1003 : vector<1x256xf32>
    %cst_226 = arith.constant 5.000000e-01 : f32
    %1005 = vector.broadcast %cst_226 : f32 to vector<1x256xf32>
    %1006 = arith.mulf %1005, %940 : vector<1x256xf32>
    %1007 = arith.addf %867, %1006 : vector<1x256xf32>
    %cst_227 = arith.constant 5.000000e-01 : f32
    %1008 = vector.broadcast %cst_227 : f32 to vector<1x256xf32>
    %1009 = arith.mulf %1008, %997 : vector<1x256xf32>
    %1010 = arith.addf %870, %1009 : vector<1x256xf32>
    %cst_228 = arith.constant 5.000000e-01 : f32
    %1011 = vector.broadcast %cst_228 : f32 to vector<1x256xf32>
    %1012 = arith.mulf %1011, %1001 : vector<1x256xf32>
    %1013 = arith.addf %873, %1012 : vector<1x256xf32>
    %1014 = arith.subf %1004, %1010 : vector<1x256xf32>
    %1015 = arith.subf %1007, %1013 : vector<1x256xf32>
    %1016 = arith.mulf %1014, %1014 : vector<1x256xf32>
    %1017 = arith.addf %879, %1016 : vector<1x256xf32>
    %1018 = arith.mulf %1015, %1015 : vector<1x256xf32>
    %1019 = arith.addf %1017, %1018 : vector<1x256xf32>
    %c7_i32 = arith.constant 7 : i32
    %1020 = math.floor %1004 : vector<1x256xf32>
    %1021 = math.floor %1007 : vector<1x256xf32>
    %cst_229 = arith.constant 0.000000e+00 : f32
    %1022 = vector.broadcast %cst_229 : f32 to vector<1x256xf32>
    %1023 = arith.maximumf %1022, %1020 : vector<1x256xf32>
    %1024 = vector.broadcast %cst_17 : f32 to vector<1x256xf32>
    %1025 = arith.minimumf %1024, %1023 : vector<1x256xf32>
    %cst_230 = arith.constant 1.000000e+00 : f32
    %1026 = vector.broadcast %cst_230 : f32 to vector<1x256xf32>
    %1027 = arith.addf %1020, %1026 : vector<1x256xf32>
    %cst_231 = arith.constant 0.000000e+00 : f32
    %1028 = vector.broadcast %cst_231 : f32 to vector<1x256xf32>
    %1029 = arith.maximumf %1028, %1027 : vector<1x256xf32>
    %1030 = vector.broadcast %cst_17 : f32 to vector<1x256xf32>
    %1031 = arith.minimumf %1030, %1029 : vector<1x256xf32>
    %cst_232 = arith.constant 0.000000e+00 : f32
    %1032 = vector.broadcast %cst_232 : f32 to vector<1x256xf32>
    %1033 = arith.maximumf %1032, %1021 : vector<1x256xf32>
    %1034 = vector.broadcast %cst_18 : f32 to vector<1x256xf32>
    %1035 = arith.minimumf %1034, %1033 : vector<1x256xf32>
    %cst_233 = arith.constant 1.000000e+00 : f32
    %1036 = vector.broadcast %cst_233 : f32 to vector<1x256xf32>
    %1037 = arith.addf %1021, %1036 : vector<1x256xf32>
    %cst_234 = arith.constant 0.000000e+00 : f32
    %1038 = vector.broadcast %cst_234 : f32 to vector<1x256xf32>
    %1039 = arith.maximumf %1038, %1037 : vector<1x256xf32>
    %1040 = vector.broadcast %cst_18 : f32 to vector<1x256xf32>
    %1041 = arith.minimumf %1040, %1039 : vector<1x256xf32>
    %1042 = arith.subf %1031, %1004 : vector<1x256xf32>
    %1043 = arith.subf %1004, %1025 : vector<1x256xf32>
    %1044 = arith.subf %1041, %1007 : vector<1x256xf32>
    %1045 = arith.subf %1007, %1035 : vector<1x256xf32>
    %1046 = vector.broadcast %1025 : vector<1x256xf32> to vector<16x256xf32>
    %1047 = arith.cmpf oeq, %5, %1046 : vector<16x256xf32>
    %cst_235 = arith.constant 0.000000e+00 : f32
    %1048 = vector.shape_cast %1042 : vector<1x256xf32> to vector<1x256xf32>
    %1049 = vector.broadcast %1048 : vector<1x256xf32> to vector<16x256xf32>
    %1050 = vector.broadcast %cst_235 : f32 to vector<16x256xf32>
    %1051 = arith.select %1047, %1049, %1050 : vector<16x256xi1>, vector<16x256xf32>
    %1052 = vector.broadcast %1031 : vector<1x256xf32> to vector<16x256xf32>
    %1053 = arith.cmpf oeq, %5, %1052 : vector<16x256xf32>
    %cst_236 = arith.constant 0.000000e+00 : f32
    %1054 = vector.shape_cast %1043 : vector<1x256xf32> to vector<1x256xf32>
    %1055 = vector.broadcast %1054 : vector<1x256xf32> to vector<16x256xf32>
    %1056 = vector.broadcast %cst_236 : f32 to vector<16x256xf32>
    %1057 = arith.select %1053, %1055, %1056 : vector<16x256xi1>, vector<16x256xf32>
    %1058 = arith.addf %1051, %1057 : vector<16x256xf32>
    %1059 = vector.broadcast %1035 : vector<1x256xf32> to vector<16x256xf32>
    %1060 = arith.cmpf oeq, %7, %1059 : vector<16x256xf32>
    %cst_237 = arith.constant 0.000000e+00 : f32
    %1061 = vector.shape_cast %1044 : vector<1x256xf32> to vector<1x256xf32>
    %1062 = vector.broadcast %1061 : vector<1x256xf32> to vector<16x256xf32>
    %1063 = vector.broadcast %cst_237 : f32 to vector<16x256xf32>
    %1064 = arith.select %1060, %1062, %1063 : vector<16x256xi1>, vector<16x256xf32>
    %1065 = vector.broadcast %1041 : vector<1x256xf32> to vector<16x256xf32>
    %1066 = arith.cmpf oeq, %7, %1065 : vector<16x256xf32>
    %cst_238 = arith.constant 0.000000e+00 : f32
    %1067 = vector.shape_cast %1045 : vector<1x256xf32> to vector<1x256xf32>
    %1068 = vector.broadcast %1067 : vector<1x256xf32> to vector<16x256xf32>
    %1069 = vector.broadcast %cst_238 : f32 to vector<16x256xf32>
    %1070 = arith.select %1066, %1068, %1069 : vector<16x256xi1>, vector<16x256xf32>
    %1071 = arith.addf %1064, %1070 : vector<16x256xf32>
    %cst_239 = arith.constant dense<0.000000e+00> : vector<32x256xf32>
    %1072 = tpu.matmul %1, %1058, %cst_239 {dimension_numbers = #tpu.dot_dimension_numbers<[1], [0], [0], [1], [0, 0, 1, 1], [], []>} : vector<32x16xf32>, vector<16x256xf32>, vector<32x256xf32> -> vector<32x256xf32>
    %1073 = vector.extract_strided_slice %1072 {offsets = [0, 0], sizes = [16, 256], strides = [1, 1]} : vector<32x256xf32> to vector<16x256xf32>
    %1074 = arith.mulf %1073, %1071 : vector<16x256xf32>
    %cst_240 = arith.constant dense<0.000000e+00> : vector<256xf32>
    %1075 = vector.multi_reduction <add>, %1074, %cst_240 [0] : vector<16x256xf32> to vector<256xf32>
    %1076 = vector.shape_cast %1075 : vector<256xf32> to vector<1x256xf32>
    %1077 = vector.extract_strided_slice %1072 {offsets = [16, 0], sizes = [16, 256], strides = [1, 1]} : vector<32x256xf32> to vector<16x256xf32>
    %1078 = arith.mulf %1077, %1071 : vector<16x256xf32>
    %cst_241 = arith.constant dense<0.000000e+00> : vector<256xf32>
    %1079 = vector.multi_reduction <add>, %1078, %cst_241 [0] : vector<16x256xf32> to vector<256xf32>
    %1080 = vector.shape_cast %1079 : vector<256xf32> to vector<1x256xf32>
    %1081 = math.floor %1010 : vector<1x256xf32>
    %1082 = math.floor %1013 : vector<1x256xf32>
    %cst_242 = arith.constant 0.000000e+00 : f32
    %1083 = vector.broadcast %cst_242 : f32 to vector<1x256xf32>
    %1084 = arith.maximumf %1083, %1081 : vector<1x256xf32>
    %1085 = vector.broadcast %cst_17 : f32 to vector<1x256xf32>
    %1086 = arith.minimumf %1085, %1084 : vector<1x256xf32>
    %cst_243 = arith.constant 1.000000e+00 : f32
    %1087 = vector.broadcast %cst_243 : f32 to vector<1x256xf32>
    %1088 = arith.addf %1081, %1087 : vector<1x256xf32>
    %cst_244 = arith.constant 0.000000e+00 : f32
    %1089 = vector.broadcast %cst_244 : f32 to vector<1x256xf32>
    %1090 = arith.maximumf %1089, %1088 : vector<1x256xf32>
    %1091 = vector.broadcast %cst_17 : f32 to vector<1x256xf32>
    %1092 = arith.minimumf %1091, %1090 : vector<1x256xf32>
    %cst_245 = arith.constant 0.000000e+00 : f32
    %1093 = vector.broadcast %cst_245 : f32 to vector<1x256xf32>
    %1094 = arith.maximumf %1093, %1082 : vector<1x256xf32>
    %1095 = vector.broadcast %cst_18 : f32 to vector<1x256xf32>
    %1096 = arith.minimumf %1095, %1094 : vector<1x256xf32>
    %cst_246 = arith.constant 1.000000e+00 : f32
    %1097 = vector.broadcast %cst_246 : f32 to vector<1x256xf32>
    %1098 = arith.addf %1082, %1097 : vector<1x256xf32>
    %cst_247 = arith.constant 0.000000e+00 : f32
    %1099 = vector.broadcast %cst_247 : f32 to vector<1x256xf32>
    %1100 = arith.maximumf %1099, %1098 : vector<1x256xf32>
    %1101 = vector.broadcast %cst_18 : f32 to vector<1x256xf32>
    %1102 = arith.minimumf %1101, %1100 : vector<1x256xf32>
    %1103 = arith.subf %1092, %1010 : vector<1x256xf32>
    %1104 = arith.subf %1010, %1086 : vector<1x256xf32>
    %1105 = arith.subf %1102, %1013 : vector<1x256xf32>
    %1106 = arith.subf %1013, %1096 : vector<1x256xf32>
    %1107 = vector.broadcast %1086 : vector<1x256xf32> to vector<16x256xf32>
    %1108 = arith.cmpf oeq, %5, %1107 : vector<16x256xf32>
    %cst_248 = arith.constant 0.000000e+00 : f32
    %1109 = vector.shape_cast %1103 : vector<1x256xf32> to vector<1x256xf32>
    %1110 = vector.broadcast %1109 : vector<1x256xf32> to vector<16x256xf32>
    %1111 = vector.broadcast %cst_248 : f32 to vector<16x256xf32>
    %1112 = arith.select %1108, %1110, %1111 : vector<16x256xi1>, vector<16x256xf32>
    %1113 = vector.broadcast %1092 : vector<1x256xf32> to vector<16x256xf32>
    %1114 = arith.cmpf oeq, %5, %1113 : vector<16x256xf32>
    %cst_249 = arith.constant 0.000000e+00 : f32
    %1115 = vector.shape_cast %1104 : vector<1x256xf32> to vector<1x256xf32>
    %1116 = vector.broadcast %1115 : vector<1x256xf32> to vector<16x256xf32>
    %1117 = vector.broadcast %cst_249 : f32 to vector<16x256xf32>
    %1118 = arith.select %1114, %1116, %1117 : vector<16x256xi1>, vector<16x256xf32>
    %1119 = arith.addf %1112, %1118 : vector<16x256xf32>
    %1120 = vector.broadcast %1096 : vector<1x256xf32> to vector<16x256xf32>
    %1121 = arith.cmpf oeq, %7, %1120 : vector<16x256xf32>
    %cst_250 = arith.constant 0.000000e+00 : f32
    %1122 = vector.shape_cast %1105 : vector<1x256xf32> to vector<1x256xf32>
    %1123 = vector.broadcast %1122 : vector<1x256xf32> to vector<16x256xf32>
    %1124 = vector.broadcast %cst_250 : f32 to vector<16x256xf32>
    %1125 = arith.select %1121, %1123, %1124 : vector<16x256xi1>, vector<16x256xf32>
    %1126 = vector.broadcast %1102 : vector<1x256xf32> to vector<16x256xf32>
    %1127 = arith.cmpf oeq, %7, %1126 : vector<16x256xf32>
    %cst_251 = arith.constant 0.000000e+00 : f32
    %1128 = vector.shape_cast %1106 : vector<1x256xf32> to vector<1x256xf32>
    %1129 = vector.broadcast %1128 : vector<1x256xf32> to vector<16x256xf32>
    %1130 = vector.broadcast %cst_251 : f32 to vector<16x256xf32>
    %1131 = arith.select %1127, %1129, %1130 : vector<16x256xi1>, vector<16x256xf32>
    %1132 = arith.addf %1125, %1131 : vector<16x256xf32>
    %cst_252 = arith.constant dense<0.000000e+00> : vector<32x256xf32>
    %1133 = tpu.matmul %3, %1119, %cst_252 {dimension_numbers = #tpu.dot_dimension_numbers<[1], [0], [0], [1], [0, 0, 1, 1], [], []>} : vector<32x16xf32>, vector<16x256xf32>, vector<32x256xf32> -> vector<32x256xf32>
    %1134 = vector.extract_strided_slice %1133 {offsets = [0, 0], sizes = [16, 256], strides = [1, 1]} : vector<32x256xf32> to vector<16x256xf32>
    %1135 = arith.mulf %1134, %1132 : vector<16x256xf32>
    %cst_253 = arith.constant dense<0.000000e+00> : vector<256xf32>
    %1136 = vector.multi_reduction <add>, %1135, %cst_253 [0] : vector<16x256xf32> to vector<256xf32>
    %1137 = vector.shape_cast %1136 : vector<256xf32> to vector<1x256xf32>
    %1138 = vector.extract_strided_slice %1133 {offsets = [16, 0], sizes = [16, 256], strides = [1, 1]} : vector<32x256xf32> to vector<16x256xf32>
    %1139 = arith.mulf %1138, %1132 : vector<16x256xf32>
    %cst_254 = arith.constant dense<0.000000e+00> : vector<256xf32>
    %1140 = vector.multi_reduction <add>, %1139, %cst_254 [0] : vector<16x256xf32> to vector<256xf32>
    %1141 = vector.shape_cast %1140 : vector<256xf32> to vector<1x256xf32>
    %cst_255 = arith.constant 5.000000e-01 : f32
    %1142 = vector.broadcast %cst_255 : f32 to vector<1x256xf32>
    %1143 = arith.mulf %1142, %1076 : vector<1x256xf32>
    %1144 = arith.addf %1004, %1143 : vector<1x256xf32>
    %cst_256 = arith.constant 5.000000e-01 : f32
    %1145 = vector.broadcast %cst_256 : f32 to vector<1x256xf32>
    %1146 = arith.mulf %1145, %1080 : vector<1x256xf32>
    %1147 = arith.addf %1007, %1146 : vector<1x256xf32>
    %cst_257 = arith.constant 5.000000e-01 : f32
    %1148 = vector.broadcast %cst_257 : f32 to vector<1x256xf32>
    %1149 = arith.mulf %1148, %1137 : vector<1x256xf32>
    %1150 = arith.addf %1010, %1149 : vector<1x256xf32>
    %cst_258 = arith.constant 5.000000e-01 : f32
    %1151 = vector.broadcast %cst_258 : f32 to vector<1x256xf32>
    %1152 = arith.mulf %1151, %1141 : vector<1x256xf32>
    %1153 = arith.addf %1013, %1152 : vector<1x256xf32>
    %1154 = arith.subf %1144, %1150 : vector<1x256xf32>
    %1155 = arith.subf %1147, %1153 : vector<1x256xf32>
    %1156 = arith.mulf %1154, %1154 : vector<1x256xf32>
    %1157 = arith.addf %1019, %1156 : vector<1x256xf32>
    %1158 = arith.mulf %1155, %1155 : vector<1x256xf32>
    %1159 = arith.addf %1157, %1158 : vector<1x256xf32>
    %c0_259 = arith.constant 0 : index
    %c0_260 = arith.constant 0 : index
    %c0_261 = arith.constant 0 : index
    %c0_262 = arith.constant 0 : index
    %1160 = vector.load %arg4[%c0_259, %c0_260, %c0_261, %c0_262] : memref<1x1x1x256xf32, #tpu.memory_space<vmem>>, vector<1x1x1x256xf32>
    %1161 = vector.shape_cast %1160 : vector<1x1x1x256xf32> to vector<1x256xf32>
    %1162 = vector.shape_cast %1159 : vector<1x256xf32> to vector<1x1x1x256xf32>
    tpu.vector_store %arg4[%c0_259, %c0_260, %c0_261, %c0_262], %1162 {strides = array<i32>} : memref<1x1x1x256xf32, #tpu.memory_space<vmem>>, vector<1x1x1x256xf32>,
    return
  }
  func.func @transform_0(%arg0: i32, %arg1: i32) -> (i32, i32, i32) {
    %c0_i32 = arith.constant 0 : i32
    %c0_i32_0 = arith.constant 0 : i32
    %c0_i32_1 = arith.constant 0 : i32
    return %arg0, %c0_i32, %c0_i32_0 : i32, i32, i32
  }
  func.func @transform_1(%arg0: i32, %arg1: i32) -> (i32, i32, i32) {
    %c0_i32 = arith.constant 0 : i32
    %c0_i32_0 = arith.constant 0 : i32
    %c0_i32_1 = arith.constant 0 : i32
    return %arg0, %c0_i32, %c0_i32_0 : i32, i32, i32
  }
  func.func @transform_2(%arg0: i32, %arg1: i32) -> (i32, i32, i32, i32) {
    %c0_i32 = arith.constant 0 : i32
    %c0_i32_0 = arith.constant 0 : i32
    %c0_i32_1 = arith.constant 0 : i32
    return %arg0, %arg1, %c0_i32, %c0_i32_0 : i32, i32, i32, i32
  }
}

</mosaic_0001>

<llo_original>
// kernel: tpu_custom_call.1
$region0: #{tpu_custom_call.1}
  #allocation0 [shape = 'u32[]', space=smem, size = 0x4, offset = 0x4, fixed_abs, tag = 'smem constant byte address 0x4 - core index']
  #allocation1 [shape = 'u32[144,128]{1,0:T(1,128)}', space=vmem, size = 0x12000, scoped, tag = 'internal scratch']
  %s0 = inlined_call_operand.vmem [shape: f32[2,32,16], index: 0, kind: input, shape index: {}]
  %s1 = inlined_call_operand.vmem [shape: f32[2,32,16], index: 1, kind: input, shape index: {}]
  %s2 = inlined_call_operand.hbm [shape: f32[2,1,1,256], index: 2, kind: output, shape index: {}]
  %s3 = sld [smem:[#allocation0]]
  $region41: #{tpu_custom_call.1} parent=0
    _
  %s5 = ssub.s32 1, %s3
  %s6 = scalar_select 0, %s5, %s3
  $region1: #{tpu_custom_call.1} parent=0
    #allocation2 [shape = 'u8[2048]{0}', space=vmem, size = 0x800, scoped, tag = 'output window, operand 0']
    #allocation3 [shape = 's32[2]{0}', space=sflag, size = 0x8, scoped, tag = 'scoped memory for tpu_custom_call.1']
    %7 = vsyncpa [#allocation3], 0
    %s8 = scalar_lea.sflag [#allocation3], 1
    %9 = vsyncpa %s8, 0
    loop: start=0, step=1, limit=4
    $region2: #{tpu_custom_call.1} parent=1 // loop_pre_header
      _
    $region3: #{tpu_custom_call.1} parent=1 // loop_header
      %s11 = sphi 0, %s15
      %p12 = scmp.ge.s32.totalorder %s11, 4
      %s18 = sphi 0, %s30
      %s19 = sphi 0, %s26
      %s20 = sphi 0, %s18
      %s21 = sphi 0, %s19
      %s22 = sphi 0, %s20
      %s23 = sphi 0, %s21
      %s33 = sphi 0, %s35
      %s36 = sphi 0, %s33
      %s37 = sphi 0, %s36
      %s53 = sphi 0, %s37
      %s59 = sphi 0, %s61
      %s62 = sphi 0, %s59
      %s63 = sphi 0, %s62
      %s79 = sphi 0, %s63
      %s87 = sphi 0, %s89
      %s90 = sphi 0, %s87
      %s91 = sphi 0, %s90
      %s107 = sphi 0, %s91
    $region4: #{tpu_custom_call.1} parent=1 // loop_header_branch
      %14 = sbr.rel (%p12) target = $region8
    $region5: #{tpu_custom_call.1} parent=1 // loop_body
      %s16 = ssub.s32 %s11, 1
      %s17 = ssub.s32 %s11, 2
      %s24 = sadd.s32 1, %s19
      %p25 = scmp.ge.s32.totalorder %s24, 1
      %s26 = scalar_select %p25, 0, %s24
      %s27 = sadd.s32 1, %s18
      %s28 = scalar_select %p25, %s27, %s18
      %p29 = scmp.ge.s32.totalorder %s28, 2
      %s30 = scalar_select %p29, 0, %s28
      %s31 = ssub.s32 %s18, %s30
      %p32 = scmp.eq.s32.totalorder %s31, 0
      %s34 = sadd.s32 %s33, 1
      %s35 = scalar_select %p32, %s33, %s34
      %p38 = pneg %p32
      %p39 = scmp.eq.s32.totalorder %s11, 1
      %p40 = por %p38, %p39
      %p41 = scmp.ne.s32.totalorder %s33, %s36
      %p42 = scmp.eq.s32.totalorder %s11, 0
      %p43 = por %p41, %p42
      %p44 = scmp.ne.s32.totalorder %s33, %s36
      %p45 = scmp.eq.s32.totalorder %s16, 1
      %p46 = por %p44, %p45
      %p47 = scmp.ne.s32.totalorder %s36, %s37
      %p48 = scmp.eq.s32.totalorder %s16, 0
      %p49 = por %p47, %p48
      %p50 = scmp.ne.s32.totalorder %s36, %s37
      %p51 = scmp.eq.s32.totalorder %s17, 1
      %p52 = por %p50, %p51
      %p54 = scmp.ne.s32.totalorder %s37, %s53
      %p55 = scmp.eq.s32.totalorder %s17, 0
      %p56 = por %p54, %p55
      %s57 = ssub.s32 %s18, %s30
      %p58 = scmp.eq.s32.totalorder %s57, 0
      %s60 = sadd.s32 %s59, 1
      %s61 = scalar_select %p58, %s59, %s60
      %p64 = pneg %p58
      %p65 = scmp.eq.s32.totalorder %s11, 1
      %p66 = por %p64, %p65
      %p67 = scmp.ne.s32.totalorder %s59, %s62
      %p68 = scmp.eq.s32.totalorder %s11, 0
      %p69 = por %p67, %p68
      %p70 = scmp.ne.s32.totalorder %s59, %s62
      %p71 = scmp.eq.s32.totalorder %s16, 1
      %p72 = por %p70, %p71
      %p73 = scmp.ne.s32.totalorder %s62, %s63
      %p74 = scmp.eq.s32.totalorder %s16, 0
      %p75 = por %p73, %p74
      %p76 = scmp.ne.s32.totalorder %s62, %s63
      %p77 = scmp.eq.s32.totalorder %s17, 1
      %p78 = por %p76, %p77
      %p80 = scmp.ne.s32.totalorder %s63, %s79
      %p81 = scmp.eq.s32.totalorder %s17, 0
      %p82 = por %p80, %p81
      %s83 = ssub.s32 %s18, %s30
      %s84 = ssub.s32 %s19, %s26
      %s85 = sor.u32 %s83, %s84
      %p86 = scmp.eq.s32.totalorder %s85, 0
      %s88 = sadd.s32 %s87, 1
      %s89 = scalar_select %p86, %s87, %s88
      %p92 = pneg %p86
      %p93 = scmp.eq.s32.totalorder %s11, 1
      %p94 = por %p92, %p93
      %p95 = scmp.ne.s32.totalorder %s87, %s90
      %p96 = scmp.eq.s32.totalorder %s11, 0
      %p97 = por %p95, %p96
      %p98 = scmp.ne.s32.totalorder %s87, %s90
      %p99 = scmp.eq.s32.totalorder %s16, 1
      %p100 = por %p98, %p99
      %p101 = scmp.ne.s32.totalorder %s90, %s91
      %p102 = scmp.eq.s32.totalorder %s16, 0
      %p103 = por %p101, %p102
      %p104 = scmp.ne.s32.totalorder %s90, %s91
      %p105 = scmp.eq.s32.totalorder %s17, 1
      %p106 = por %p104, %p105
      %p108 = scmp.ne.s32.totalorder %s91, %s107
      %p109 = scmp.eq.s32.totalorder %s17, 0
      %p110 = por %p108, %p109
      %p111 = scmp.le.s32.totalorder 1, %s11
      %p112 = scmp.lt.s32.totalorder %s11, 3
      %p113 = pnand %p111, %p112
      %p114 = pneg %p113
      // Predicated region
      $region9: #{tpu_custom_call.1} parent=5 // pred_check
        _
      $region10: #{tpu_custom_call.1} parent=5 // pred_check_branch
        %116 = sbr.rel (%p113) target = $region12
      $region11: #{tpu_custom_call.1} parent=5 // pred_region
        %s117 = ssub.s32 %s11, 1
      $region12: #{tpu_custom_call.1} parent=5 // pred_fallthru
        _
      %p118 = scmp.lt.s32.totalorder %s11, 2
      // Predicated region
      $region13: #{tpu_custom_call.1} parent=5 // pred_check
        %p119 = pneg %p118
      $region14: #{tpu_custom_call.1} parent=5 // pred_check_branch
        %121 = sbr.rel (%p119) target = $region16
      $region15: #{tpu_custom_call.1} parent=5 // pred_region
        // Predicated region
        $region17: #{tpu_custom_call.1} parent=15 // pred_check
          %p122 = pneg %p43
        $region18: #{tpu_custom_call.1} parent=15 // pred_check_branch
          %124 = sbr.rel (%p122) target = $region20
        $region19: #{tpu_custom_call.1} parent=15 // pred_region
          %p125 = scmp.lt.s32.totalorder %s18, 1
          %s126 = scalar_select %p125, %s18, 1
          %s127 = smul.addr %s126, 4
          %s128 = smul.addr %s127, 8
          %s129 = scalar_lea.vmem %s0, %s128
        $region20: #{tpu_custom_call.1} parent=15 // pred_fallthru
          _
        // Predicated region
        $region21: #{tpu_custom_call.1} parent=15 // pred_check
          %p130 = pneg %p69
        $region22: #{tpu_custom_call.1} parent=15 // pred_check_branch
          %132 = sbr.rel (%p130) target = $region24
        $region23: #{tpu_custom_call.1} parent=15 // pred_region
          %p133 = scmp.lt.s32.totalorder %s18, 1
          %s134 = scalar_select %p133, %s18, 1
          %s135 = smul.addr %s134, 4
          %s136 = smul.addr %s135, 8
          %s137 = scalar_lea.vmem %s1, %s136
        $region24: #{tpu_custom_call.1} parent=15 // pred_fallthru
          _
      $region16: #{tpu_custom_call.1} parent=5 // pred_fallthru
        _
      %p138 = scmp.le.s32.totalorder 1, %s11
      %p139 = scmp.lt.s32.totalorder %s11, 3
      %p140 = pnand %p138, %p139
      %p141 = pneg %p140
      // Predicated region
      $region25: #{tpu_custom_call.1} parent=5 // pred_check
        _
      $region26: #{tpu_custom_call.1} parent=5 // pred_check_branch
        %143 = sbr.rel (%p140) target = $region28
      $region27: #{tpu_custom_call.1} parent=5 // pred_region
        %s144 = ssub.s32 %s11, 1
        %p145 = scmp.lt.s32.totalorder %s20, 1
        %s146 = scalar_select %p145, %s20, 1
        %s147 = smul.addr %s146, 4
        %s148 = smul.addr %s147, 8
        %s149 = scalar_lea.vmem %s0, %s148
        %p150 = pneg %p49
        %p151 = pneg %p46
        %p152 = scmp.lt.s32.totalorder %s20, 1
        %s153 = scalar_select %p152, %s20, 1
        %s154 = smul.addr %s153, 4
        %s155 = smul.addr %s154, 8
        %s156 = scalar_lea.vmem %s1, %s155
        %p157 = pneg %p75
        %p158 = pneg %p72
        %p159 = pneg %p103
        %p160 = pneg %p100
        %s161 = sand.u32 %s90, 1
        %s162 = scalar_lea.sflag [#allocation3], %s161
        %s163 = sand.u32 %s90, 1
        %s164 = smul.addr %s163, 2
        %s165 = scalar_lea.vmem [#allocation2], %s164
        %p166 = scmp.lt.s32.totalorder %s20, 1
        %s167 = scalar_select %p166, %s20, 1
        %s168 = smul.addr %s167, 4
        %s169 = smul.addr %s168, 8
        %s170 = scalar_lea.vmem %s0, %s169
        %p171 = scmp.lt.s32.totalorder %s20, 1
        %s172 = scalar_select %p171, %s20, 1
        %s173 = smul.addr %s172, 4
        %s174 = smul.addr %s173, 8
        %s175 = scalar_lea.vmem %s1, %s174
        %v176 = vld [vmem:[%s170] sm:$0xff]
        %v177 = vld [vmem:[%s170 + $0x8] sm:$0xff]
        %v178 = vld [vmem:[%s170 + $0x10] sm:$0xff]
        %v179 = vld [vmem:[%s170 + $0x18] sm:$0xff]
        %v180 = vld [vmem:[%s175] sm:$0xff]
        %v181 = vld [vmem:[%s175 + $0x8] sm:$0xff]
        %v182 = vld [vmem:[%s175 + $0x10] sm:$0xff]
        %v183 = vld [vmem:[%s175 + $0x18] sm:$0xff]
        %v184 = vlaneseq
        %v185 = vshrl.u32 %v184, 7
        %v186 = vadd.s32 %v185, 8
        %v187 = vcvt.s32.f32 %v185
        %v188 = vcvt.s32.f32 %v186
        %v189 = vlaneseq
        %v190 = vand.u32 %v189, 127
        %v191 = vadd.s32 %v190, 128
        %s192 = smul.u32 %s21, 256
        %v193 = vstv %s192
        %v194 = vadd.s32 %v190, %v193
        %v195 = vadd.s32 %v191, %v193
        %v196 = vcvt.s32.f32 %v194
        %v197 = vcvt.s32.f32 %v195
        %v198 = vmul.f32 %v196, 0.0625
        %v199 = vmul.f32 %v197, 0.0625
        %v200 = vfloor.f32 %v198
        %v201 = vfloor.f32 %v199
        %v202 = vmul.f32 %v200, 16.0
        %v203 = vmul.f32 %v201, 16.0
        %v204 = vsub.f32 %v196, %v202
        %v205 = vsub.f32 %v197, %v203
        %vm206 = vcmp.ge.f32.partialorder %v204, 16.0
        %vm207 = vcmp.ge.f32.partialorder %v205, 16.0
        %vm208 = vcmp.lt.f32.partialorder %v204, 0.0
        %vm209 = vcmp.lt.f32.partialorder %v205, 0.0
        %v210 = vsel %vm206, 1.0, 0.0
        %v211 = vsel %vm207, 1.0, 0.0
        %v212 = vadd.f32 %v200, %v210
        %v213 = vadd.f32 %v201, %v211
        %v214 = vsel %vm208, 1.0, 0.0
        %v215 = vsel %vm209, 1.0, 0.0
        %v216 = vsub.f32 %v212, %v214
        %v217 = vsub.f32 %v213, %v215
        %v218 = vsel %vm206, 16.0, 0.0
        %v219 = vsel %vm207, 16.0, 0.0
        %v220 = vsub.f32 %v204, %v218
        %v221 = vsub.f32 %v205, %v219
        %v222 = vsel %vm208, 16.0, 0.0
        %v223 = vsel %vm209, 16.0, 0.0
        %v224 = vadd.f32 %v220, %v222
        %v225 = vadd.f32 %v221, %v223
        %v226 = vfloor.f32 %v224
        %v227 = vfloor.f32 %v225
        %v228 = vfloor.f32 %v216
        %v229 = vfloor.f32 %v217
        %v230 = vmax.f32 %v226, 0.0
        %v231 = vmax.f32 %v227, 0.0
        %v232 = vmin.f32 %v230, 15.0
        %v233 = vmin.f32 %v231, 15.0
        %v234 = vadd.f32 %v226, 1.0
        %v235 = vadd.f32 %v227, 1.0
        %v236 = vmax.f32 %v234, 0.0
        %v237 = vmax.f32 %v235, 0.0
        %v238 = vmin.f32 %v236, 15.0
        %v239 = vmin.f32 %v237, 15.0
        %v240 = vmax.f32 %v228, 0.0
        %v241 = vmax.f32 %v229, 0.0
        %v242 = vmin.f32 %v240, 15.0
        %v243 = vmin.f32 %v241, 15.0
        %v244 = vadd.f32 %v228, 1.0
        %v245 = vadd.f32 %v229, 1.0
        %v246 = vmax.f32 %v244, 0.0
        %v247 = vmax.f32 %v245, 0.0
        %v248 = vmin.f32 %v246, 15.0
        %v249 = vmin.f32 %v247, 15.0
        %v250 = vsub.f32 %v238, %v224
        %v251 = vsub.f32 %v239, %v225
        %v252 = vsub.f32 %v224, %v232
        %v253 = vsub.f32 %v225, %v233
        %v254 = vsub.f32 %v248, %v216
        %v255 = vsub.f32 %v249, %v217
        %v256 = vsub.f32 %v216, %v242
        %v257 = vsub.f32 %v217, %v243
        %vm258 = vcmp.eq.f32.partialorder %v187, %v232
        %vm259 = vcmp.eq.f32.partialorder %v187, %v233
        %vm260 = vcmp.eq.f32.partialorder %v188, %v232
        %vm261 = vcmp.eq.f32.partialorder %v188, %v233
        %v262 = vsel %vm258, %v250, 0.0
        %v263 = vsel %vm259, %v251, 0.0
        %v264 = vsel %vm260, %v250, 0.0
        %v265 = vsel %vm261, %v251, 0.0
        %vm266 = vcmp.eq.f32.partialorder %v187, %v238
        %vm267 = vcmp.eq.f32.partialorder %v187, %v239
        %vm268 = vcmp.eq.f32.partialorder %v188, %v238
        %vm269 = vcmp.eq.f32.partialorder %v188, %v239
        %v270 = vsel %vm266, %v252, 0.0
        %v271 = vsel %vm267, %v253, 0.0
        %v272 = vsel %vm268, %v252, 0.0
        %v273 = vsel %vm269, %v253, 0.0
        %v274 = vadd.f32 %v262, %v270
        %v275 = vadd.f32 %v263, %v271
        %v276 = vadd.f32 %v264, %v272
        %v277 = vadd.f32 %v265, %v273
        %vm278 = vcmp.eq.f32.partialorder %v187, %v242
        %vm279 = vcmp.eq.f32.partialorder %v187, %v243
        %vm280 = vcmp.eq.f32.partialorder %v188, %v242
        %vm281 = vcmp.eq.f32.partialorder %v188, %v243
        %v282 = vsel %vm278, %v254, 0.0
        %v283 = vsel %vm279, %v255, 0.0
        %v284 = vsel %vm280, %v254, 0.0
        %v285 = vsel %vm281, %v255, 0.0
        %vm286 = vcmp.eq.f32.partialorder %v187, %v248
        %vm287 = vcmp.eq.f32.partialorder %v187, %v249
        %vm288 = vcmp.eq.f32.partialorder %v188, %v248
        %vm289 = vcmp.eq.f32.partialorder %v188, %v249
        %v290 = vsel %vm286, %v256, 0.0
        %v291 = vsel %vm287, %v257, 0.0
        %v292 = vsel %vm288, %v256, 0.0
        %v293 = vsel %vm289, %v257, 0.0
        %v294 = vadd.f32 %v282, %v290
        %v295 = vadd.f32 %v283, %v291
        %v296 = vadd.f32 %v284, %v292
        %v297 = vadd.f32 %v285, %v293
        %vm298 = vcmask 130048
        %v300 = vsel %vm298, %v176, 0
        %v303 = vsel %vm298, %v177, 0
        %v306 = vsel %vm298, %v178, 0
        %v309 = vsel %vm298, %v179, 0
        %311 = vmatprep.subr.mxu0 0.0
        %312 = vmatpush1.msra.mxu0 0.0
        %313 = vmatprep.subr.mxu0 0.0
        %314 = vmatpush1.msra.mxu0 0.0
        %315 = vmatprep.subr.mxu0 0.0
        %316 = vmatpush1.msra.mxu0 0.0
        %317 = vmatprep.subr.mxu0 0.0
        %318 = vmatpush1.msra.mxu0 0.0
        %319 = vmatprep.subr.mxu0 0.0
        %320 = vmatpush1.msra.mxu0 0.0
        %321 = vmatprep.subr.mxu0 0.0
        %322 = vmatpush1.msra.mxu0 0.0
        %323 = vmatprep.subr.mxu0 0.0
        %324 = vmatpush1.msra.mxu0 0.0
        %325 = vmatprep.subr.mxu0 0.0
        %326 = vmatpush1.msra.mxu0 0.0
        %327 = vmatprep.subr.mxu0 0.0
        %328 = vmatpush1.msra.mxu0 0.0
        %329 = vmatprep.subr.mxu0 0.0
        %330 = vmatpush1.msra.mxu0 0.0
        %331 = vmatprep.subr.mxu0 0.0
        %332 = vmatpush1.msra.mxu0 0.0
        %333 = vmatprep.subr.mxu0 0.0
        %334 = vmatpush1.msra.mxu0 0.0
        %335 = vmatprep.subr.mxu0 0.0
        %336 = vmatpush1.msra.mxu0 0.0
        %337 = vmatprep.subr.mxu0 0.0
        %338 = vmatpush1.msra.mxu0 0.0
        %339 = vmatprep.subr.mxu0 %v277
        %340 = vmatpush1.msra.mxu0 %v276
        %341 = vmatprep.subr.mxu0 %v275
        %342 = vmatpush1.msra.mxu0 %v274
        %343 = vmatprep.subr.mxu0 0.0
        %344 = vmatpush2.msra.mxu0 0.0
        %345 = vmatprep.subr.mxu0 0.0
        %346 = vmatpush2.msra.mxu0 0.0
        %347 = vmatprep.subr.mxu0 0.0
        %348 = vmatpush2.msra.mxu0 0.0
        %349 = vmatprep.subr.mxu0 0.0
        %350 = vmatpush2.msra.mxu0 0.0
        %351 = vmatprep.subr.mxu0 0.0
        %352 = vmatpush2.msra.mxu0 0.0
        %353 = vmatprep.subr.mxu0 0.0
        %354 = vmatpush2.msra.mxu0 0.0
        %355 = vmatprep.subr.mxu0 0.0
        %356 = vmatpush2.msra.mxu0 0.0
        %357 = vmatprep.subr.mxu0 0.0
        %358 = vmatpush2.msra.mxu0 0.0
        %359 = vmatprep.subr.mxu0 0.0
        %360 = vmatpush2.msra.mxu0 0.0
        %361 = vmatprep.subr.mxu0 0.0
        %362 = vmatpush2.msra.mxu0 0.0
        %363 = vmatprep.subr.mxu0 0.0
        %364 = vmatpush2.msra.mxu0 0.0
        %365 = vmatprep.subr.mxu0 0.0
        %366 = vmatpush2.msra.mxu0 0.0
        %367 = vmatprep.subr.mxu0 0.0
        %368 = vmatpush2.msra.mxu0 0.0
        %369 = vmatprep.subr.mxu0 0.0
        %370 = vmatpush2.msra.mxu0 0.0
        %371 = vmatprep.subr.mxu0 0.0
        %372 = vmatpush2.msra.mxu0 0.0
        %373 = vmatprep.subr.mxu0 0.0
        %374 = vmatpush2.msra.mxu0 0.0
        %375 = vmatprep.mubr.f32.mxu0 0.0
        %376 = vmatmul.mubr.f32.gmra.mxu0 %v300
        %v377 = vpop.f32.mrf.mxu0
        %v378 = vadd.f32 0.0, %v377
        %v379 = vpop.f32.mrf.mxu0
        %v380 = vadd.f32 0.0, %v379
        %381 = vmatprep.mubr.f32.mxu0 0.0
        %382 = vmatmul.mubr.f32.gmra.mxu0 %v303
        %v383 = vpop.f32.mrf.mxu0
        %v384 = vadd.f32 0.0, %v383
        %v385 = vpop.f32.mrf.mxu0
        %v386 = vadd.f32 0.0, %v385
        %387 = vmatprep.mubr.f32.mxu0 0.0
        %388 = vmatmul.mubr.f32.gmra.mxu0 %v306
        %v389 = vpop.f32.mrf.mxu0
        %v390 = vadd.f32 0.0, %v389
        %v391 = vpop.f32.mrf.mxu0
        %v392 = vadd.f32 0.0, %v391
        %393 = vmatprep.mubr.f32.mxu0 0.0
        %394 = vmatmul.mubr.f32.gmra.mxu0 %v309
        %v395 = vpop.f32.mrf.mxu0
        %v396 = vadd.f32 0.0, %v395
        %v397 = vpop.f32.mrf.mxu0
        %v398 = vadd.f32 0.0, %v397
        %399 = vdwg.mxu0
        %v400 = vmul.f32 %v378, %v294
        %v401 = vmul.f32 %v380, %v295
        %v402 = vmul.f32 %v384, %v296
        %v403 = vmul.f32 %v386, %v297
        %v404 = vadd.f32 %v400, %v402
        %v405 = vrot.slane %v404, 4
        %v406 = vadd.f32 %v404, %v405
        %v407 = vrot.slane %v406, 2
        %v408 = vadd.f32 %v406, %v407
        %v409 = vrot.slane %v408, 1
        %v410 = vadd.f32 %v408, %v409
        %v411 = vadd.f32 %v401, %v403
        %v412 = vrot.slane %v411, 4
        %v413 = vadd.f32 %v411, %v412
        %v414 = vrot.slane %v413, 2
        %v415 = vadd.f32 %v413, %v414
        %v416 = vrot.slane %v415, 1
        %v417 = vadd.f32 %v415, %v416
        %v418 = vmul.f32 %v390, %v294
        %v419 = vmul.f32 %v392, %v295
        %v420 = vmul.f32 %v396, %v296
        %v421 = vmul.f32 %v398, %v297
        %v422 = vadd.f32 %v418, %v420
        %v423 = vrot.slane %v422, 4
        %v424 = vadd.f32 %v422, %v423
        %v425 = vrot.slane %v424, 2
        %v426 = vadd.f32 %v424, %v425
        %v427 = vrot.slane %v426, 1
        %v428 = vadd.f32 %v426, %v427
        %v429 = vadd.f32 %v419, %v421
        %v430 = vrot.slane %v429, 4
        %v431 = vadd.f32 %v429, %v430
        %v432 = vrot.slane %v431, 2
        %v433 = vadd.f32 %v431, %v432
        %v434 = vrot.slane %v433, 1
        %v435 = vadd.f32 %v433, %v434
        %v437 = vsel %vm298, %v180, 0
        %v440 = vsel %vm298, %v181, 0
        %v443 = vsel %vm298, %v182, 0
        %v446 = vsel %vm298, %v183, 0
        %448 = vmatprep.subr.mxu0 0.0
        %449 = vmatpush1.msra.mxu0 0.0
        %450 = vmatprep.subr.mxu0 0.0
        %451 = vmatpush1.msra.mxu0 0.0
        %452 = vmatprep.subr.mxu0 0.0
        %453 = vmatpush1.msra.mxu0 0.0
        %454 = vmatprep.subr.mxu0 0.0
        %455 = vmatpush1.msra.mxu0 0.0
        %456 = vmatprep.subr.mxu0 0.0
        %457 = vmatpush1.msra.mxu0 0.0
        %458 = vmatprep.subr.mxu0 0.0
        %459 = vmatpush1.msra.mxu0 0.0
        %460 = vmatprep.subr.mxu0 0.0
        %461 = vmatpush1.msra.mxu0 0.0
        %462 = vmatprep.subr.mxu0 0.0
        %463 = vmatpush1.msra.mxu0 0.0
        %464 = vmatprep.subr.mxu0 0.0
        %465 = vmatpush1.msra.mxu0 0.0
        %466 = vmatprep.subr.mxu0 0.0
        %467 = vmatpush1.msra.mxu0 0.0
        %468 = vmatprep.subr.mxu0 0.0
        %469 = vmatpush1.msra.mxu0 0.0
        %470 = vmatprep.subr.mxu0 0.0
        %471 = vmatpush1.msra.mxu0 0.0
        %472 = vmatprep.subr.mxu0 0.0
        %473 = vmatpush1.msra.mxu0 0.0
        %474 = vmatprep.subr.mxu0 0.0
        %475 = vmatpush1.msra.mxu0 0.0
        %476 = vmatprep.subr.mxu0 %v277
        %477 = vmatpush1.msra.mxu0 %v276
        %478 = vmatprep.subr.mxu0 %v275
        %479 = vmatpush1.msra.mxu0 %v274
        %480 = vmatprep.subr.mxu0 0.0
        %481 = vmatpush2.msra.mxu0 0.0
        %482 = vmatprep.subr.mxu0 0.0
        %483 = vmatpush2.msra.mxu0 0.0
        %484 = vmatprep.subr.mxu0 0.0
        %485 = vmatpush2.msra.mxu0 0.0
        %486 = vmatprep.subr.mxu0 0.0
        %487 = vmatpush2.msra.mxu0 0.0
        %488 = vmatprep.subr.mxu0 0.0
        %489 = vmatpush2.msra.mxu0 0.0
        %490 = vmatprep.subr.mxu0 0.0
        %491 = vmatpush2.msra.mxu0 0.0
        %492 = vmatprep.subr.mxu0 0.0
        %493 = vmatpush2.msra.mxu0 0.0
        %494 = vmatprep.subr.mxu0 0.0
        %495 = vmatpush2.msra.mxu0 0.0
        %496 = vmatprep.subr.mxu0 0.0
        %497 = vmatpush2.msra.mxu0 0.0
        %498 = vmatprep.subr.mxu0 0.0
        %499 = vmatpush2.msra.mxu0 0.0
        %500 = vmatprep.subr.mxu0 0.0
        %501 = vmatpush2.msra.mxu0 0.0
        %502 = vmatprep.subr.mxu0 0.0
        %503 = vmatpush2.msra.mxu0 0.0
        %504 = vmatprep.subr.mxu0 0.0
        %505 = vmatpush2.msra.mxu0 0.0
        %506 = vmatprep.subr.mxu0 0.0
        %507 = vmatpush2.msra.mxu0 0.0
        %508 = vmatprep.subr.mxu0 0.0
        %509 = vmatpush2.msra.mxu0 0.0
        %510 = vmatprep.subr.mxu0 0.0
        %511 = vmatpush2.msra.mxu0 0.0
        %512 = vmatprep.mubr.f32.mxu0 0.0
        %513 = vmatmul.mubr.f32.gmra.mxu0 %v437
        %v514 = vpop.f32.mrf.mxu0
        %v515 = vadd.f32 0.0, %v514
        %v516 = vpop.f32.mrf.mxu0
        %v517 = vadd.f32 0.0, %v516
        %518 = vmatprep.mubr.f32.mxu0 0.0
        %519 = vmatmul.mubr.f32.gmra.mxu0 %v440
        %v520 = vpop.f32.mrf.mxu0
        %v521 = vadd.f32 0.0, %v520
        %v522 = vpop.f32.mrf.mxu0
        %v523 = vadd.f32 0.0, %v522
        %524 = vmatprep.mubr.f32.mxu0 0.0
        %525 = vmatmul.mubr.f32.gmra.mxu0 %v443
        %v526 = vpop.f32.mrf.mxu0
        %v527 = vadd.f32 0.0, %v526
        %v528 = vpop.f32.mrf.mxu0
        %v529 = vadd.f32 0.0, %v528
        %530 = vmatprep.mubr.f32.mxu0 0.0
        %531 = vmatmul.mubr.f32.gmra.mxu0 %v446
        %v532 = vpop.f32.mrf.mxu0
        %v533 = vadd.f32 0.0, %v532
        %v534 = vpop.f32.mrf.mxu0
        %v535 = vadd.f32 0.0, %v534
        %536 = vdwg.mxu0
        %v537 = vmul.f32 %v515, %v294
        %v538 = vmul.f32 %v517, %v295
        %v539 = vmul.f32 %v521, %v296
        %v540 = vmul.f32 %v523, %v297
        %v541 = vadd.f32 %v537, %v539
        %v542 = vrot.slane %v541, 4
        %v543 = vadd.f32 %v541, %v542
        %v544 = vrot.slane %v543, 2
        %v545 = vadd.f32 %v543, %v544
        %v546 = vrot.slane %v545, 1
        %v547 = vadd.f32 %v545, %v546
        %v548 = vadd.f32 %v538, %v540
        %v549 = vrot.slane %v548, 4
        %v550 = vadd.f32 %v548, %v549
        %v551 = vrot.slane %v550, 2
        %v552 = vadd.f32 %v550, %v551
        %v553 = vrot.slane %v552, 1
        %v554 = vadd.f32 %v552, %v553
        %v555 = vmul.f32 %v527, %v294
        %v556 = vmul.f32 %v529, %v295
        %v557 = vmul.f32 %v533, %v296
        %v558 = vmul.f32 %v535, %v297
        %v559 = vadd.f32 %v555, %v557
        %v560 = vrot.slane %v559, 4
        %v561 = vadd.f32 %v559, %v560
        %v562 = vrot.slane %v561, 2
        %v563 = vadd.f32 %v561, %v562
        %v564 = vrot.slane %v563, 1
        %v565 = vadd.f32 %v563, %v564
        %v566 = vadd.f32 %v556, %v558
        %v567 = vrot.slane %v566, 4
        %v568 = vadd.f32 %v566, %v567
        %v569 = vrot.slane %v568, 2
        %v570 = vadd.f32 %v568, %v569
        %v571 = vrot.slane %v570, 1
        %v572 = vadd.f32 %v570, %v571
        %v573 = vmul.f32 %v410, 0.5
        %v574 = vmul.f32 %v417, 0.5
        %v575 = vadd.f32 %v224, %v573
        %v576 = vadd.f32 %v225, %v574
        %v577 = vmul.f32 %v428, 0.5
        %v578 = vmul.f32 %v435, 0.5
        %v579 = vadd.f32 %v216, %v577
        %v580 = vadd.f32 %v217, %v578
        %v581 = vmul.f32 %v547, 0.5
        %v582 = vmul.f32 %v554, 0.5
        %v583 = vadd.f32 %v224, %v581
        %v584 = vadd.f32 %v225, %v582
        %v585 = vmul.f32 %v565, 0.5
        %v586 = vmul.f32 %v572, 0.5
        %v587 = vadd.f32 %v216, %v585
        %v588 = vadd.f32 %v217, %v586
        %v589 = vsub.f32 %v575, %v583
        %v590 = vsub.f32 %v576, %v584
        %v591 = vsub.f32 %v579, %v587
        %v592 = vsub.f32 %v580, %v588
        %v593 = vmul.f32 %v589, %v589
        %v594 = vmul.f32 %v590, %v590
        %v595 = vadd.f32 %v593, 0.0
        %v596 = vadd.f32 %v594, 0.0
        %v597 = vmul.f32 %v591, %v591
        %v598 = vmul.f32 %v592, %v592
        %v599 = vadd.f32 %v595, %v597
        %v600 = vadd.f32 %v596, %v598
        %v601 = vfloor.f32 %v575
        %v602 = vfloor.f32 %v576
        %v603 = vfloor.f32 %v579
        %v604 = vfloor.f32 %v580
        %v605 = vmax.f32 %v601, 0.0
        %v606 = vmax.f32 %v602, 0.0
        %v607 = vmin.f32 %v605, 15.0
        %v608 = vmin.f32 %v606, 15.0
        %v609 = vadd.f32 %v601, 1.0
        %v610 = vadd.f32 %v602, 1.0
        %v611 = vmax.f32 %v609, 0.0
        %v612 = vmax.f32 %v610, 0.0
        %v613 = vmin.f32 %v611, 15.0
        %v614 = vmin.f32 %v612, 15.0
        %v615 = vmax.f32 %v603, 0.0
        %v616 = vmax.f32 %v604, 0.0
        %v617 = vmin.f32 %v615, 15.0
        %v618 = vmin.f32 %v616, 15.0
        %v619 = vadd.f32 %v603, 1.0
        %v620 = vadd.f32 %v604, 1.0
        %v621 = vmax.f32 %v619, 0.0
        %v622 = vmax.f32 %v620, 0.0
        %v623 = vmin.f32 %v621, 15.0
        %v624 = vmin.f32 %v622, 15.0
        %v625 = vsub.f32 %v613, %v575
        %v626 = vsub.f32 %v614, %v576
        %v627 = vsub.f32 %v575, %v607
        %v628 = vsub.f32 %v576, %v608
        %v629 = vsub.f32 %v623, %v579
        %v630 = vsub.f32 %v624, %v580
        %v631 = vsub.f32 %v579, %v617
        %v632 = vsub.f32 %v580, %v618
        %vm633 = vcmp.eq.f32.partialorder %v187, %v607
        %vm634 = vcmp.eq.f32.partialorder %v187, %v608
        %vm635 = vcmp.eq.f32.partialorder %v188, %v607
        %vm636 = vcmp.eq.f32.partialorder %v188, %v608
        %v637 = vsel %vm633, %v625, 0.0
        %v638 = vsel %vm634, %v626, 0.0
        %v639 = vsel %vm635, %v625, 0.0
        %v640 = vsel %vm636, %v626, 0.0
        %vm641 = vcmp.eq.f32.partialorder %v187, %v613
        %vm642 = vcmp.eq.f32.partialorder %v187, %v614
        %vm643 = vcmp.eq.f32.partialorder %v188, %v613
        %vm644 = vcmp.eq.f32.partialorder %v188, %v614
        %v645 = vsel %vm641, %v627, 0.0
        %v646 = vsel %vm642, %v628, 0.0
        %v647 = vsel %vm643, %v627, 0.0
        %v648 = vsel %vm644, %v628, 0.0
        %v649 = vadd.f32 %v637, %v645
        %v650 = vadd.f32 %v638, %v646
        %v651 = vadd.f32 %v639, %v647
        %v652 = vadd.f32 %v640, %v648
        %vm653 = vcmp.eq.f32.partialorder %v187, %v617
        %vm654 = vcmp.eq.f32.partialorder %v187, %v618
        %vm655 = vcmp.eq.f32.partialorder %v188, %v617
        %vm656 = vcmp.eq.f32.partialorder %v188, %v618
        %v657 = vsel %vm653, %v629, 0.0
        %v658 = vsel %vm654, %v630, 0.0
        %v659 = vsel %vm655, %v629, 0.0
        %v660 = vsel %vm656, %v630, 0.0
        %vm661 = vcmp.eq.f32.partialorder %v187, %v623
        %vm662 = vcmp.eq.f32.partialorder %v187, %v624
        %vm663 = vcmp.eq.f32.partialorder %v188, %v623
        %vm664 = vcmp.eq.f32.partialorder %v188, %v624
        %v665 = vsel %vm661, %v631, 0.0
        %v666 = vsel %vm662, %v632, 0.0
        %v667 = vsel %vm663, %v631, 0.0
        %v668 = vsel %vm664, %v632, 0.0
        %v669 = vadd.f32 %v657, %v665
        %v670 = vadd.f32 %v658, %v666
        %v671 = vadd.f32 %v659, %v667
        %v672 = vadd.f32 %v660, %v668
        %673 = vmatprep.subr.mxu0 0.0
        %674 = vmatpush1.msra.mxu0 0.0
        %675 = vmatprep.subr.mxu0 0.0
        %676 = vmatpush1.msra.mxu0 0.0
        %677 = vmatprep.subr.mxu0 0.0
        %678 = vmatpush1.msra.mxu0 0.0
        %679 = vmatprep.subr.mxu0 0.0
        %680 = vmatpush1.msra.mxu0 0.0
        %681 = vmatprep.subr.mxu0 0.0
        %682 = vmatpush1.msra.mxu0 0.0
        %683 = vmatprep.subr.mxu0 0.0
        %684 = vmatpush1.msra.mxu0 0.0
        %685 = vmatprep.subr.mxu0 0.0
        %686 = vmatpush1.msra.mxu0 0.0
        %687 = vmatprep.subr.mxu0 0.0
        %688 = vmatpush1.msra.mxu0 0.0
        %689 = vmatprep.subr.mxu0 0.0
        %690 = vmatpush1.msra.mxu0 0.0
        %691 = vmatprep.subr.mxu0 0.0
        %692 = vmatpush1.msra.mxu0 0.0
        %693 = vmatprep.subr.mxu0 0.0
        %694 = vmatpush1.msra.mxu0 0.0
        %695 = vmatprep.subr.mxu0 0.0
        %696 = vmatpush1.msra.mxu0 0.0
        %697 = vmatprep.subr.mxu0 0.0
        %698 = vmatpush1.msra.mxu0 0.0
        %699 = vmatprep.subr.mxu0 0.0
        %700 = vmatpush1.msra.mxu0 0.0
        %701 = vmatprep.subr.mxu0 %v652
        %702 = vmatpush1.msra.mxu0 %v651
        %703 = vmatprep.subr.mxu0 %v650
        %704 = vmatpush1.msra.mxu0 %v649
        %705 = vmatprep.subr.mxu0 0.0
        %706 = vmatpush2.msra.mxu0 0.0
        %707 = vmatprep.subr.mxu0 0.0
        %708 = vmatpush2.msra.mxu0 0.0
        %709 = vmatprep.subr.mxu0 0.0
        %710 = vmatpush2.msra.mxu0 0.0
        %711 = vmatprep.subr.mxu0 0.0
        %712 = vmatpush2.msra.mxu0 0.0
        %713 = vmatprep.subr.mxu0 0.0
        %714 = vmatpush2.msra.mxu0 0.0
        %715 = vmatprep.subr.mxu0 0.0
        %716 = vmatpush2.msra.mxu0 0.0
        %717 = vmatprep.subr.mxu0 0.0
        %718 = vmatpush2.msra.mxu0 0.0
        %719 = vmatprep.subr.mxu0 0.0
        %720 = vmatpush2.msra.mxu0 0.0
        %721 = vmatprep.subr.mxu0 0.0
        %722 = vmatpush2.msra.mxu0 0.0
        %723 = vmatprep.subr.mxu0 0.0
        %724 = vmatpush2.msra.mxu0 0.0
        %725 = vmatprep.subr.mxu0 0.0
        %726 = vmatpush2.msra.mxu0 0.0
        %727 = vmatprep.subr.mxu0 0.0
        %728 = vmatpush2.msra.mxu0 0.0
        %729 = vmatprep.subr.mxu0 0.0
        %730 = vmatpush2.msra.mxu0 0.0
        %731 = vmatprep.subr.mxu0 0.0
        %732 = vmatpush2.msra.mxu0 0.0
        %733 = vmatprep.subr.mxu0 0.0
        %734 = vmatpush2.msra.mxu0 0.0
        %735 = vmatprep.subr.mxu0 0.0
        %736 = vmatpush2.msra.mxu0 0.0
        %737 = vmatprep.mubr.f32.mxu0 0.0
        %738 = vmatmul.mubr.f32.gmra.mxu0 %v300
        %v739 = vpop.f32.mrf.mxu0
        %v740 = vadd.f32 0.0, %v739
        %v741 = vpop.f32.mrf.mxu0
        %v742 = vadd.f32 0.0, %v741
        %743 = vmatprep.mubr.f32.mxu0 0.0
        %744 = vmatmul.mubr.f32.gmra.mxu0 %v303
        %v745 = vpop.f32.mrf.mxu0
        %v746 = vadd.f32 0.0, %v745
        %v747 = vpop.f32.mrf.mxu0
        %v748 = vadd.f32 0.0, %v747
        %749 = vmatprep.mubr.f32.mxu0 0.0
        %750 = vmatmul.mubr.f32.gmra.mxu0 %v306
        %v751 = vpop.f32.mrf.mxu0
        %v752 = vadd.f32 0.0, %v751
        %v753 = vpop.f32.mrf.mxu0
        %v754 = vadd.f32 0.0, %v753
        %755 = vmatprep.mubr.f32.mxu0 0.0
        %756 = vmatmul.mubr.f32.gmra.mxu0 %v309
        %v757 = vpop.f32.mrf.mxu0
        %v758 = vadd.f32 0.0, %v757
        %v759 = vpop.f32.mrf.mxu0
        %v760 = vadd.f32 0.0, %v759
        %761 = vdwg.mxu0
        %v762 = vmul.f32 %v740, %v669
        %v763 = vmul.f32 %v742, %v670
        %v764 = vmul.f32 %v746, %v671
        %v765 = vmul.f32 %v748, %v672
        %v766 = vadd.f32 %v762, %v764
        %v767 = vrot.slane %v766, 4
        %v768 = vadd.f32 %v766, %v767
        %v769 = vrot.slane %v768, 2
        %v770 = vadd.f32 %v768, %v769
        %v771 = vrot.slane %v770, 1
        %v772 = vadd.f32 %v770, %v771
        %v773 = vadd.f32 %v763, %v765
        %v774 = vrot.slane %v773, 4
        %v775 = vadd.f32 %v773, %v774
        %v776 = vrot.slane %v775, 2
        %v777 = vadd.f32 %v775, %v776
        %v778 = vrot.slane %v777, 1
        %v779 = vadd.f32 %v777, %v778
        %v780 = vmul.f32 %v752, %v669
        %v781 = vmul.f32 %v754, %v670
        %v782 = vmul.f32 %v758, %v671
        %v783 = vmul.f32 %v760, %v672
        %v784 = vadd.f32 %v780, %v782
        %v785 = vrot.slane %v784, 4
        %v786 = vadd.f32 %v784, %v785
        %v787 = vrot.slane %v786, 2
        %v788 = vadd.f32 %v786, %v787
        %v789 = vrot.slane %v788, 1
        %v790 = vadd.f32 %v788, %v789
        %v791 = vadd.f32 %v781, %v783
        %v792 = vrot.slane %v791, 4
        %v793 = vadd.f32 %v791, %v792
        %v794 = vrot.slane %v793, 2
        %v795 = vadd.f32 %v793, %v794
        %v796 = vrot.slane %v795, 1
        %v797 = vadd.f32 %v795, %v796
        %v798 = vfloor.f32 %v583
        %v799 = vfloor.f32 %v584
        %v800 = vfloor.f32 %v587
        %v801 = vfloor.f32 %v588
        %v802 = vmax.f32 %v798, 0.0
        %v803 = vmax.f32 %v799, 0.0
        %v804 = vmin.f32 %v802, 15.0
        %v805 = vmin.f32 %v803, 15.0
        %v806 = vadd.f32 %v798, 1.0
        %v807 = vadd.f32 %v799, 1.0
        %v808 = vmax.f32 %v806, 0.0
        %v809 = vmax.f32 %v807, 0.0
        %v810 = vmin.f32 %v808, 15.0
        %v811 = vmin.f32 %v809, 15.0
        %v812 = vmax.f32 %v800, 0.0
        %v813 = vmax.f32 %v801, 0.0
        %v814 = vmin.f32 %v812, 15.0
        %v815 = vmin.f32 %v813, 15.0
        %v816 = vadd.f32 %v800, 1.0
        %v817 = vadd.f32 %v801, 1.0
        %v818 = vmax.f32 %v816, 0.0
        %v819 = vmax.f32 %v817, 0.0
        %v820 = vmin.f32 %v818, 15.0
        %v821 = vmin.f32 %v819, 15.0
        %v822 = vsub.f32 %v810, %v583
        %v823 = vsub.f32 %v811, %v584
        %v824 = vsub.f32 %v583, %v804
        %v825 = vsub.f32 %v584, %v805
        %v826 = vsub.f32 %v820, %v587
        %v827 = vsub.f32 %v821, %v588
        %v828 = vsub.f32 %v587, %v814
        %v829 = vsub.f32 %v588, %v815
        %vm830 = vcmp.eq.f32.partialorder %v187, %v804
        %vm831 = vcmp.eq.f32.partialorder %v187, %v805
        %vm832 = vcmp.eq.f32.partialorder %v188, %v804
        %vm833 = vcmp.eq.f32.partialorder %v188, %v805
        %v834 = vsel %vm830, %v822, 0.0
        %v835 = vsel %vm831, %v823, 0.0
        %v836 = vsel %vm832, %v822, 0.0
        %v837 = vsel %vm833, %v823, 0.0
        %vm838 = vcmp.eq.f32.partialorder %v187, %v810
        %vm839 = vcmp.eq.f32.partialorder %v187, %v811
        %vm840 = vcmp.eq.f32.partialorder %v188, %v810
        %vm841 = vcmp.eq.f32.partialorder %v188, %v811
        %v842 = vsel %vm838, %v824, 0.0
        %v843 = vsel %vm839, %v825, 0.0
        %v844 = vsel %vm840, %v824, 0.0
        %v845 = vsel %vm841, %v825, 0.0
        %v846 = vadd.f32 %v834, %v842
        %v847 = vadd.f32 %v835, %v843
        %v848 = vadd.f32 %v836, %v844
        %v849 = vadd.f32 %v837, %v845
        %vm850 = vcmp.eq.f32.partialorder %v187, %v814
        %vm851 = vcmp.eq.f32.partialorder %v187, %v815
        %vm852 = vcmp.eq.f32.partialorder %v188, %v814
        %vm853 = vcmp.eq.f32.partialorder %v188, %v815
        %v854 = vsel %vm850, %v826, 0.0
        %v855 = vsel %vm851, %v827, 0.0
        %v856 = vsel %vm852, %v826, 0.0
        %v857 = vsel %vm853, %v827, 0.0
        %vm858 = vcmp.eq.f32.partialorder %v187, %v820
        %vm859 = vcmp.eq.f32.partialorder %v187, %v821
        %vm860 = vcmp.eq.f32.partialorder %v188, %v820
        %vm861 = vcmp.eq.f32.partialorder %v188, %v821
        %v862 = vsel %vm858, %v828, 0.0
        %v863 = vsel %vm859, %v829, 0.0
        %v864 = vsel %vm860, %v828, 0.0
        %v865 = vsel %vm861, %v829, 0.0
        %v866 = vadd.f32 %v854, %v862
        %v867 = vadd.f32 %v855, %v863
        %v868 = vadd.f32 %v856, %v864
        %v869 = vadd.f32 %v857, %v865
        %870 = vmatprep.subr.mxu0 0.0
        %871 = vmatpush1.msra.mxu0 0.0
        %872 = vmatprep.subr.mxu0 0.0
        %873 = vmatpush1.msra.mxu0 0.0
        %874 = vmatprep.subr.mxu0 0.0
        %875 = vmatpush1.msra.mxu0 0.0
        %876 = vmatprep.subr.mxu0 0.0
        %877 = vmatpush1.msra.mxu0 0.0
        %878 = vmatprep.subr.mxu0 0.0
        %879 = vmatpush1.msra.mxu0 0.0
        %880 = vmatprep.subr.mxu0 0.0
        %881 = vmatpush1.msra.mxu0 0.0
        %882 = vmatprep.subr.mxu0 0.0
        %883 = vmatpush1.msra.mxu0 0.0
        %884 = vmatprep.subr.mxu0 0.0
        %885 = vmatpush1.msra.mxu0 0.0
        %886 = vmatprep.subr.mxu0 0.0
        %887 = vmatpush1.msra.mxu0 0.0
        %888 = vmatprep.subr.mxu0 0.0
        %889 = vmatpush1.msra.mxu0 0.0
        %890 = vmatprep.subr.mxu0 0.0
        %891 = vmatpush1.msra.mxu0 0.0
        %892 = vmatprep.subr.mxu0 0.0
        %893 = vmatpush1.msra.mxu0 0.0
        %894 = vmatprep.subr.mxu0 0.0
        %895 = vmatpush1.msra.mxu0 0.0
        %896 = vmatprep.subr.mxu0 0.0
        %897 = vmatpush1.msra.mxu0 0.0
        %898 = vmatprep.subr.mxu0 %v849
        %899 = vmatpush1.msra.mxu0 %v848
        %900 = vmatprep.subr.mxu0 %v847
        %901 = vmatpush1.msra.mxu0 %v846
        %902 = vmatprep.subr.mxu0 0.0
        %903 = vmatpush2.msra.mxu0 0.0
        %904 = vmatprep.subr.mxu0 0.0
        %905 = vmatpush2.msra.mxu0 0.0
        %906 = vmatprep.subr.mxu0 0.0
        %907 = vmatpush2.msra.mxu0 0.0
        %908 = vmatprep.subr.mxu0 0.0
        %909 = vmatpush2.msra.mxu0 0.0
        %910 = vmatprep.subr.mxu0 0.0
        %911 = vmatpush2.msra.mxu0 0.0
        %912 = vmatprep.subr.mxu0 0.0
        %913 = vmatpush2.msra.mxu0 0.0
        %914 = vmatprep.subr.mxu0 0.0
        %915 = vmatpush2.msra.mxu0 0.0
        %916 = vmatprep.subr.mxu0 0.0
        %917 = vmatpush2.msra.mxu0 0.0
        %918 = vmatprep.subr.mxu0 0.0
        %919 = vmatpush2.msra.mxu0 0.0
        %920 = vmatprep.subr.mxu0 0.0
        %921 = vmatpush2.msra.mxu0 0.0
        %922 = vmatprep.subr.mxu0 0.0
        %923 = vmatpush2.msra.mxu0 0.0
        %924 = vmatprep.subr.mxu0 0.0
        %925 = vmatpush2.msra.mxu0 0.0
        %926 = vmatprep.subr.mxu0 0.0
        %927 = vmatpush2.msra.mxu0 0.0
        %928 = vmatprep.subr.mxu0 0.0
        %929 = vmatpush2.msra.mxu0 0.0
        %930 = vmatprep.subr.mxu0 0.0
        %931 = vmatpush2.msra.mxu0 0.0
        %932 = vmatprep.subr.mxu0 0.0
        %933 = vmatpush2.msra.mxu0 0.0
        %934 = vmatprep.mubr.f32.mxu0 0.0
        %935 = vmatmul.mubr.f32.gmra.mxu0 %v437
        %v936 = vpop.f32.mrf.mxu0
        %v937 = vadd.f32 0.0, %v936
        %v938 = vpop.f32.mrf.mxu0
        %v939 = vadd.f32 0.0, %v938
        %940 = vmatprep.mubr.f32.mxu0 0.0
        %941 = vmatmul.mubr.f32.gmra.mxu0 %v440
        %v942 = vpop.f32.mrf.mxu0
        %v943 = vadd.f32 0.0, %v942
        %v944 = vpop.f32.mrf.mxu0
        %v945 = vadd.f32 0.0, %v944
        %946 = vmatprep.mubr.f32.mxu0 0.0
        %947 = vmatmul.mubr.f32.gmra.mxu0 %v443
        %v948 = vpop.f32.mrf.mxu0
        %v949 = vadd.f32 0.0, %v948
        %v950 = vpop.f32.mrf.mxu0
        %v951 = vadd.f32 0.0, %v950
        %952 = vmatprep.mubr.f32.mxu0 0.0
        %953 = vmatmul.mubr.f32.gmra.mxu0 %v446
        %v954 = vpop.f32.mrf.mxu0
        %v955 = vadd.f32 0.0, %v954
        %v956 = vpop.f32.mrf.mxu0
        %v957 = vadd.f32 0.0, %v956
        %958 = vdwg.mxu0
        %v959 = vmul.f32 %v937, %v866
        %v960 = vmul.f32 %v939, %v867
        %v961 = vmul.f32 %v943, %v868
        %v962 = vmul.f32 %v945, %v869
        %v963 = vadd.f32 %v959, %v961
        %v964 = vrot.slane %v963, 4
        %v965 = vadd.f32 %v963, %v964
        %v966 = vrot.slane %v965, 2
        %v967 = vadd.f32 %v965, %v966
        %v968 = vrot.slane %v967, 1
        %v969 = vadd.f32 %v967, %v968
        %v970 = vadd.f32 %v960, %v962
        %v971 = vrot.slane %v970, 4
        %v972 = vadd.f32 %v970, %v971
        %v973 = vrot.slane %v972, 2
        %v974 = vadd.f32 %v972, %v973
        %v975 = vrot.slane %v974, 1
        %v976 = vadd.f32 %v974, %v975
        %v977 = vmul.f32 %v949, %v866
        %v978 = vmul.f32 %v951, %v867
        %v979 = vmul.f32 %v955, %v868
        %v980 = vmul.f32 %v957, %v869
        %v981 = vadd.f32 %v977, %v979
        %v982 = vrot.slane %v981, 4
        %v983 = vadd.f32 %v981, %v982
        %v984 = vrot.slane %v983, 2
        %v985 = vadd.f32 %v983, %v984
        %v986 = vrot.slane %v985, 1
        %v987 = vadd.f32 %v985, %v986
        %v988 = vadd.f32 %v978, %v980
        %v989 = vrot.slane %v988, 4
        %v990 = vadd.f32 %v988, %v989
        %v991 = vrot.slane %v990, 2
        %v992 = vadd.f32 %v990, %v991
        %v993 = vrot.slane %v992, 1
        %v994 = vadd.f32 %v992, %v993
        %v995 = vmul.f32 %v772, 0.5
        %v996 = vmul.f32 %v779, 0.5
        %v997 = vadd.f32 %v575, %v995
        %v998 = vadd.f32 %v576, %v996
        %v999 = vmul.f32 %v790, 0.5
        %v1000 = vmul.f32 %v797, 0.5
        %v1001 = vadd.f32 %v579, %v999
        %v1002 = vadd.f32 %v580, %v1000
        %v1003 = vmul.f32 %v969, 0.5
        %v1004 = vmul.f32 %v976, 0.5
        %v1005 = vadd.f32 %v583, %v1003
        %v1006 = vadd.f32 %v584, %v1004
        %v1007 = vmul.f32 %v987, 0.5
        %v1008 = vmul.f32 %v994, 0.5
        %v1009 = vadd.f32 %v587, %v1007
        %v1010 = vadd.f32 %v588, %v1008
        %v1011 = vsub.f32 %v997, %v1005
        %v1012 = vsub.f32 %v998, %v1006
        %v1013 = vsub.f32 %v1001, %v1009
        %v1014 = vsub.f32 %v1002, %v1010
        %v1015 = vmul.f32 %v1011, %v1011
        %v1016 = vmul.f32 %v1012, %v1012
        %v1017 = vadd.f32 %v599, %v1015
        %v1018 = vadd.f32 %v600, %v1016
        %v1019 = vmul.f32 %v1013, %v1013
        %v1020 = vmul.f32 %v1014, %v1014
        %v1021 = vadd.f32 %v1017, %v1019
        %v1022 = vadd.f32 %v1018, %v1020
        %v1023 = vfloor.f32 %v997
        %v1024 = vfloor.f32 %v998
        %v1025 = vfloor.f32 %v1001
        %v1026 = vfloor.f32 %v1002
        %v1027 = vmax.f32 %v1023, 0.0
        %v1028 = vmax.f32 %v1024, 0.0
        %v1029 = vmin.f32 %v1027, 15.0
        %v1030 = vmin.f32 %v1028, 15.0
        %v1031 = vadd.f32 %v1023, 1.0
        %v1032 = vadd.f32 %v1024, 1.0
        %v1033 = vmax.f32 %v1031, 0.0
        %v1034 = vmax.f32 %v1032, 0.0
        %v1035 = vmin.f32 %v1033, 15.0
        %v1036 = vmin.f32 %v1034, 15.0
        %v1037 = vmax.f32 %v1025, 0.0
        %v1038 = vmax.f32 %v1026, 0.0
        %v1039 = vmin.f32 %v1037, 15.0
        %v1040 = vmin.f32 %v1038, 15.0
        %v1041 = vadd.f32 %v1025, 1.0
        %v1042 = vadd.f32 %v1026, 1.0
        %v1043 = vmax.f32 %v1041, 0.0
        %v1044 = vmax.f32 %v1042, 0.0
        %v1045 = vmin.f32 %v1043, 15.0
        %v1046 = vmin.f32 %v1044, 15.0
        %v1047 = vsub.f32 %v1035, %v997
        %v1048 = vsub.f32 %v1036, %v998
        %v1049 = vsub.f32 %v997, %v1029
        %v1050 = vsub.f32 %v998, %v1030
        %v1051 = vsub.f32 %v1045, %v1001
        %v1052 = vsub.f32 %v1046, %v1002
        %v1053 = vsub.f32 %v1001, %v1039
        %v1054 = vsub.f32 %v1002, %v1040
        %vm1055 = vcmp.eq.f32.partialorder %v187, %v1029
        %vm1056 = vcmp.eq.f32.partialorder %v187, %v1030
        %vm1057 = vcmp.eq.f32.partialorder %v188, %v1029
        %vm1058 = vcmp.eq.f32.partialorder %v188, %v1030
        %v1059 = vsel %vm1055, %v1047, 0.0
        %v1060 = vsel %vm1056, %v1048, 0.0
        %v1061 = vsel %vm1057, %v1047, 0.0
        %v1062 = vsel %vm1058, %v1048, 0.0
        %vm1063 = vcmp.eq.f32.partialorder %v187, %v1035
        %vm1064 = vcmp.eq.f32.partialorder %v187, %v1036
        %vm1065 = vcmp.eq.f32.partialorder %v188, %v1035
        %vm1066 = vcmp.eq.f32.partialorder %v188, %v1036
        %v1067 = vsel %vm1063, %v1049, 0.0
        %v1068 = vsel %vm1064, %v1050, 0.0
        %v1069 = vsel %vm1065, %v1049, 0.0
        %v1070 = vsel %vm1066, %v1050, 0.0
        %v1071 = vadd.f32 %v1059, %v1067
        %v1072 = vadd.f32 %v1060, %v1068
        %v1073 = vadd.f32 %v1061, %v1069
        %v1074 = vadd.f32 %v1062, %v1070
        %vm1075 = vcmp.eq.f32.partialorder %v187, %v1039
        %vm1076 = vcmp.eq.f32.partialorder %v187, %v1040
        %vm1077 = vcmp.eq.f32.partialorder %v188, %v1039
        %vm1078 = vcmp.eq.f32.partialorder %v188, %v1040
        %v1079 = vsel %vm1075, %v1051, 0.0
        %v1080 = vsel %vm1076, %v1052, 0.0
        %v1081 = vsel %vm1077, %v1051, 0.0
        %v1082 = vsel %vm1078, %v1052, 0.0
        %vm1083 = vcmp.eq.f32.partialorder %v187, %v1045
        %vm1084 = vcmp.eq.f32.partialorder %v187, %v1046
        %vm1085 = vcmp.eq.f32.partialorder %v188, %v1045
        %vm1086 = vcmp.eq.f32.partialorder %v188, %v1046
        %v1087 = vsel %vm1083, %v1053, 0.0
        %v1088 = vsel %vm1084, %v1054, 0.0
        %v1089 = vsel %vm1085, %v1053, 0.0
        %v1090 = vsel %vm1086, %v1054, 0.0
        %v1091 = vadd.f32 %v1079, %v1087
        %v1092 = vadd.f32 %v1080, %v1088
        %v1093 = vadd.f32 %v1081, %v1089
        %v1094 = vadd.f32 %v1082, %v1090
        %1095 = vmatprep.subr.mxu0 0.0
        %1096 = vmatpush1.msra.mxu0 0.0
        %1097 = vmatprep.subr.mxu0 0.0
        %1098 = vmatpush1.msra.mxu0 0.0
        %1099 = vmatprep.subr.mxu0 0.0
        %1100 = vmatpush1.msra.mxu0 0.0
        %1101 = vmatprep.subr.mxu0 0.0
        %1102 = vmatpush1.msra.mxu0 0.0
        %1103 = vmatprep.subr.mxu0 0.0
        %1104 = vmatpush1.msra.mxu0 0.0
        %1105 = vmatprep.subr.mxu0 0.0
        %1106 = vmatpush1.msra.mxu0 0.0
        %1107 = vmatprep.subr.mxu0 0.0
        %1108 = vmatpush1.msra.mxu0 0.0
        %1109 = vmatprep.subr.mxu0 0.0
        %1110 = vmatpush1.msra.mxu0 0.0
        %1111 = vmatprep.subr.mxu0 0.0
        %1112 = vmatpush1.msra.mxu0 0.0
        %1113 = vmatprep.subr.mxu0 0.0
        %1114 = vmatpush1.msra.mxu0 0.0
        %1115 = vmatprep.subr.mxu0 0.0
        %1116 = vmatpush1.msra.mxu0 0.0
        %1117 = vmatprep.subr.mxu0 0.0
        %1118 = vmatpush1.msra.mxu0 0.0
        %1119 = vmatprep.subr.mxu0 0.0
        %1120 = vmatpush1.msra.mxu0 0.0
        %1121 = vmatprep.subr.mxu0 0.0
        %1122 = vmatpush1.msra.mxu0 0.0
        %1123 = vmatprep.subr.mxu0 %v1074
        %1124 = vmatpush1.msra.mxu0 %v1073
        %1125 = vmatprep.subr.mxu0 %v1072
        %1126 = vmatpush1.msra.mxu0 %v1071
        %1127 = vmatprep.subr.mxu0 0.0
        %1128 = vmatpush2.msra.mxu0 0.0
        %1129 = vmatprep.subr.mxu0 0.0
        %1130 = vmatpush2.msra.mxu0 0.0
        %1131 = vmatprep.subr.mxu0 0.0
        %1132 = vmatpush2.msra.mxu0 0.0
        %1133 = vmatprep.subr.mxu0 0.0
        %1134 = vmatpush2.msra.mxu0 0.0
        %1135 = vmatprep.subr.mxu0 0.0
        %1136 = vmatpush2.msra.mxu0 0.0
        %1137 = vmatprep.subr.mxu0 0.0
        %1138 = vmatpush2.msra.mxu0 0.0
        %1139 = vmatprep.subr.mxu0 0.0
        %1140 = vmatpush2.msra.mxu0 0.0
        %1141 = vmatprep.subr.mxu0 0.0
        %1142 = vmatpush2.msra.mxu0 0.0
        %1143 = vmatprep.subr.mxu0 0.0
        %1144 = vmatpush2.msra.mxu0 0.0
        %1145 = vmatprep.subr.mxu0 0.0
        %1146 = vmatpush2.msra.mxu0 0.0
        %1147 = vmatprep.subr.mxu0 0.0
        %1148 = vmatpush2.msra.mxu0 0.0
        %1149 = vmatprep.subr.mxu0 0.0
        %1150 = vmatpush2.msra.mxu0 0.0
        %1151 = vmatprep.subr.mxu0 0.0
        %1152 = vmatpush2.msra.mxu0 0.0
        %1153 = vmatprep.subr.mxu0 0.0
        %1154 = vmatpush2.msra.mxu0 0.0
        %1155 = vmatprep.subr.mxu0 0.0
        %1156 = vmatpush2.msra.mxu0 0.0
        %1157 = vmatprep.subr.mxu0 0.0
        %1158 = vmatpush2.msra.mxu0 0.0
        %1159 = vmatprep.mubr.f32.mxu0 0.0
        %1160 = vmatmul.mubr.f32.gmra.mxu0 %v300
        %v1161 = vpop.f32.mrf.mxu0
        %v1162 = vadd.f32 0.0, %v1161
        %v1163 = vpop.f32.mrf.mxu0
        %v1164 = vadd.f32 0.0, %v1163
        %1165 = vmatprep.mubr.f32.mxu0 0.0
        %1166 = vmatmul.mubr.f32.gmra.mxu0 %v303
        %v1167 = vpop.f32.mrf.mxu0
        %v1168 = vadd.f32 0.0, %v1167
        %v1169 = vpop.f32.mrf.mxu0
        %v1170 = vadd.f32 0.0, %v1169
        %1171 = vmatprep.mubr.f32.mxu0 0.0
        %1172 = vmatmul.mubr.f32.gmra.mxu0 %v306
        %v1173 = vpop.f32.mrf.mxu0
        %v1174 = vadd.f32 0.0, %v1173
        %v1175 = vpop.f32.mrf.mxu0
        %v1176 = vadd.f32 0.0, %v1175
        %1177 = vmatprep.mubr.f32.mxu0 0.0
        %1178 = vmatmul.mubr.f32.gmra.mxu0 %v309
        %v1179 = vpop.f32.mrf.mxu0
        %v1180 = vadd.f32 0.0, %v1179
        %v1181 = vpop.f32.mrf.mxu0
        %v1182 = vadd.f32 0.0, %v1181
        %1183 = vdwg.mxu0
        %v1184 = vmul.f32 %v1162, %v1091
        %v1185 = vmul.f32 %v1164, %v1092
        %v1186 = vmul.f32 %v1168, %v1093
        %v1187 = vmul.f32 %v1170, %v1094
        %v1188 = vadd.f32 %v1184, %v1186
        %v1189 = vrot.slane %v1188, 4
        %v1190 = vadd.f32 %v1188, %v1189
        %v1191 = vrot.slane %v1190, 2
        %v1192 = vadd.f32 %v1190, %v1191
        %v1193 = vrot.slane %v1192, 1
        %v1194 = vadd.f32 %v1192, %v1193
        %v1195 = vadd.f32 %v1185, %v1187
        %v1196 = vrot.slane %v1195, 4
        %v1197 = vadd.f32 %v1195, %v1196
        %v1198 = vrot.slane %v1197, 2
        %v1199 = vadd.f32 %v1197, %v1198
        %v1200 = vrot.slane %v1199, 1
        %v1201 = vadd.f32 %v1199, %v1200
        %v1202 = vmul.f32 %v1174, %v1091
        %v1203 = vmul.f32 %v1176, %v1092
        %v1204 = vmul.f32 %v1180, %v1093
        %v1205 = vmul.f32 %v1182, %v1094
        %v1206 = vadd.f32 %v1202, %v1204
        %v1207 = vrot.slane %v1206, 4
        %v1208 = vadd.f32 %v1206, %v1207
        %v1209 = vrot.slane %v1208, 2
        %v1210 = vadd.f32 %v1208, %v1209
        %v1211 = vrot.slane %v1210, 1
        %v1212 = vadd.f32 %v1210, %v1211
        %v1213 = vadd.f32 %v1203, %v1205
        %v1214 = vrot.slane %v1213, 4
        %v1215 = vadd.f32 %v1213, %v1214
        %v1216 = vrot.slane %v1215, 2
        %v1217 = vadd.f32 %v1215, %v1216
        %v1218 = vrot.slane %v1217, 1
        %v1219 = vadd.f32 %v1217, %v1218
        %v1220 = vfloor.f32 %v1005
        %v1221 = vfloor.f32 %v1006
        %v1222 = vfloor.f32 %v1009
        %v1223 = vfloor.f32 %v1010
        %v1224 = vmax.f32 %v1220, 0.0
        %v1225 = vmax.f32 %v1221, 0.0
        %v1226 = vmin.f32 %v1224, 15.0
        %v1227 = vmin.f32 %v1225, 15.0
        %v1228 = vadd.f32 %v1220, 1.0
        %v1229 = vadd.f32 %v1221, 1.0
        %v1230 = vmax.f32 %v1228, 0.0
        %v1231 = vmax.f32 %v1229, 0.0
        %v1232 = vmin.f32 %v1230, 15.0
        %v1233 = vmin.f32 %v1231, 15.0
        %v1234 = vmax.f32 %v1222, 0.0
        %v1235 = vmax.f32 %v1223, 0.0
        %v1236 = vmin.f32 %v1234, 15.0
        %v1237 = vmin.f32 %v1235, 15.0
        %v1238 = vadd.f32 %v1222, 1.0
        %v1239 = vadd.f32 %v1223, 1.0
        %v1240 = vmax.f32 %v1238, 0.0
        %v1241 = vmax.f32 %v1239, 0.0
        %v1242 = vmin.f32 %v1240, 15.0
        %v1243 = vmin.f32 %v1241, 15.0
        %v1244 = vsub.f32 %v1232, %v1005
        %v1245 = vsub.f32 %v1233, %v1006
        %v1246 = vsub.f32 %v1005, %v1226
        %v1247 = vsub.f32 %v1006, %v1227
        %v1248 = vsub.f32 %v1242, %v1009
        %v1249 = vsub.f32 %v1243, %v1010
        %v1250 = vsub.f32 %v1009, %v1236
        %v1251 = vsub.f32 %v1010, %v1237
        %vm1252 = vcmp.eq.f32.partialorder %v187, %v1226
        %vm1253 = vcmp.eq.f32.partialorder %v187, %v1227
        %vm1254 = vcmp.eq.f32.partialorder %v188, %v1226
        %vm1255 = vcmp.eq.f32.partialorder %v188, %v1227
        %v1256 = vsel %vm1252, %v1244, 0.0
        %v1257 = vsel %vm1253, %v1245, 0.0
        %v1258 = vsel %vm1254, %v1244, 0.0
        %v1259 = vsel %vm1255, %v1245, 0.0
        %vm1260 = vcmp.eq.f32.partialorder %v187, %v1232
        %vm1261 = vcmp.eq.f32.partialorder %v187, %v1233
        %vm1262 = vcmp.eq.f32.partialorder %v188, %v1232
        %vm1263 = vcmp.eq.f32.partialorder %v188, %v1233
        %v1264 = vsel %vm1260, %v1246, 0.0
        %v1265 = vsel %vm1261, %v1247, 0.0
        %v1266 = vsel %vm1262, %v1246, 0.0
        %v1267 = vsel %vm1263, %v1247, 0.0
        %v1268 = vadd.f32 %v1256, %v1264
        %v1269 = vadd.f32 %v1257, %v1265
        %v1270 = vadd.f32 %v1258, %v1266
        %v1271 = vadd.f32 %v1259, %v1267
        %vm1272 = vcmp.eq.f32.partialorder %v187, %v1236
        %vm1273 = vcmp.eq.f32.partialorder %v187, %v1237
        %vm1274 = vcmp.eq.f32.partialorder %v188, %v1236
        %vm1275 = vcmp.eq.f32.partialorder %v188, %v1237
        %v1276 = vsel %vm1272, %v1248, 0.0
        %v1277 = vsel %vm1273, %v1249, 0.0
        %v1278 = vsel %vm1274, %v1248, 0.0
        %v1279 = vsel %vm1275, %v1249, 0.0
        %vm1280 = vcmp.eq.f32.partialorder %v187, %v1242
        %vm1281 = vcmp.eq.f32.partialorder %v187, %v1243
        %vm1282 = vcmp.eq.f32.partialorder %v188, %v1242
        %vm1283 = vcmp.eq.f32.partialorder %v188, %v1243
        %v1284 = vsel %vm1280, %v1250, 0.0
        %v1285 = vsel %vm1281, %v1251, 0.0
        %v1286 = vsel %vm1282, %v1250, 0.0
        %v1287 = vsel %vm1283, %v1251, 0.0
        %v1288 = vadd.f32 %v1276, %v1284
        %v1289 = vadd.f32 %v1277, %v1285
        %v1290 = vadd.f32 %v1278, %v1286
        %v1291 = vadd.f32 %v1279, %v1287
        %1292 = vmatprep.subr.mxu0 0.0
        %1293 = vmatpush1.msra.mxu0 0.0
        %1294 = vmatprep.subr.mxu0 0.0
        %1295 = vmatpush1.msra.mxu0 0.0
        %1296 = vmatprep.subr.mxu0 0.0
        %1297 = vmatpush1.msra.mxu0 0.0
        %1298 = vmatprep.subr.mxu0 0.0
        %1299 = vmatpush1.msra.mxu0 0.0
        %1300 = vmatprep.subr.mxu0 0.0
        %1301 = vmatpush1.msra.mxu0 0.0
        %1302 = vmatprep.subr.mxu0 0.0
        %1303 = vmatpush1.msra.mxu0 0.0
        %1304 = vmatprep.subr.mxu0 0.0
        %1305 = vmatpush1.msra.mxu0 0.0
        %1306 = vmatprep.subr.mxu0 0.0
        %1307 = vmatpush1.msra.mxu0 0.0
        %1308 = vmatprep.subr.mxu0 0.0
        %1309 = vmatpush1.msra.mxu0 0.0
        %1310 = vmatprep.subr.mxu0 0.0
        %1311 = vmatpush1.msra.mxu0 0.0
        %1312 = vmatprep.subr.mxu0 0.0
        %1313 = vmatpush1.msra.mxu0 0.0
        %1314 = vmatprep.subr.mxu0 0.0
        %1315 = vmatpush1.msra.mxu0 0.0
        %1316 = vmatprep.subr.mxu0 0.0
        %1317 = vmatpush1.msra.mxu0 0.0
        %1318 = vmatprep.subr.mxu0 0.0
        %1319 = vmatpush1.msra.mxu0 0.0
        %1320 = vmatprep.subr.mxu0 %v1271
        %1321 = vmatpush1.msra.mxu0 %v1270
        %1322 = vmatprep.subr.mxu0 %v1269
        %1323 = vmatpush1.msra.mxu0 %v1268
        %1324 = vmatprep.subr.mxu0 0.0
        %1325 = vmatpush2.msra.mxu0 0.0
        %1326 = vmatprep.subr.mxu0 0.0
        %1327 = vmatpush2.msra.mxu0 0.0
        %1328 = vmatprep.subr.mxu0 0.0
        %1329 = vmatpush2.msra.mxu0 0.0
        %1330 = vmatprep.subr.mxu0 0.0
        %1331 = vmatpush2.msra.mxu0 0.0
        %1332 = vmatprep.subr.mxu0 0.0
        %1333 = vmatpush2.msra.mxu0 0.0
        %1334 = vmatprep.subr.mxu0 0.0
        %1335 = vmatpush2.msra.mxu0 0.0
        %1336 = vmatprep.subr.mxu0 0.0
        %1337 = vmatpush2.msra.mxu0 0.0
        %1338 = vmatprep.subr.mxu0 0.0
        %1339 = vmatpush2.msra.mxu0 0.0
        %1340 = vmatprep.subr.mxu0 0.0
        %1341 = vmatpush2.msra.mxu0 0.0
        %1342 = vmatprep.subr.mxu0 0.0
        %1343 = vmatpush2.msra.mxu0 0.0
        %1344 = vmatprep.subr.mxu0 0.0
        %1345 = vmatpush2.msra.mxu0 0.0
        %1346 = vmatprep.subr.mxu0 0.0
        %1347 = vmatpush2.msra.mxu0 0.0
        %1348 = vmatprep.subr.mxu0 0.0
        %1349 = vmatpush2.msra.mxu0 0.0
        %1350 = vmatprep.subr.mxu0 0.0
        %1351 = vmatpush2.msra.mxu0 0.0
        %1352 = vmatprep.subr.mxu0 0.0
        %1353 = vmatpush2.msra.mxu0 0.0
        %1354 = vmatprep.subr.mxu0 0.0
        %1355 = vmatpush2.msra.mxu0 0.0
        %1356 = vmatprep.mubr.f32.mxu0 0.0
        %1357 = vmatmul.mubr.f32.gmra.mxu0 %v437
        %v1358 = vpop.f32.mrf.mxu0
        %v1359 = vadd.f32 0.0, %v1358
        %v1360 = vpop.f32.mrf.mxu0
        %v1361 = vadd.f32 0.0, %v1360
        %1362 = vmatprep.mubr.f32.mxu0 0.0
        %1363 = vmatmul.mubr.f32.gmra.mxu0 %v440
        %v1364 = vpop.f32.mrf.mxu0
        %v1365 = vadd.f32 0.0, %v1364
        %v1366 = vpop.f32.mrf.mxu0
        %v1367 = vadd.f32 0.0, %v1366
        %1368 = vmatprep.mubr.f32.mxu0 0.0
        %1369 = vmatmul.mubr.f32.gmra.mxu0 %v443
        %v1370 = vpop.f32.mrf.mxu0
        %v1371 = vadd.f32 0.0, %v1370
        %v1372 = vpop.f32.mrf.mxu0
        %v1373 = vadd.f32 0.0, %v1372
        %1374 = vmatprep.mubr.f32.mxu0 0.0
        %1375 = vmatmul.mubr.f32.gmra.mxu0 %v446
        %v1376 = vpop.f32.mrf.mxu0
        %v1377 = vadd.f32 0.0, %v1376
        %v1378 = vpop.f32.mrf.mxu0
        %v1379 = vadd.f32 0.0, %v1378
        %1380 = vdwg.mxu0
        %v1381 = vmul.f32 %v1359, %v1288
        %v1382 = vmul.f32 %v1361, %v1289
        %v1383 = vmul.f32 %v1365, %v1290
        %v1384 = vmul.f32 %v1367, %v1291
        %v1385 = vadd.f32 %v1381, %v1383
        %v1386 = vrot.slane %v1385, 4
        %v1387 = vadd.f32 %v1385, %v1386
        %v1388 = vrot.slane %v1387, 2
        %v1389 = vadd.f32 %v1387, %v1388
        %v1390 = vrot.slane %v1389, 1
        %v1391 = vadd.f32 %v1389, %v1390
        %v1392 = vadd.f32 %v1382, %v1384
        %v1393 = vrot.slane %v1392, 4
        %v1394 = vadd.f32 %v1392, %v1393
        %v1395 = vrot.slane %v1394, 2
        %v1396 = vadd.f32 %v1394, %v1395
        %v1397 = vrot.slane %v1396, 1
        %v1398 = vadd.f32 %v1396, %v1397
        %v1399 = vmul.f32 %v1371, %v1288
        %v1400 = vmul.f32 %v1373, %v1289
        %v1401 = vmul.f32 %v1377, %v1290
        %v1402 = vmul.f32 %v1379, %v1291
        %v1403 = vadd.f32 %v1399, %v1401
        %v1404 = vrot.slane %v1403, 4
        %v1405 = vadd.f32 %v1403, %v1404
        %v1406 = vrot.slane %v1405, 2
        %v1407 = vadd.f32 %v1405, %v1406
        %v1408 = vrot.slane %v1407, 1
        %v1409 = vadd.f32 %v1407, %v1408
        %v1410 = vadd.f32 %v1400, %v1402
        %v1411 = vrot.slane %v1410, 4
        %v1412 = vadd.f32 %v1410, %v1411
        %v1413 = vrot.slane %v1412, 2
        %v1414 = vadd.f32 %v1412, %v1413
        %v1415 = vrot.slane %v1414, 1
        %v1416 = vadd.f32 %v1414, %v1415
        %v1417 = vmul.f32 %v1194, 0.5
        %v1418 = vmul.f32 %v1201, 0.5
        %v1419 = vadd.f32 %v997, %v1417
        %v1420 = vadd.f32 %v998, %v1418
        %v1421 = vmul.f32 %v1212, 0.5
        %v1422 = vmul.f32 %v1219, 0.5
        %v1423 = vadd.f32 %v1001, %v1421
        %v1424 = vadd.f32 %v1002, %v1422
        %v1425 = vmul.f32 %v1391, 0.5
        %v1426 = vmul.f32 %v1398, 0.5
        %v1427 = vadd.f32 %v1005, %v1425
        %v1428 = vadd.f32 %v1006, %v1426
        %v1429 = vmul.f32 %v1409, 0.5
        %v1430 = vmul.f32 %v1416, 0.5
        %v1431 = vadd.f32 %v1009, %v1429
        %v1432 = vadd.f32 %v1010, %v1430
        %v1433 = vsub.f32 %v1419, %v1427
        %v1434 = vsub.f32 %v1420, %v1428
        %v1435 = vsub.f32 %v1423, %v1431
        %v1436 = vsub.f32 %v1424, %v1432
        %v1437 = vmul.f32 %v1433, %v1433
        %v1438 = vmul.f32 %v1434, %v1434
        %v1439 = vadd.f32 %v1021, %v1437
        %v1440 = vadd.f32 %v1022, %v1438
        %v1441 = vmul.f32 %v1435, %v1435
        %v1442 = vmul.f32 %v1436, %v1436
        %v1443 = vadd.f32 %v1439, %v1441
        %v1444 = vadd.f32 %v1440, %v1442
        %v1445 = vfloor.f32 %v1419
        %v1446 = vfloor.f32 %v1420
        %v1447 = vfloor.f32 %v1423
        %v1448 = vfloor.f32 %v1424
        %v1449 = vmax.f32 %v1445, 0.0
        %v1450 = vmax.f32 %v1446, 0.0
        %v1451 = vmin.f32 %v1449, 15.0
        %v1452 = vmin.f32 %v1450, 15.0
        %v1453 = vadd.f32 %v1445, 1.0
        %v1454 = vadd.f32 %v1446, 1.0
        %v1455 = vmax.f32 %v1453, 0.0
        %v1456 = vmax.f32 %v1454, 0.0
        %v1457 = vmin.f32 %v1455, 15.0
        %v1458 = vmin.f32 %v1456, 15.0
        %v1459 = vmax.f32 %v1447, 0.0
        %v1460 = vmax.f32 %v1448, 0.0
        %v1461 = vmin.f32 %v1459, 15.0
        %v1462 = vmin.f32 %v1460, 15.0
        %v1463 = vadd.f32 %v1447, 1.0
        %v1464 = vadd.f32 %v1448, 1.0
        %v1465 = vmax.f32 %v1463, 0.0
        %v1466 = vmax.f32 %v1464, 0.0
        %v1467 = vmin.f32 %v1465, 15.0
        %v1468 = vmin.f32 %v1466, 15.0
        %v1469 = vsub.f32 %v1457, %v1419
        %v1470 = vsub.f32 %v1458, %v1420
        %v1471 = vsub.f32 %v1419, %v1451
        %v1472 = vsub.f32 %v1420, %v1452
        %v1473 = vsub.f32 %v1467, %v1423
        %v1474 = vsub.f32 %v1468, %v1424
        %v1475 = vsub.f32 %v1423, %v1461
        %v1476 = vsub.f32 %v1424, %v1462
        %vm1477 = vcmp.eq.f32.partialorder %v187, %v1451
        %vm1478 = vcmp.eq.f32.partialorder %v187, %v1452
        %vm1479 = vcmp.eq.f32.partialorder %v188, %v1451
        %vm1480 = vcmp.eq.f32.partialorder %v188, %v1452
        %v1481 = vsel %vm1477, %v1469, 0.0
        %v1482 = vsel %vm1478, %v1470, 0.0
        %v1483 = vsel %vm1479, %v1469, 0.0
        %v1484 = vsel %vm1480, %v1470, 0.0
        %vm1485 = vcmp.eq.f32.partialorder %v187, %v1457
        %vm1486 = vcmp.eq.f32.partialorder %v187, %v1458
        %vm1487 = vcmp.eq.f32.partialorder %v188, %v1457
        %vm1488 = vcmp.eq.f32.partialorder %v188, %v1458
        %v1489 = vsel %vm1485, %v1471, 0.0
        %v1490 = vsel %vm1486, %v1472, 0.0
        %v1491 = vsel %vm1487, %v1471, 0.0
        %v1492 = vsel %vm1488, %v1472, 0.0
        %v1493 = vadd.f32 %v1481, %v1489
        %v1494 = vadd.f32 %v1482, %v1490
        %v1495 = vadd.f32 %v1483, %v1491
        %v1496 = vadd.f32 %v1484, %v1492
        %vm1497 = vcmp.eq.f32.partialorder %v187, %v1461
        %vm1498 = vcmp.eq.f32.partialorder %v187, %v1462
        %vm1499 = vcmp.eq.f32.partialorder %v188, %v1461
        %vm1500 = vcmp.eq.f32.partialorder %v188, %v1462
        %v1501 = vsel %vm1497, %v1473, 0.0
        %v1502 = vsel %vm1498, %v1474, 0.0
        %v1503 = vsel %vm1499, %v1473, 0.0
        %v1504 = vsel %vm1500, %v1474, 0.0
        %vm1505 = vcmp.eq.f32.partialorder %v187, %v1467
        %vm1506 = vcmp.eq.f32.partialorder %v187, %v1468
        %vm1507 = vcmp.eq.f32.partialorder %v188, %v1467
        %vm1508 = vcmp.eq.f32.partialorder %v188, %v1468
        %v1509 = vsel %vm1505, %v1475, 0.0
        %v1510 = vsel %vm1506, %v1476, 0.0
        %v1511 = vsel %vm1507, %v1475, 0.0
        %v1512 = vsel %vm1508, %v1476, 0.0
        %v1513 = vadd.f32 %v1501, %v1509
        %v1514 = vadd.f32 %v1502, %v1510
        %v1515 = vadd.f32 %v1503, %v1511
        %v1516 = vadd.f32 %v1504, %v1512
        %1517 = vmatprep.subr.mxu0 0.0
        %1518 = vmatpush1.msra.mxu0 0.0
        %1519 = vmatprep.subr.mxu0 0.0
        %1520 = vmatpush1.msra.mxu0 0.0
        %1521 = vmatprep.subr.mxu0 0.0
        %1522 = vmatpush1.msra.mxu0 0.0
        %1523 = vmatprep.subr.mxu0 0.0
        %1524 = vmatpush1.msra.mxu0 0.0
        %1525 = vmatprep.subr.mxu0 0.0
        %1526 = vmatpush1.msra.mxu0 0.0
        %1527 = vmatprep.subr.mxu0 0.0
        %1528 = vmatpush1.msra.mxu0 0.0
        %1529 = vmatprep.subr.mxu0 0.0
        %1530 = vmatpush1.msra.mxu0 0.0
        %1531 = vmatprep.subr.mxu0 0.0
        %1532 = vmatpush1.msra.mxu0 0.0
        %1533 = vmatprep.subr.mxu0 0.0
        %1534 = vmatpush1.msra.mxu0 0.0
        %1535 = vmatprep.subr.mxu0 0.0
        %1536 = vmatpush1.msra.mxu0 0.0
        %1537 = vmatprep.subr.mxu0 0.0
        %1538 = vmatpush1.msra.mxu0 0.0
        %1539 = vmatprep.subr.mxu0 0.0
        %1540 = vmatpush1.msra.mxu0 0.0
        %1541 = vmatprep.subr.mxu0 0.0
        %1542 = vmatpush1.msra.mxu0 0.0
        %1543 = vmatprep.subr.mxu0 0.0
        %1544 = vmatpush1.msra.mxu0 0.0
        %1545 = vmatprep.subr.mxu0 %v1496
        %1546 = vmatpush1.msra.mxu0 %v1495
        %1547 = vmatprep.subr.mxu0 %v1494
        %1548 = vmatpush1.msra.mxu0 %v1493
        %1549 = vmatprep.subr.mxu0 0.0
        %1550 = vmatpush2.msra.mxu0 0.0
        %1551 = vmatprep.subr.mxu0 0.0
        %1552 = vmatpush2.msra.mxu0 0.0
        %1553 = vmatprep.subr.mxu0 0.0
        %1554 = vmatpush2.msra.mxu0 0.0
        %1555 = vmatprep.subr.mxu0 0.0
        %1556 = vmatpush2.msra.mxu0 0.0
        %1557 = vmatprep.subr.mxu0 0.0
        %1558 = vmatpush2.msra.mxu0 0.0
        %1559 = vmatprep.subr.mxu0 0.0
        %1560 = vmatpush2.msra.mxu0 0.0
        %1561 = vmatprep.subr.mxu0 0.0
        %1562 = vmatpush2.msra.mxu0 0.0
        %1563 = vmatprep.subr.mxu0 0.0
        %1564 = vmatpush2.msra.mxu0 0.0
        %1565 = vmatprep.subr.mxu0 0.0
        %1566 = vmatpush2.msra.mxu0 0.0
        %1567 = vmatprep.subr.mxu0 0.0
        %1568 = vmatpush2.msra.mxu0 0.0
        %1569 = vmatprep.subr.mxu0 0.0
        %1570 = vmatpush2.msra.mxu0 0.0
        %1571 = vmatprep.subr.mxu0 0.0
        %1572 = vmatpush2.msra.mxu0 0.0
        %1573 = vmatprep.subr.mxu0 0.0
        %1574 = vmatpush2.msra.mxu0 0.0
        %1575 = vmatprep.subr.mxu0 0.0
        %1576 = vmatpush2.msra.mxu0 0.0
        %1577 = vmatprep.subr.mxu0 0.0
        %1578 = vmatpush2.msra.mxu0 0.0
        %1579 = vmatprep.subr.mxu0 0.0
        %1580 = vmatpush2.msra.mxu0 0.0
        %1581 = vmatprep.mubr.f32.mxu0 0.0
        %1582 = vmatmul.mubr.f32.gmra.mxu0 %v300
        %v1583 = vpop.f32.mrf.mxu0
        %v1584 = vadd.f32 0.0, %v1583
        %v1585 = vpop.f32.mrf.mxu0
        %v1586 = vadd.f32 0.0, %v1585
        %1587 = vmatprep.mubr.f32.mxu0 0.0
        %1588 = vmatmul.mubr.f32.gmra.mxu0 %v303
        %v1589 = vpop.f32.mrf.mxu0
        %v1590 = vadd.f32 0.0, %v1589
        %v1591 = vpop.f32.mrf.mxu0
        %v1592 = vadd.f32 0.0, %v1591
        %1593 = vmatprep.mubr.f32.mxu0 0.0
        %1594 = vmatmul.mubr.f32.gmra.mxu0 %v306
        %v1595 = vpop.f32.mrf.mxu0
        %v1596 = vadd.f32 0.0, %v1595
        %v1597 = vpop.f32.mrf.mxu0
        %v1598 = vadd.f32 0.0, %v1597
        %1599 = vmatprep.mubr.f32.mxu0 0.0
        %1600 = vmatmul.mubr.f32.gmra.mxu0 %v309
        %v1601 = vpop.f32.mrf.mxu0
        %v1602 = vadd.f32 0.0, %v1601
        %v1603 = vpop.f32.mrf.mxu0
        %v1604 = vadd.f32 0.0, %v1603
        %1605 = vdwg.mxu0
        %v1606 = vmul.f32 %v1584, %v1513
        %v1607 = vmul.f32 %v1586, %v1514
        %v1608 = vmul.f32 %v1590, %v1515
        %v1609 = vmul.f32 %v1592, %v1516
        %v1610 = vadd.f32 %v1606, %v1608
        %v1611 = vrot.slane %v1610, 4
        %v1612 = vadd.f32 %v1610, %v1611
        %v1613 = vrot.slane %v1612, 2
        %v1614 = vadd.f32 %v1612, %v1613
        %v1615 = vrot.slane %v1614, 1
        %v1616 = vadd.f32 %v1614, %v1615
        %v1617 = vadd.f32 %v1607, %v1609
        %v1618 = vrot.slane %v1617, 4
        %v1619 = vadd.f32 %v1617, %v1618
        %v1620 = vrot.slane %v1619, 2
        %v1621 = vadd.f32 %v1619, %v1620
        %v1622 = vrot.slane %v1621, 1
        %v1623 = vadd.f32 %v1621, %v1622
        %v1624 = vmul.f32 %v1596, %v1513
        %v1625 = vmul.f32 %v1598, %v1514
        %v1626 = vmul.f32 %v1602, %v1515
        %v1627 = vmul.f32 %v1604, %v1516
        %v1628 = vadd.f32 %v1624, %v1626
        %v1629 = vrot.slane %v1628, 4
        %v1630 = vadd.f32 %v1628, %v1629
        %v1631 = vrot.slane %v1630, 2
        %v1632 = vadd.f32 %v1630, %v1631
        %v1633 = vrot.slane %v1632, 1
        %v1634 = vadd.f32 %v1632, %v1633
        %v1635 = vadd.f32 %v1625, %v1627
        %v1636 = vrot.slane %v1635, 4
        %v1637 = vadd.f32 %v1635, %v1636
        %v1638 = vrot.slane %v1637, 2
        %v1639 = vadd.f32 %v1637, %v1638
        %v1640 = vrot.slane %v1639, 1
        %v1641 = vadd.f32 %v1639, %v1640
        %v1642 = vfloor.f32 %v1427
        %v1643 = vfloor.f32 %v1428
        %v1644 = vfloor.f32 %v1431
        %v1645 = vfloor.f32 %v1432
        %v1646 = vmax.f32 %v1642, 0.0
        %v1647 = vmax.f32 %v1643, 0.0
        %v1648 = vmin.f32 %v1646, 15.0
        %v1649 = vmin.f32 %v1647, 15.0
        %v1650 = vadd.f32 %v1642, 1.0
        %v1651 = vadd.f32 %v1643, 1.0
        %v1652 = vmax.f32 %v1650, 0.0
        %v1653 = vmax.f32 %v1651, 0.0
        %v1654 = vmin.f32 %v1652, 15.0
        %v1655 = vmin.f32 %v1653, 15.0
        %v1656 = vmax.f32 %v1644, 0.0
        %v1657 = vmax.f32 %v1645, 0.0
        %v1658 = vmin.f32 %v1656, 15.0
        %v1659 = vmin.f32 %v1657, 15.0
        %v1660 = vadd.f32 %v1644, 1.0
        %v1661 = vadd.f32 %v1645, 1.0
        %v1662 = vmax.f32 %v1660, 0.0
        %v1663 = vmax.f32 %v1661, 0.0
        %v1664 = vmin.f32 %v1662, 15.0
        %v1665 = vmin.f32 %v1663, 15.0
        %v1666 = vsub.f32 %v1654, %v1427
        %v1667 = vsub.f32 %v1655, %v1428
        %v1668 = vsub.f32 %v1427, %v1648
        %v1669 = vsub.f32 %v1428, %v1649
        %v1670 = vsub.f32 %v1664, %v1431
        %v1671 = vsub.f32 %v1665, %v1432
        %v1672 = vsub.f32 %v1431, %v1658
        %v1673 = vsub.f32 %v1432, %v1659
        %vm1674 = vcmp.eq.f32.partialorder %v187, %v1648
        %vm1675 = vcmp.eq.f32.partialorder %v187, %v1649
        %vm1676 = vcmp.eq.f32.partialorder %v188, %v1648
        %vm1677 = vcmp.eq.f32.partialorder %v188, %v1649
        %v1678 = vsel %vm1674, %v1666, 0.0
        %v1679 = vsel %vm1675, %v1667, 0.0
        %v1680 = vsel %vm1676, %v1666, 0.0
        %v1681 = vsel %vm1677, %v1667, 0.0
        %vm1682 = vcmp.eq.f32.partialorder %v187, %v1654
        %vm1683 = vcmp.eq.f32.partialorder %v187, %v1655
        %vm1684 = vcmp.eq.f32.partialorder %v188, %v1654
        %vm1685 = vcmp.eq.f32.partialorder %v188, %v1655
        %v1686 = vsel %vm1682, %v1668, 0.0
        %v1687 = vsel %vm1683, %v1669, 0.0
        %v1688 = vsel %vm1684, %v1668, 0.0
        %v1689 = vsel %vm1685, %v1669, 0.0
        %v1690 = vadd.f32 %v1678, %v1686
        %v1691 = vadd.f32 %v1679, %v1687
        %v1692 = vadd.f32 %v1680, %v1688
        %v1693 = vadd.f32 %v1681, %v1689
        %vm1694 = vcmp.eq.f32.partialorder %v187, %v1658
        %vm1695 = vcmp.eq.f32.partialorder %v187, %v1659
        %vm1696 = vcmp.eq.f32.partialorder %v188, %v1658
        %vm1697 = vcmp.eq.f32.partialorder %v188, %v1659
        %v1698 = vsel %vm1694, %v1670, 0.0
        %v1699 = vsel %vm1695, %v1671, 0.0
        %v1700 = vsel %vm1696, %v1670, 0.0
        %v1701 = vsel %vm1697, %v1671, 0.0
        %vm1702 = vcmp.eq.f32.partialorder %v187, %v1664
        %vm1703 = vcmp.eq.f32.partialorder %v187, %v1665
        %vm1704 = vcmp.eq.f32.partialorder %v188, %v1664
        %vm1705 = vcmp.eq.f32.partialorder %v188, %v1665
        %v1706 = vsel %vm1702, %v1672, 0.0
        %v1707 = vsel %vm1703, %v1673, 0.0
        %v1708 = vsel %vm1704, %v1672, 0.0
        %v1709 = vsel %vm1705, %v1673, 0.0
        %v1710 = vadd.f32 %v1698, %v1706
        %v1711 = vadd.f32 %v1699, %v1707
        %v1712 = vadd.f32 %v1700, %v1708
        %v1713 = vadd.f32 %v1701, %v1709
        %1714 = vmatprep.subr.mxu0 0.0
        %1715 = vmatpush1.msra.mxu0 0.0
        %1716 = vmatprep.subr.mxu0 0.0
        %1717 = vmatpush1.msra.mxu0 0.0
        %1718 = vmatprep.subr.mxu0 0.0
        %1719 = vmatpush1.msra.mxu0 0.0
        %1720 = vmatprep.subr.mxu0 0.0
        %1721 = vmatpush1.msra.mxu0 0.0
        %1722 = vmatprep.subr.mxu0 0.0
        %1723 = vmatpush1.msra.mxu0 0.0
        %1724 = vmatprep.subr.mxu0 0.0
        %1725 = vmatpush1.msra.mxu0 0.0
        %1726 = vmatprep.subr.mxu0 0.0
        %1727 = vmatpush1.msra.mxu0 0.0
        %1728 = vmatprep.subr.mxu0 0.0
        %1729 = vmatpush1.msra.mxu0 0.0
        %1730 = vmatprep.subr.mxu0 0.0
        %1731 = vmatpush1.msra.mxu0 0.0
        %1732 = vmatprep.subr.mxu0 0.0
        %1733 = vmatpush1.msra.mxu0 0.0
        %1734 = vmatprep.subr.mxu0 0.0
        %1735 = vmatpush1.msra.mxu0 0.0
        %1736 = vmatprep.subr.mxu0 0.0
        %1737 = vmatpush1.msra.mxu0 0.0
        %1738 = vmatprep.subr.mxu0 0.0
        %1739 = vmatpush1.msra.mxu0 0.0
        %1740 = vmatprep.subr.mxu0 0.0
        %1741 = vmatpush1.msra.mxu0 0.0
        %1742 = vmatprep.subr.mxu0 %v1693
        %1743 = vmatpush1.msra.mxu0 %v1692
        %1744 = vmatprep.subr.mxu0 %v1691
        %1745 = vmatpush1.msra.mxu0 %v1690
        %1746 = vmatprep.subr.mxu0 0.0
        %1747 = vmatpush2.msra.mxu0 0.0
        %1748 = vmatprep.subr.mxu0 0.0
        %1749 = vmatpush2.msra.mxu0 0.0
        %1750 = vmatprep.subr.mxu0 0.0
        %1751 = vmatpush2.msra.mxu0 0.0
        %1752 = vmatprep.subr.mxu0 0.0
        %1753 = vmatpush2.msra.mxu0 0.0
        %1754 = vmatprep.subr.mxu0 0.0
        %1755 = vmatpush2.msra.mxu0 0.0
        %1756 = vmatprep.subr.mxu0 0.0
        %1757 = vmatpush2.msra.mxu0 0.0
        %1758 = vmatprep.subr.mxu0 0.0
        %1759 = vmatpush2.msra.mxu0 0.0
        %1760 = vmatprep.subr.mxu0 0.0
        %1761 = vmatpush2.msra.mxu0 0.0
        %1762 = vmatprep.subr.mxu0 0.0
        %1763 = vmatpush2.msra.mxu0 0.0
        %1764 = vmatprep.subr.mxu0 0.0
        %1765 = vmatpush2.msra.mxu0 0.0
        %1766 = vmatprep.subr.mxu0 0.0
        %1767 = vmatpush2.msra.mxu0 0.0
        %1768 = vmatprep.subr.mxu0 0.0
        %1769 = vmatpush2.msra.mxu0 0.0
        %1770 = vmatprep.subr.mxu0 0.0
        %1771 = vmatpush2.msra.mxu0 0.0
        %1772 = vmatprep.subr.mxu0 0.0
        %1773 = vmatpush2.msra.mxu0 0.0
        %1774 = vmatprep.subr.mxu0 0.0
        %1775 = vmatpush2.msra.mxu0 0.0
        %1776 = vmatprep.subr.mxu0 0.0
        %1777 = vmatpush2.msra.mxu0 0.0
        %1778 = vmatprep.mubr.f32.mxu0 0.0
        %1779 = vmatmul.mubr.f32.gmra.mxu0 %v437
        %v1780 = vpop.f32.mrf.mxu0
        %v1781 = vadd.f32 0.0, %v1780
        %v1782 = vpop.f32.mrf.mxu0
        %v1783 = vadd.f32 0.0, %v1782
        %1784 = vmatprep.mubr.f32.mxu0 0.0
        %1785 = vmatmul.mubr.f32.gmra.mxu0 %v440
        %v1786 = vpop.f32.mrf.mxu0
        %v1787 = vadd.f32 0.0, %v1786
        %v1788 = vpop.f32.mrf.mxu0
        %v1789 = vadd.f32 0.0, %v1788
        %1790 = vmatprep.mubr.f32.mxu0 0.0
        %1791 = vmatmul.mubr.f32.gmra.mxu0 %v443
        %v1792 = vpop.f32.mrf.mxu0
        %v1793 = vadd.f32 0.0, %v1792
        %v1794 = vpop.f32.mrf.mxu0
        %v1795 = vadd.f32 0.0, %v1794
        %1796 = vmatprep.mubr.f32.mxu0 0.0
        %1797 = vmatmul.mubr.f32.gmra.mxu0 %v446
        %v1798 = vpop.f32.mrf.mxu0
        %v1799 = vadd.f32 0.0, %v1798
        %v1800 = vpop.f32.mrf.mxu0
        %v1801 = vadd.f32 0.0, %v1800
        %1802 = vdwg.mxu0
        %v1803 = vmul.f32 %v1781, %v1710
        %v1804 = vmul.f32 %v1783, %v1711
        %v1805 = vmul.f32 %v1787, %v1712
        %v1806 = vmul.f32 %v1789, %v1713
        %v1807 = vadd.f32 %v1803, %v1805
        %v1808 = vrot.slane %v1807, 4
        %v1809 = vadd.f32 %v1807, %v1808
        %v1810 = vrot.slane %v1809, 2
        %v1811 = vadd.f32 %v1809, %v1810
        %v1812 = vrot.slane %v1811, 1
        %v1813 = vadd.f32 %v1811, %v1812
        %v1814 = vadd.f32 %v1804, %v1806
        %v1815 = vrot.slane %v1814, 4
        %v1816 = vadd.f32 %v1814, %v1815
        %v1817 = vrot.slane %v1816, 2
        %v1818 = vadd.f32 %v1816, %v1817
        %v1819 = vrot.slane %v1818, 1
        %v1820 = vadd.f32 %v1818, %v1819
        %v1821 = vmul.f32 %v1793, %v1710
        %v1822 = vmul.f32 %v1795, %v1711
        %v1823 = vmul.f32 %v1799, %v1712
        %v1824 = vmul.f32 %v1801, %v1713
        %v1825 = vadd.f32 %v1821, %v1823
        %v1826 = vrot.slane %v1825, 4
        %v1827 = vadd.f32 %v1825, %v1826
        %v1828 = vrot.slane %v1827, 2
        %v1829 = vadd.f32 %v1827, %v1828
        %v1830 = vrot.slane %v1829, 1
        %v1831 = vadd.f32 %v1829, %v1830
        %v1832 = vadd.f32 %v1822, %v1824
        %v1833 = vrot.slane %v1832, 4
        %v1834 = vadd.f32 %v1832, %v1833
        %v1835 = vrot.slane %v1834, 2
        %v1836 = vadd.f32 %v1834, %v1835
        %v1837 = vrot.slane %v1836, 1
        %v1838 = vadd.f32 %v1836, %v1837
        %v1839 = vmul.f32 %v1616, 0.5
        %v1840 = vmul.f32 %v1623, 0.5
        %v1841 = vadd.f32 %v1419, %v1839
        %v1842 = vadd.f32 %v1420, %v1840
        %v1843 = vmul.f32 %v1634, 0.5
        %v1844 = vmul.f32 %v1641, 0.5
        %v1845 = vadd.f32 %v1423, %v1843
        %v1846 = vadd.f32 %v1424, %v1844
        %v1847 = vmul.f32 %v1813, 0.5
        %v1848 = vmul.f32 %v1820, 0.5
        %v1849 = vadd.f32 %v1427, %v1847
        %v1850 = vadd.f32 %v1428, %v1848
        %v1851 = vmul.f32 %v1831, 0.5
        %v1852 = vmul.f32 %v1838, 0.5
        %v1853 = vadd.f32 %v1431, %v1851
        %v1854 = vadd.f32 %v1432, %v1852
        %v1855 = vsub.f32 %v1841, %v1849
        %v1856 = vsub.f32 %v1842, %v1850
        %v1857 = vsub.f32 %v1845, %v1853
        %v1858 = vsub.f32 %v1846, %v1854
        %v1859 = vmul.f32 %v1855, %v1855
        %v1860 = vmul.f32 %v1856, %v1856
        %v1861 = vadd.f32 %v1443, %v1859
        %v1862 = vadd.f32 %v1444, %v1860
        %v1863 = vmul.f32 %v1857, %v1857
        %v1864 = vmul.f32 %v1858, %v1858
        %v1865 = vadd.f32 %v1861, %v1863
        %v1866 = vadd.f32 %v1862, %v1864
        %v1867 = vfloor.f32 %v1841
        %v1868 = vfloor.f32 %v1842
        %v1869 = vfloor.f32 %v1845
        %v1870 = vfloor.f32 %v1846
        %v1871 = vmax.f32 %v1867, 0.0
        %v1872 = vmax.f32 %v1868, 0.0
        %v1873 = vmin.f32 %v1871, 15.0
        %v1874 = vmin.f32 %v1872, 15.0
        %v1875 = vadd.f32 %v1867, 1.0
        %v1876 = vadd.f32 %v1868, 1.0
        %v1877 = vmax.f32 %v1875, 0.0
        %v1878 = vmax.f32 %v1876, 0.0
        %v1879 = vmin.f32 %v1877, 15.0
        %v1880 = vmin.f32 %v1878, 15.0
        %v1881 = vmax.f32 %v1869, 0.0
        %v1882 = vmax.f32 %v1870, 0.0
        %v1883 = vmin.f32 %v1881, 15.0
        %v1884 = vmin.f32 %v1882, 15.0
        %v1885 = vadd.f32 %v1869, 1.0
        %v1886 = vadd.f32 %v1870, 1.0
        %v1887 = vmax.f32 %v1885, 0.0
        %v1888 = vmax.f32 %v1886, 0.0
        %v1889 = vmin.f32 %v1887, 15.0
        %v1890 = vmin.f32 %v1888, 15.0
        %v1891 = vsub.f32 %v1879, %v1841
        %v1892 = vsub.f32 %v1880, %v1842
        %v1893 = vsub.f32 %v1841, %v1873
        %v1894 = vsub.f32 %v1842, %v1874
        %v1895 = vsub.f32 %v1889, %v1845
        %v1896 = vsub.f32 %v1890, %v1846
        %v1897 = vsub.f32 %v1845, %v1883
        %v1898 = vsub.f32 %v1846, %v1884
        %vm1899 = vcmp.eq.f32.partialorder %v187, %v1873
        %vm1900 = vcmp.eq.f32.partialorder %v187, %v1874
        %vm1901 = vcmp.eq.f32.partialorder %v188, %v1873
        %vm1902 = vcmp.eq.f32.partialorder %v188, %v1874
        %v1903 = vsel %vm1899, %v1891, 0.0
        %v1904 = vsel %vm1900, %v1892, 0.0
        %v1905 = vsel %vm1901, %v1891, 0.0
        %v1906 = vsel %vm1902, %v1892, 0.0
        %vm1907 = vcmp.eq.f32.partialorder %v187, %v1879
        %vm1908 = vcmp.eq.f32.partialorder %v187, %v1880
        %vm1909 = vcmp.eq.f32.partialorder %v188, %v1879
        %vm1910 = vcmp.eq.f32.partialorder %v188, %v1880
        %v1911 = vsel %vm1907, %v1893, 0.0
        %v1912 = vsel %vm1908, %v1894, 0.0
        %v1913 = vsel %vm1909, %v1893, 0.0
        %v1914 = vsel %vm1910, %v1894, 0.0
        %v1915 = vadd.f32 %v1903, %v1911
        %v1916 = vadd.f32 %v1904, %v1912
        %v1917 = vadd.f32 %v1905, %v1913
        %v1918 = vadd.f32 %v1906, %v1914
        %vm1919 = vcmp.eq.f32.partialorder %v187, %v1883
        %vm1920 = vcmp.eq.f32.partialorder %v187, %v1884
        %vm1921 = vcmp.eq.f32.partialorder %v188, %v1883
        %vm1922 = vcmp.eq.f32.partialorder %v188, %v1884
        %v1923 = vsel %vm1919, %v1895, 0.0
        %v1924 = vsel %vm1920, %v1896, 0.0
        %v1925 = vsel %vm1921, %v1895, 0.0
        %v1926 = vsel %vm1922, %v1896, 0.0
        %vm1927 = vcmp.eq.f32.partialorder %v187, %v1889
        %vm1928 = vcmp.eq.f32.partialorder %v187, %v1890
        %vm1929 = vcmp.eq.f32.partialorder %v188, %v1889
        %vm1930 = vcmp.eq.f32.partialorder %v188, %v1890
        %v1931 = vsel %vm1927, %v1897, 0.0
        %v1932 = vsel %vm1928, %v1898, 0.0
        %v1933 = vsel %vm1929, %v1897, 0.0
        %v1934 = vsel %vm1930, %v1898, 0.0
        %v1935 = vadd.f32 %v1923, %v1931
        %v1936 = vadd.f32 %v1924, %v1932
        %v1937 = vadd.f32 %v1925, %v1933
        %v1938 = vadd.f32 %v1926, %v1934
        %1939 = vmatprep.subr.mxu0 0.0
        %1940 = vmatpush1.msra.mxu0 0.0
        %1941 = vmatprep.subr.mxu0 0.0
        %1942 = vmatpush1.msra.mxu0 0.0
        %1943 = vmatprep.subr.mxu0 0.0
        %1944 = vmatpush1.msra.mxu0 0.0
        %1945 = vmatprep.subr.mxu0 0.0
        %1946 = vmatpush1.msra.mxu0 0.0
        %1947 = vmatprep.subr.mxu0 0.0
        %1948 = vmatpush1.msra.mxu0 0.0
        %1949 = vmatprep.subr.mxu0 0.0
        %1950 = vmatpush1.msra.mxu0 0.0
        %1951 = vmatprep.subr.mxu0 0.0
        %1952 = vmatpush1.msra.mxu0 0.0
        %1953 = vmatprep.subr.mxu0 0.0
        %1954 = vmatpush1.msra.mxu0 0.0
        %1955 = vmatprep.subr.mxu0 0.0
        %1956 = vmatpush1.msra.mxu0 0.0
        %1957 = vmatprep.subr.mxu0 0.0
        %1958 = vmatpush1.msra.mxu0 0.0
        %1959 = vmatprep.subr.mxu0 0.0
        %1960 = vmatpush1.msra.mxu0 0.0
        %1961 = vmatprep.subr.mxu0 0.0
        %1962 = vmatpush1.msra.mxu0 0.0
        %1963 = vmatprep.subr.mxu0 0.0
        %1964 = vmatpush1.msra.mxu0 0.0
        %1965 = vmatprep.subr.mxu0 0.0
        %1966 = vmatpush1.msra.mxu0 0.0
        %1967 = vmatprep.subr.mxu0 %v1918
        %1968 = vmatpush1.msra.mxu0 %v1917
        %1969 = vmatprep.subr.mxu0 %v1916
        %1970 = vmatpush1.msra.mxu0 %v1915
        %1971 = vmatprep.subr.mxu0 0.0
        %1972 = vmatpush2.msra.mxu0 0.0
        %1973 = vmatprep.subr.mxu0 0.0
        %1974 = vmatpush2.msra.mxu0 0.0
        %1975 = vmatprep.subr.mxu0 0.0
        %1976 = vmatpush2.msra.mxu0 0.0
        %1977 = vmatprep.subr.mxu0 0.0
        %1978 = vmatpush2.msra.mxu0 0.0
        %1979 = vmatprep.subr.mxu0 0.0
        %1980 = vmatpush2.msra.mxu0 0.0
        %1981 = vmatprep.subr.mxu0 0.0
        %1982 = vmatpush2.msra.mxu0 0.0
        %1983 = vmatprep.subr.mxu0 0.0
        %1984 = vmatpush2.msra.mxu0 0.0
        %1985 = vmatprep.subr.mxu0 0.0
        %1986 = vmatpush2.msra.mxu0 0.0
        %1987 = vmatprep.subr.mxu0 0.0
        %1988 = vmatpush2.msra.mxu0 0.0
        %1989 = vmatprep.subr.mxu0 0.0
        %1990 = vmatpush2.msra.mxu0 0.0
        %1991 = vmatprep.subr.mxu0 0.0
        %1992 = vmatpush2.msra.mxu0 0.0
        %1993 = vmatprep.subr.mxu0 0.0
        %1994 = vmatpush2.msra.mxu0 0.0
        %1995 = vmatprep.subr.mxu0 0.0
        %1996 = vmatpush2.msra.mxu0 0.0
        %1997 = vmatprep.subr.mxu0 0.0
        %1998 = vmatpush2.msra.mxu0 0.0
        %1999 = vmatprep.subr.mxu0 0.0
        %2000 = vmatpush2.msra.mxu0 0.0
        %2001 = vmatprep.subr.mxu0 0.0
        %2002 = vmatpush2.msra.mxu0 0.0
        %2003 = vmatprep.mubr.f32.mxu0 0.0
        %2004 = vmatmul.mubr.f32.gmra.mxu0 %v300
        %v2005 = vpop.f32.mrf.mxu0
        %v2006 = vadd.f32 0.0, %v2005
        %v2007 = vpop.f32.mrf.mxu0
        %v2008 = vadd.f32 0.0, %v2007
        %2009 = vmatprep.mubr.f32.mxu0 0.0
        %2010 = vmatmul.mubr.f32.gmra.mxu0 %v303
        %v2011 = vpop.f32.mrf.mxu0
        %v2012 = vadd.f32 0.0, %v2011
        %v2013 = vpop.f32.mrf.mxu0
        %v2014 = vadd.f32 0.0, %v2013
        %2015 = vmatprep.mubr.f32.mxu0 0.0
        %2016 = vmatmul.mubr.f32.gmra.mxu0 %v306
        %v2017 = vpop.f32.mrf.mxu0
        %v2018 = vadd.f32 0.0, %v2017
        %v2019 = vpop.f32.mrf.mxu0
        %v2020 = vadd.f32 0.0, %v2019
        %2021 = vmatprep.mubr.f32.mxu0 0.0
        %2022 = vmatmul.mubr.f32.gmra.mxu0 %v309
        %v2023 = vpop.f32.mrf.mxu0
        %v2024 = vadd.f32 0.0, %v2023
        %v2025 = vpop.f32.mrf.mxu0
        %v2026 = vadd.f32 0.0, %v2025
        %2027 = vdwg.mxu0
        %v2028 = vmul.f32 %v2006, %v1935
        %v2029 = vmul.f32 %v2008, %v1936
        %v2030 = vmul.f32 %v2012, %v1937
        %v2031 = vmul.f32 %v2014, %v1938
        %v2032 = vadd.f32 %v2028, %v2030
        %v2033 = vrot.slane %v2032, 4
        %v2034 = vadd.f32 %v2032, %v2033
        %v2035 = vrot.slane %v2034, 2
        %v2036 = vadd.f32 %v2034, %v2035
        %v2037 = vrot.slane %v2036, 1
        %v2038 = vadd.f32 %v2036, %v2037
        %v2039 = vadd.f32 %v2029, %v2031
        %v2040 = vrot.slane %v2039, 4
        %v2041 = vadd.f32 %v2039, %v2040
        %v2042 = vrot.slane %v2041, 2
        %v2043 = vadd.f32 %v2041, %v2042
        %v2044 = vrot.slane %v2043, 1
        %v2045 = vadd.f32 %v2043, %v2044
        %v2046 = vmul.f32 %v2018, %v1935
        %v2047 = vmul.f32 %v2020, %v1936
        %v2048 = vmul.f32 %v2024, %v1937
        %v2049 = vmul.f32 %v2026, %v1938
        %v2050 = vadd.f32 %v2046, %v2048
        %v2051 = vrot.slane %v2050, 4
        %v2052 = vadd.f32 %v2050, %v2051
        %v2053 = vrot.slane %v2052, 2
        %v2054 = vadd.f32 %v2052, %v2053
        %v2055 = vrot.slane %v2054, 1
        %v2056 = vadd.f32 %v2054, %v2055
        %v2057 = vadd.f32 %v2047, %v2049
        %v2058 = vrot.slane %v2057, 4
        %v2059 = vadd.f32 %v2057, %v2058
        %v2060 = vrot.slane %v2059, 2
        %v2061 = vadd.f32 %v2059, %v2060
        %v2062 = vrot.slane %v2061, 1
        %v2063 = vadd.f32 %v2061, %v2062
        %v2064 = vfloor.f32 %v1849
        %v2065 = vfloor.f32 %v1850
        %v2066 = vfloor.f32 %v1853
        %v2067 = vfloor.f32 %v1854
        %v2068 = vmax.f32 %v2064, 0.0
        %v2069 = vmax.f32 %v2065, 0.0
        %v2070 = vmin.f32 %v2068, 15.0
        %v2071 = vmin.f32 %v2069, 15.0
        %v2072 = vadd.f32 %v2064, 1.0
        %v2073 = vadd.f32 %v2065, 1.0
        %v2074 = vmax.f32 %v2072, 0.0
        %v2075 = vmax.f32 %v2073, 0.0
        %v2076 = vmin.f32 %v2074, 15.0
        %v2077 = vmin.f32 %v2075, 15.0
        %v2078 = vmax.f32 %v2066, 0.0
        %v2079 = vmax.f32 %v2067, 0.0
        %v2080 = vmin.f32 %v2078, 15.0
        %v2081 = vmin.f32 %v2079, 15.0
        %v2082 = vadd.f32 %v2066, 1.0
        %v2083 = vadd.f32 %v2067, 1.0
        %v2084 = vmax.f32 %v2082, 0.0
        %v2085 = vmax.f32 %v2083, 0.0
        %v2086 = vmin.f32 %v2084, 15.0
        %v2087 = vmin.f32 %v2085, 15.0
        %v2088 = vsub.f32 %v2076, %v1849
        %v2089 = vsub.f32 %v2077, %v1850
        %v2090 = vsub.f32 %v1849, %v2070
        %v2091 = vsub.f32 %v1850, %v2071
        %v2092 = vsub.f32 %v2086, %v1853
        %v2093 = vsub.f32 %v2087, %v1854
        %v2094 = vsub.f32 %v1853, %v2080
        %v2095 = vsub.f32 %v1854, %v2081
        %vm2096 = vcmp.eq.f32.partialorder %v187, %v2070
        %vm2097 = vcmp.eq.f32.partialorder %v187, %v2071
        %vm2098 = vcmp.eq.f32.partialorder %v188, %v2070
        %vm2099 = vcmp.eq.f32.partialorder %v188, %v2071
        %v2100 = vsel %vm2096, %v2088, 0.0
        %v2101 = vsel %vm2097, %v2089, 0.0
        %v2102 = vsel %vm2098, %v2088, 0.0
        %v2103 = vsel %vm2099, %v2089, 0.0
        %vm2104 = vcmp.eq.f32.partialorder %v187, %v2076
        %vm2105 = vcmp.eq.f32.partialorder %v187, %v2077
        %vm2106 = vcmp.eq.f32.partialorder %v188, %v2076
        %vm2107 = vcmp.eq.f32.partialorder %v188, %v2077
        %v2108 = vsel %vm2104, %v2090, 0.0
        %v2109 = vsel %vm2105, %v2091, 0.0
        %v2110 = vsel %vm2106, %v2090, 0.0
        %v2111 = vsel %vm2107, %v2091, 0.0
        %v2112 = vadd.f32 %v2100, %v2108
        %v2113 = vadd.f32 %v2101, %v2109
        %v2114 = vadd.f32 %v2102, %v2110
        %v2115 = vadd.f32 %v2103, %v2111
        %vm2116 = vcmp.eq.f32.partialorder %v187, %v2080
        %vm2117 = vcmp.eq.f32.partialorder %v187, %v2081
        %vm2118 = vcmp.eq.f32.partialorder %v188, %v2080
        %vm2119 = vcmp.eq.f32.partialorder %v188, %v2081
        %v2120 = vsel %vm2116, %v2092, 0.0
        %v2121 = vsel %vm2117, %v2093, 0.0
        %v2122 = vsel %vm2118, %v2092, 0.0
        %v2123 = vsel %vm2119, %v2093, 0.0
        %vm2124 = vcmp.eq.f32.partialorder %v187, %v2086
        %vm2125 = vcmp.eq.f32.partialorder %v187, %v2087
        %vm2126 = vcmp.eq.f32.partialorder %v188, %v2086
        %vm2127 = vcmp.eq.f32.partialorder %v188, %v2087
        %v2128 = vsel %vm2124, %v2094, 0.0
        %v2129 = vsel %vm2125, %v2095, 0.0
        %v2130 = vsel %vm2126, %v2094, 0.0
        %v2131 = vsel %vm2127, %v2095, 0.0
        %v2132 = vadd.f32 %v2120, %v2128
        %v2133 = vadd.f32 %v2121, %v2129
        %v2134 = vadd.f32 %v2122, %v2130
        %v2135 = vadd.f32 %v2123, %v2131
        %2136 = vmatprep.subr.mxu0 0.0
        %2137 = vmatpush1.msra.mxu0 0.0
        %2138 = vmatprep.subr.mxu0 0.0
        %2139 = vmatpush1.msra.mxu0 0.0
        %2140 = vmatprep.subr.mxu0 0.0
        %2141 = vmatpush1.msra.mxu0 0.0
        %2142 = vmatprep.subr.mxu0 0.0
        %2143 = vmatpush1.msra.mxu0 0.0
        %2144 = vmatprep.subr.mxu0 0.0
        %2145 = vmatpush1.msra.mxu0 0.0
        %2146 = vmatprep.subr.mxu0 0.0
        %2147 = vmatpush1.msra.mxu0 0.0
        %2148 = vmatprep.subr.mxu0 0.0
        %2149 = vmatpush1.msra.mxu0 0.0
        %2150 = vmatprep.subr.mxu0 0.0
        %2151 = vmatpush1.msra.mxu0 0.0
        %2152 = vmatprep.subr.mxu0 0.0
        %2153 = vmatpush1.msra.mxu0 0.0
        %2154 = vmatprep.subr.mxu0 0.0
        %2155 = vmatpush1.msra.mxu0 0.0
        %2156 = vmatprep.subr.mxu0 0.0
        %2157 = vmatpush1.msra.mxu0 0.0
        %2158 = vmatprep.subr.mxu0 0.0
        %2159 = vmatpush1.msra.mxu0 0.0
        %2160 = vmatprep.subr.mxu0 0.0
        %2161 = vmatpush1.msra.mxu0 0.0
        %2162 = vmatprep.subr.mxu0 0.0
        %2163 = vmatpush1.msra.mxu0 0.0
        %2164 = vmatprep.subr.mxu0 %v2115
        %2165 = vmatpush1.msra.mxu0 %v2114
        %2166 = vmatprep.subr.mxu0 %v2113
        %2167 = vmatpush1.msra.mxu0 %v2112
        %2168 = vmatprep.subr.mxu0 0.0
        %2169 = vmatpush2.msra.mxu0 0.0
        %2170 = vmatprep.subr.mxu0 0.0
        %2171 = vmatpush2.msra.mxu0 0.0
        %2172 = vmatprep.subr.mxu0 0.0
        %2173 = vmatpush2.msra.mxu0 0.0
        %2174 = vmatprep.subr.mxu0 0.0
        %2175 = vmatpush2.msra.mxu0 0.0
        %2176 = vmatprep.subr.mxu0 0.0
        %2177 = vmatpush2.msra.mxu0 0.0
        %2178 = vmatprep.subr.mxu0 0.0
        %2179 = vmatpush2.msra.mxu0 0.0
        %2180 = vmatprep.subr.mxu0 0.0
        %2181 = vmatpush2.msra.mxu0 0.0
        %2182 = vmatprep.subr.mxu0 0.0
        %2183 = vmatpush2.msra.mxu0 0.0
        %2184 = vmatprep.subr.mxu0 0.0
        %2185 = vmatpush2.msra.mxu0 0.0
        %2186 = vmatprep.subr.mxu0 0.0
        %2187 = vmatpush2.msra.mxu0 0.0
        %2188 = vmatprep.subr.mxu0 0.0
        %2189 = vmatpush2.msra.mxu0 0.0
        %2190 = vmatprep.subr.mxu0 0.0
        %2191 = vmatpush2.msra.mxu0 0.0
        %2192 = vmatprep.subr.mxu0 0.0
        %2193 = vmatpush2.msra.mxu0 0.0
        %2194 = vmatprep.subr.mxu0 0.0
        %2195 = vmatpush2.msra.mxu0 0.0
        %2196 = vmatprep.subr.mxu0 0.0
        %2197 = vmatpush2.msra.mxu0 0.0
        %2198 = vmatprep.subr.mxu0 0.0
        %2199 = vmatpush2.msra.mxu0 0.0
        %2200 = vmatprep.mubr.f32.mxu0 0.0
        %2201 = vmatmul.mubr.f32.gmra.mxu0 %v437
        %v2202 = vpop.f32.mrf.mxu0
        %v2203 = vadd.f32 0.0, %v2202
        %v2204 = vpop.f32.mrf.mxu0
        %v2205 = vadd.f32 0.0, %v2204
        %2206 = vmatprep.mubr.f32.mxu0 0.0
        %2207 = vmatmul.mubr.f32.gmra.mxu0 %v440
        %v2208 = vpop.f32.mrf.mxu0
        %v2209 = vadd.f32 0.0, %v2208
        %v2210 = vpop.f32.mrf.mxu0
        %v2211 = vadd.f32 0.0, %v2210
        %2212 = vmatprep.mubr.f32.mxu0 0.0
        %2213 = vmatmul.mubr.f32.gmra.mxu0 %v443
        %v2214 = vpop.f32.mrf.mxu0
        %v2215 = vadd.f32 0.0, %v2214
        %v2216 = vpop.f32.mrf.mxu0
        %v2217 = vadd.f32 0.0, %v2216
        %2218 = vmatprep.mubr.f32.mxu0 0.0
        %2219 = vmatmul.mubr.f32.gmra.mxu0 %v446
        %v2220 = vpop.f32.mrf.mxu0
        %v2221 = vadd.f32 0.0, %v2220
        %v2222 = vpop.f32.mrf.mxu0
        %v2223 = vadd.f32 0.0, %v2222
        %2224 = vdwg.mxu0
        %v2225 = vmul.f32 %v2203, %v2132
        %v2226 = vmul.f32 %v2205, %v2133
        %v2227 = vmul.f32 %v2209, %v2134
        %v2228 = vmul.f32 %v2211, %v2135
        %v2229 = vadd.f32 %v2225, %v2227
        %v2230 = vrot.slane %v2229, 4
        %v2231 = vadd.f32 %v2229, %v2230
        %v2232 = vrot.slane %v2231, 2
        %v2233 = vadd.f32 %v2231, %v2232
        %v2234 = vrot.slane %v2233, 1
        %v2235 = vadd.f32 %v2233, %v2234
        %v2236 = vadd.f32 %v2226, %v2228
        %v2237 = vrot.slane %v2236, 4
        %v2238 = vadd.f32 %v2236, %v2237
        %v2239 = vrot.slane %v2238, 2
        %v2240 = vadd.f32 %v2238, %v2239
        %v2241 = vrot.slane %v2240, 1
        %v2242 = vadd.f32 %v2240, %v2241
        %v2243 = vmul.f32 %v2215, %v2132
        %v2244 = vmul.f32 %v2217, %v2133
        %v2245 = vmul.f32 %v2221, %v2134
        %v2246 = vmul.f32 %v2223, %v2135
        %v2247 = vadd.f32 %v2243, %v2245
        %v2248 = vrot.slane %v2247, 4
        %v2249 = vadd.f32 %v2247, %v2248
        %v2250 = vrot.slane %v2249, 2
        %v2251 = vadd.f32 %v2249, %v2250
        %v2252 = vrot.slane %v2251, 1
        %v2253 = vadd.f32 %v2251, %v2252
        %v2254 = vadd.f32 %v2244, %v2246
        %v2255 = vrot.slane %v2254, 4
        %v2256 = vadd.f32 %v2254, %v2255
        %v2257 = vrot.slane %v2256, 2
        %v2258 = vadd.f32 %v2256, %v2257
        %v2259 = vrot.slane %v2258, 1
        %v2260 = vadd.f32 %v2258, %v2259
        %v2261 = vmul.f32 %v2038, 0.5
        %v2262 = vmul.f32 %v2045, 0.5
        %v2263 = vadd.f32 %v1841, %v2261
        %v2264 = vadd.f32 %v1842, %v2262
        %v2265 = vmul.f32 %v2056, 0.5
        %v2266 = vmul.f32 %v2063, 0.5
        %v2267 = vadd.f32 %v1845, %v2265
        %v2268 = vadd.f32 %v1846, %v2266
        %v2269 = vmul.f32 %v2235, 0.5
        %v2270 = vmul.f32 %v2242, 0.5
        %v2271 = vadd.f32 %v1849, %v2269
        %v2272 = vadd.f32 %v1850, %v2270
        %v2273 = vmul.f32 %v2253, 0.5
        %v2274 = vmul.f32 %v2260, 0.5
        %v2275 = vadd.f32 %v1853, %v2273
        %v2276 = vadd.f32 %v1854, %v2274
        %v2277 = vsub.f32 %v2263, %v2271
        %v2278 = vsub.f32 %v2264, %v2272
        %v2279 = vsub.f32 %v2267, %v2275
        %v2280 = vsub.f32 %v2268, %v2276
        %v2281 = vmul.f32 %v2277, %v2277
        %v2282 = vmul.f32 %v2278, %v2278
        %v2283 = vadd.f32 %v1865, %v2281
        %v2284 = vadd.f32 %v1866, %v2282
        %v2285 = vmul.f32 %v2279, %v2279
        %v2286 = vmul.f32 %v2280, %v2280
        %v2287 = vadd.f32 %v2283, %v2285
        %v2288 = vadd.f32 %v2284, %v2286
        %v2289 = vfloor.f32 %v2263
        %v2290 = vfloor.f32 %v2264
        %v2291 = vfloor.f32 %v2267
        %v2292 = vfloor.f32 %v2268
        %v2293 = vmax.f32 %v2289, 0.0
        %v2294 = vmax.f32 %v2290, 0.0
        %v2295 = vmin.f32 %v2293, 15.0
        %v2296 = vmin.f32 %v2294, 15.0
        %v2297 = vadd.f32 %v2289, 1.0
        %v2298 = vadd.f32 %v2290, 1.0
        %v2299 = vmax.f32 %v2297, 0.0
        %v2300 = vmax.f32 %v2298, 0.0
        %v2301 = vmin.f32 %v2299, 15.0
        %v2302 = vmin.f32 %v2300, 15.0
        %v2303 = vmax.f32 %v2291, 0.0
        %v2304 = vmax.f32 %v2292, 0.0
        %v2305 = vmin.f32 %v2303, 15.0
        %v2306 = vmin.f32 %v2304, 15.0
        %v2307 = vadd.f32 %v2291, 1.0
        %v2308 = vadd.f32 %v2292, 1.0
        %v2309 = vmax.f32 %v2307, 0.0
        %v2310 = vmax.f32 %v2308, 0.0
        %v2311 = vmin.f32 %v2309, 15.0
        %v2312 = vmin.f32 %v2310, 15.0
        %v2313 = vsub.f32 %v2301, %v2263
        %v2314 = vsub.f32 %v2302, %v2264
        %v2315 = vsub.f32 %v2263, %v2295
        %v2316 = vsub.f32 %v2264, %v2296
        %v2317 = vsub.f32 %v2311, %v2267
        %v2318 = vsub.f32 %v2312, %v2268
        %v2319 = vsub.f32 %v2267, %v2305
        %v2320 = vsub.f32 %v2268, %v2306
        %vm2321 = vcmp.eq.f32.partialorder %v187, %v2295
        %vm2322 = vcmp.eq.f32.partialorder %v187, %v2296
        %vm2323 = vcmp.eq.f32.partialorder %v188, %v2295
        %vm2324 = vcmp.eq.f32.partialorder %v188, %v2296
        %v2325 = vsel %vm2321, %v2313, 0.0
        %v2326 = vsel %vm2322, %v2314, 0.0
        %v2327 = vsel %vm2323, %v2313, 0.0
        %v2328 = vsel %vm2324, %v2314, 0.0
        %vm2329 = vcmp.eq.f32.partialorder %v187, %v2301
        %vm2330 = vcmp.eq.f32.partialorder %v187, %v2302
        %vm2331 = vcmp.eq.f32.partialorder %v188, %v2301
        %vm2332 = vcmp.eq.f32.partialorder %v188, %v2302
        %v2333 = vsel %vm2329, %v2315, 0.0
        %v2334 = vsel %vm2330, %v2316, 0.0
        %v2335 = vsel %vm2331, %v2315, 0.0
        %v2336 = vsel %vm2332, %v2316, 0.0
        %v2337 = vadd.f32 %v2325, %v2333
        %v2338 = vadd.f32 %v2326, %v2334
        %v2339 = vadd.f32 %v2327, %v2335
        %v2340 = vadd.f32 %v2328, %v2336
        %vm2341 = vcmp.eq.f32.partialorder %v187, %v2305
        %vm2342 = vcmp.eq.f32.partialorder %v187, %v2306
        %vm2343 = vcmp.eq.f32.partialorder %v188, %v2305
        %vm2344 = vcmp.eq.f32.partialorder %v188, %v2306
        %v2345 = vsel %vm2341, %v2317, 0.0
        %v2346 = vsel %vm2342, %v2318, 0.0
        %v2347 = vsel %vm2343, %v2317, 0.0
        %v2348 = vsel %vm2344, %v2318, 0.0
        %vm2349 = vcmp.eq.f32.partialorder %v187, %v2311
        %vm2350 = vcmp.eq.f32.partialorder %v187, %v2312
        %vm2351 = vcmp.eq.f32.partialorder %v188, %v2311
        %vm2352 = vcmp.eq.f32.partialorder %v188, %v2312
        %v2353 = vsel %vm2349, %v2319, 0.0
        %v2354 = vsel %vm2350, %v2320, 0.0
        %v2355 = vsel %vm2351, %v2319, 0.0
        %v2356 = vsel %vm2352, %v2320, 0.0
        %v2357 = vadd.f32 %v2345, %v2353
        %v2358 = vadd.f32 %v2346, %v2354
        %v2359 = vadd.f32 %v2347, %v2355
        %v2360 = vadd.f32 %v2348, %v2356
        %2361 = vmatprep.subr.mxu0 0.0
        %2362 = vmatpush1.msra.mxu0 0.0
        %2363 = vmatprep.subr.mxu0 0.0
        %2364 = vmatpush1.msra.mxu0 0.0
        %2365 = vmatprep.subr.mxu0 0.0
        %2366 = vmatpush1.msra.mxu0 0.0
        %2367 = vmatprep.subr.mxu0 0.0
        %2368 = vmatpush1.msra.mxu0 0.0
        %2369 = vmatprep.subr.mxu0 0.0
        %2370 = vmatpush1.msra.mxu0 0.0
        %2371 = vmatprep.subr.mxu0 0.0
        %2372 = vmatpush1.msra.mxu0 0.0
        %2373 = vmatprep.subr.mxu0 0.0
        %2374 = vmatpush1.msra.mxu0 0.0
        %2375 = vmatprep.subr.mxu0 0.0
        %2376 = vmatpush1.msra.mxu0 0.0
        %2377 = vmatprep.subr.mxu0 0.0
        %2378 = vmatpush1.msra.mxu0 0.0
        %2379 = vmatprep.subr.mxu0 0.0
        %2380 = vmatpush1.msra.mxu0 0.0
        %2381 = vmatprep.subr.mxu0 0.0
        %2382 = vmatpush1.msra.mxu0 0.0
        %2383 = vmatprep.subr.mxu0 0.0
        %2384 = vmatpush1.msra.mxu0 0.0
        %2385 = vmatprep.subr.mxu0 0.0
        %2386 = vmatpush1.msra.mxu0 0.0
        %2387 = vmatprep.subr.mxu0 0.0
        %2388 = vmatpush1.msra.mxu0 0.0
        %2389 = vmatprep.subr.mxu0 %v2340
        %2390 = vmatpush1.msra.mxu0 %v2339
        %2391 = vmatprep.subr.mxu0 %v2338
        %2392 = vmatpush1.msra.mxu0 %v2337
        %2393 = vmatprep.subr.mxu0 0.0
        %2394 = vmatpush2.msra.mxu0 0.0
        %2395 = vmatprep.subr.mxu0 0.0
        %2396 = vmatpush2.msra.mxu0 0.0
        %2397 = vmatprep.subr.mxu0 0.0
        %2398 = vmatpush2.msra.mxu0 0.0
        %2399 = vmatprep.subr.mxu0 0.0
        %2400 = vmatpush2.msra.mxu0 0.0
        %2401 = vmatprep.subr.mxu0 0.0
        %2402 = vmatpush2.msra.mxu0 0.0
        %2403 = vmatprep.subr.mxu0 0.0
        %2404 = vmatpush2.msra.mxu0 0.0
        %2405 = vmatprep.subr.mxu0 0.0
        %2406 = vmatpush2.msra.mxu0 0.0
        %2407 = vmatprep.subr.mxu0 0.0
        %2408 = vmatpush2.msra.mxu0 0.0
        %2409 = vmatprep.subr.mxu0 0.0
        %2410 = vmatpush2.msra.mxu0 0.0
        %2411 = vmatprep.subr.mxu0 0.0
        %2412 = vmatpush2.msra.mxu0 0.0
        %2413 = vmatprep.subr.mxu0 0.0
        %2414 = vmatpush2.msra.mxu0 0.0
        %2415 = vmatprep.subr.mxu0 0.0
        %2416 = vmatpush2.msra.mxu0 0.0
        %2417 = vmatprep.subr.mxu0 0.0
        %2418 = vmatpush2.msra.mxu0 0.0
        %2419 = vmatprep.subr.mxu0 0.0
        %2420 = vmatpush2.msra.mxu0 0.0
        %2421 = vmatprep.subr.mxu0 0.0
        %2422 = vmatpush2.msra.mxu0 0.0
        %2423 = vmatprep.subr.mxu0 0.0
        %2424 = vmatpush2.msra.mxu0 0.0
        %2425 = vmatprep.mubr.f32.mxu0 0.0
        %2426 = vmatmul.mubr.f32.gmra.mxu0 %v300
        %v2427 = vpop.f32.mrf.mxu0
        %v2428 = vadd.f32 0.0, %v2427
        %v2429 = vpop.f32.mrf.mxu0
        %v2430 = vadd.f32 0.0, %v2429
        %2431 = vmatprep.mubr.f32.mxu0 0.0
        %2432 = vmatmul.mubr.f32.gmra.mxu0 %v303
        %v2433 = vpop.f32.mrf.mxu0
        %v2434 = vadd.f32 0.0, %v2433
        %v2435 = vpop.f32.mrf.mxu0
        %v2436 = vadd.f32 0.0, %v2435
        %2437 = vmatprep.mubr.f32.mxu0 0.0
        %2438 = vmatmul.mubr.f32.gmra.mxu0 %v306
        %v2439 = vpop.f32.mrf.mxu0
        %v2440 = vadd.f32 0.0, %v2439
        %v2441 = vpop.f32.mrf.mxu0
        %v2442 = vadd.f32 0.0, %v2441
        %2443 = vmatprep.mubr.f32.mxu0 0.0
        %2444 = vmatmul.mubr.f32.gmra.mxu0 %v309
        %v2445 = vpop.f32.mrf.mxu0
        %v2446 = vadd.f32 0.0, %v2445
        %v2447 = vpop.f32.mrf.mxu0
        %v2448 = vadd.f32 0.0, %v2447
        %2449 = vdwg.mxu0
        %v2450 = vmul.f32 %v2428, %v2357
        %v2451 = vmul.f32 %v2430, %v2358
        %v2452 = vmul.f32 %v2434, %v2359
        %v2453 = vmul.f32 %v2436, %v2360
        %v2454 = vadd.f32 %v2450, %v2452
        %v2455 = vrot.slane %v2454, 4
        %v2456 = vadd.f32 %v2454, %v2455
        %v2457 = vrot.slane %v2456, 2
        %v2458 = vadd.f32 %v2456, %v2457
        %v2459 = vrot.slane %v2458, 1
        %v2460 = vadd.f32 %v2458, %v2459
        %v2461 = vadd.f32 %v2451, %v2453
        %v2462 = vrot.slane %v2461, 4
        %v2463 = vadd.f32 %v2461, %v2462
        %v2464 = vrot.slane %v2463, 2
        %v2465 = vadd.f32 %v2463, %v2464
        %v2466 = vrot.slane %v2465, 1
        %v2467 = vadd.f32 %v2465, %v2466
        %v2468 = vmul.f32 %v2440, %v2357
        %v2469 = vmul.f32 %v2442, %v2358
        %v2470 = vmul.f32 %v2446, %v2359
        %v2471 = vmul.f32 %v2448, %v2360
        %v2472 = vadd.f32 %v2468, %v2470
        %v2473 = vrot.slane %v2472, 4
        %v2474 = vadd.f32 %v2472, %v2473
        %v2475 = vrot.slane %v2474, 2
        %v2476 = vadd.f32 %v2474, %v2475
        %v2477 = vrot.slane %v2476, 1
        %v2478 = vadd.f32 %v2476, %v2477
        %v2479 = vadd.f32 %v2469, %v2471
        %v2480 = vrot.slane %v2479, 4
        %v2481 = vadd.f32 %v2479, %v2480
        %v2482 = vrot.slane %v2481, 2
        %v2483 = vadd.f32 %v2481, %v2482
        %v2484 = vrot.slane %v2483, 1
        %v2485 = vadd.f32 %v2483, %v2484
        %v2486 = vfloor.f32 %v2271
        %v2487 = vfloor.f32 %v2272
        %v2488 = vfloor.f32 %v2275
        %v2489 = vfloor.f32 %v2276
        %v2490 = vmax.f32 %v2486, 0.0
        %v2491 = vmax.f32 %v2487, 0.0
        %v2492 = vmin.f32 %v2490, 15.0
        %v2493 = vmin.f32 %v2491, 15.0
        %v2494 = vadd.f32 %v2486, 1.0
        %v2495 = vadd.f32 %v2487, 1.0
        %v2496 = vmax.f32 %v2494, 0.0
        %v2497 = vmax.f32 %v2495, 0.0
        %v2498 = vmin.f32 %v2496, 15.0
        %v2499 = vmin.f32 %v2497, 15.0
        %v2500 = vmax.f32 %v2488, 0.0
        %v2501 = vmax.f32 %v2489, 0.0
        %v2502 = vmin.f32 %v2500, 15.0
        %v2503 = vmin.f32 %v2501, 15.0
        %v2504 = vadd.f32 %v2488, 1.0
        %v2505 = vadd.f32 %v2489, 1.0
        %v2506 = vmax.f32 %v2504, 0.0
        %v2507 = vmax.f32 %v2505, 0.0
        %v2508 = vmin.f32 %v2506, 15.0
        %v2509 = vmin.f32 %v2507, 15.0
        %v2510 = vsub.f32 %v2498, %v2271
        %v2511 = vsub.f32 %v2499, %v2272
        %v2512 = vsub.f32 %v2271, %v2492
        %v2513 = vsub.f32 %v2272, %v2493
        %v2514 = vsub.f32 %v2508, %v2275
        %v2515 = vsub.f32 %v2509, %v2276
        %v2516 = vsub.f32 %v2275, %v2502
        %v2517 = vsub.f32 %v2276, %v2503
        %vm2518 = vcmp.eq.f32.partialorder %v187, %v2492
        %vm2519 = vcmp.eq.f32.partialorder %v187, %v2493
        %vm2520 = vcmp.eq.f32.partialorder %v188, %v2492
        %vm2521 = vcmp.eq.f32.partialorder %v188, %v2493
        %v2522 = vsel %vm2518, %v2510, 0.0
        %v2523 = vsel %vm2519, %v2511, 0.0
        %v2524 = vsel %vm2520, %v2510, 0.0
        %v2525 = vsel %vm2521, %v2511, 0.0
        %vm2526 = vcmp.eq.f32.partialorder %v187, %v2498
        %vm2527 = vcmp.eq.f32.partialorder %v187, %v2499
        %vm2528 = vcmp.eq.f32.partialorder %v188, %v2498
        %vm2529 = vcmp.eq.f32.partialorder %v188, %v2499
        %v2530 = vsel %vm2526, %v2512, 0.0
        %v2531 = vsel %vm2527, %v2513, 0.0
        %v2532 = vsel %vm2528, %v2512, 0.0
        %v2533 = vsel %vm2529, %v2513, 0.0
        %v2534 = vadd.f32 %v2522, %v2530
        %v2535 = vadd.f32 %v2523, %v2531
        %v2536 = vadd.f32 %v2524, %v2532
        %v2537 = vadd.f32 %v2525, %v2533
        %vm2538 = vcmp.eq.f32.partialorder %v187, %v2502
        %vm2539 = vcmp.eq.f32.partialorder %v187, %v2503
        %vm2540 = vcmp.eq.f32.partialorder %v188, %v2502
        %vm2541 = vcmp.eq.f32.partialorder %v188, %v2503
        %v2542 = vsel %vm2538, %v2514, 0.0
        %v2543 = vsel %vm2539, %v2515, 0.0
        %v2544 = vsel %vm2540, %v2514, 0.0
        %v2545 = vsel %vm2541, %v2515, 0.0
        %vm2546 = vcmp.eq.f32.partialorder %v187, %v2508
        %vm2547 = vcmp.eq.f32.partialorder %v187, %v2509
        %vm2548 = vcmp.eq.f32.partialorder %v188, %v2508
        %vm2549 = vcmp.eq.f32.partialorder %v188, %v2509
        %v2550 = vsel %vm2546, %v2516, 0.0
        %v2551 = vsel %vm2547, %v2517, 0.0
        %v2552 = vsel %vm2548, %v2516, 0.0
        %v2553 = vsel %vm2549, %v2517, 0.0
        %v2554 = vadd.f32 %v2542, %v2550
        %v2555 = vadd.f32 %v2543, %v2551
        %v2556 = vadd.f32 %v2544, %v2552
        %v2557 = vadd.f32 %v2545, %v2553
        %2558 = vmatprep.subr.mxu0 0.0
        %2559 = vmatpush1.msra.mxu0 0.0
        %2560 = vmatprep.subr.mxu0 0.0
        %2561 = vmatpush1.msra.mxu0 0.0
        %2562 = vmatprep.subr.mxu0 0.0
        %2563 = vmatpush1.msra.mxu0 0.0
        %2564 = vmatprep.subr.mxu0 0.0
        %2565 = vmatpush1.msra.mxu0 0.0
        %2566 = vmatprep.subr.mxu0 0.0
        %2567 = vmatpush1.msra.mxu0 0.0
        %2568 = vmatprep.subr.mxu0 0.0
        %2569 = vmatpush1.msra.mxu0 0.0
        %2570 = vmatprep.subr.mxu0 0.0
        %2571 = vmatpush1.msra.mxu0 0.0
        %2572 = vmatprep.subr.mxu0 0.0
        %2573 = vmatpush1.msra.mxu0 0.0
        %2574 = vmatprep.subr.mxu0 0.0
        %2575 = vmatpush1.msra.mxu0 0.0
        %2576 = vmatprep.subr.mxu0 0.0
        %2577 = vmatpush1.msra.mxu0 0.0
        %2578 = vmatprep.subr.mxu0 0.0
        %2579 = vmatpush1.msra.mxu0 0.0
        %2580 = vmatprep.subr.mxu0 0.0
        %2581 = vmatpush1.msra.mxu0 0.0
        %2582 = vmatprep.subr.mxu0 0.0
        %2583 = vmatpush1.msra.mxu0 0.0
        %2584 = vmatprep.subr.mxu0 0.0
        %2585 = vmatpush1.msra.mxu0 0.0
        %2586 = vmatprep.subr.mxu0 %v2537
        %2587 = vmatpush1.msra.mxu0 %v2536
        %2588 = vmatprep.subr.mxu0 %v2535
        %2589 = vmatpush1.msra.mxu0 %v2534
        %2590 = vmatprep.subr.mxu0 0.0
        %2591 = vmatpush2.msra.mxu0 0.0
        %2592 = vmatprep.subr.mxu0 0.0
        %2593 = vmatpush2.msra.mxu0 0.0
        %2594 = vmatprep.subr.mxu0 0.0
        %2595 = vmatpush2.msra.mxu0 0.0
        %2596 = vmatprep.subr.mxu0 0.0
        %2597 = vmatpush2.msra.mxu0 0.0
        %2598 = vmatprep.subr.mxu0 0.0
        %2599 = vmatpush2.msra.mxu0 0.0
        %2600 = vmatprep.subr.mxu0 0.0
        %2601 = vmatpush2.msra.mxu0 0.0
        %2602 = vmatprep.subr.mxu0 0.0
        %2603 = vmatpush2.msra.mxu0 0.0
        %2604 = vmatprep.subr.mxu0 0.0
        %2605 = vmatpush2.msra.mxu0 0.0
        %2606 = vmatprep.subr.mxu0 0.0
        %2607 = vmatpush2.msra.mxu0 0.0
        %2608 = vmatprep.subr.mxu0 0.0
        %2609 = vmatpush2.msra.mxu0 0.0
        %2610 = vmatprep.subr.mxu0 0.0
        %2611 = vmatpush2.msra.mxu0 0.0
        %2612 = vmatprep.subr.mxu0 0.0
        %2613 = vmatpush2.msra.mxu0 0.0
        %2614 = vmatprep.subr.mxu0 0.0
        %2615 = vmatpush2.msra.mxu0 0.0
        %2616 = vmatprep.subr.mxu0 0.0
        %2617 = vmatpush2.msra.mxu0 0.0
        %2618 = vmatprep.subr.mxu0 0.0
        %2619 = vmatpush2.msra.mxu0 0.0
        %2620 = vmatprep.subr.mxu0 0.0
        %2621 = vmatpush2.msra.mxu0 0.0
        %2622 = vmatprep.mubr.f32.mxu0 0.0
        %2623 = vmatmul.mubr.f32.gmra.mxu0 %v437
        %v2624 = vpop.f32.mrf.mxu0
        %v2625 = vadd.f32 0.0, %v2624
        %v2626 = vpop.f32.mrf.mxu0
        %v2627 = vadd.f32 0.0, %v2626
        %2628 = vmatprep.mubr.f32.mxu0 0.0
        %2629 = vmatmul.mubr.f32.gmra.mxu0 %v440
        %v2630 = vpop.f32.mrf.mxu0
        %v2631 = vadd.f32 0.0, %v2630
        %v2632 = vpop.f32.mrf.mxu0
        %v2633 = vadd.f32 0.0, %v2632
        %2634 = vmatprep.mubr.f32.mxu0 0.0
        %2635 = vmatmul.mubr.f32.gmra.mxu0 %v443
        %v2636 = vpop.f32.mrf.mxu0
        %v2637 = vadd.f32 0.0, %v2636
        %v2638 = vpop.f32.mrf.mxu0
        %v2639 = vadd.f32 0.0, %v2638
        %2640 = vmatprep.mubr.f32.mxu0 0.0
        %2641 = vmatmul.mubr.f32.gmra.mxu0 %v446
        %v2642 = vpop.f32.mrf.mxu0
        %v2643 = vadd.f32 0.0, %v2642
        %v2644 = vpop.f32.mrf.mxu0
        %v2645 = vadd.f32 0.0, %v2644
        %2646 = vdwg.mxu0
        %v2647 = vmul.f32 %v2625, %v2554
        %v2648 = vmul.f32 %v2627, %v2555
        %v2649 = vmul.f32 %v2631, %v2556
        %v2650 = vmul.f32 %v2633, %v2557
        %v2651 = vadd.f32 %v2647, %v2649
        %v2652 = vrot.slane %v2651, 4
        %v2653 = vadd.f32 %v2651, %v2652
        %v2654 = vrot.slane %v2653, 2
        %v2655 = vadd.f32 %v2653, %v2654
        %v2656 = vrot.slane %v2655, 1
        %v2657 = vadd.f32 %v2655, %v2656
        %v2658 = vadd.f32 %v2648, %v2650
        %v2659 = vrot.slane %v2658, 4
        %v2660 = vadd.f32 %v2658, %v2659
        %v2661 = vrot.slane %v2660, 2
        %v2662 = vadd.f32 %v2660, %v2661
        %v2663 = vrot.slane %v2662, 1
        %v2664 = vadd.f32 %v2662, %v2663
        %v2665 = vmul.f32 %v2637, %v2554
        %v2666 = vmul.f32 %v2639, %v2555
        %v2667 = vmul.f32 %v2643, %v2556
        %v2668 = vmul.f32 %v2645, %v2557
        %v2669 = vadd.f32 %v2665, %v2667
        %v2670 = vrot.slane %v2669, 4
        %v2671 = vadd.f32 %v2669, %v2670
        %v2672 = vrot.slane %v2671, 2
        %v2673 = vadd.f32 %v2671, %v2672
        %v2674 = vrot.slane %v2673, 1
        %v2675 = vadd.f32 %v2673, %v2674
        %v2676 = vadd.f32 %v2666, %v2668
        %v2677 = vrot.slane %v2676, 4
        %v2678 = vadd.f32 %v2676, %v2677
        %v2679 = vrot.slane %v2678, 2
        %v2680 = vadd.f32 %v2678, %v2679
        %v2681 = vrot.slane %v2680, 1
        %v2682 = vadd.f32 %v2680, %v2681
        %v2683 = vmul.f32 %v2460, 0.5
        %v2684 = vmul.f32 %v2467, 0.5
        %v2685 = vadd.f32 %v2263, %v2683
        %v2686 = vadd.f32 %v2264, %v2684
        %v2687 = vmul.f32 %v2478, 0.5
        %v2688 = vmul.f32 %v2485, 0.5
        %v2689 = vadd.f32 %v2267, %v2687
        %v2690 = vadd.f32 %v2268, %v2688
        %v2691 = vmul.f32 %v2657, 0.5
        %v2692 = vmul.f32 %v2664, 0.5
        %v2693 = vadd.f32 %v2271, %v2691
        %v2694 = vadd.f32 %v2272, %v2692
        %v2695 = vmul.f32 %v2675, 0.5
        %v2696 = vmul.f32 %v2682, 0.5
        %v2697 = vadd.f32 %v2275, %v2695
        %v2698 = vadd.f32 %v2276, %v2696
        %v2699 = vsub.f32 %v2685, %v2693
        %v2700 = vsub.f32 %v2686, %v2694
        %v2701 = vsub.f32 %v2689, %v2697
        %v2702 = vsub.f32 %v2690, %v2698
        %v2703 = vmul.f32 %v2699, %v2699
        %v2704 = vmul.f32 %v2700, %v2700
        %v2705 = vadd.f32 %v2287, %v2703
        %v2706 = vadd.f32 %v2288, %v2704
        %v2707 = vmul.f32 %v2701, %v2701
        %v2708 = vmul.f32 %v2702, %v2702
        %v2709 = vadd.f32 %v2705, %v2707
        %v2710 = vadd.f32 %v2706, %v2708
        %v2711 = vfloor.f32 %v2685
        %v2712 = vfloor.f32 %v2686
        %v2713 = vfloor.f32 %v2689
        %v2714 = vfloor.f32 %v2690
        %v2715 = vmax.f32 %v2711, 0.0
        %v2716 = vmax.f32 %v2712, 0.0
        %v2717 = vmin.f32 %v2715, 15.0
        %v2718 = vmin.f32 %v2716, 15.0
        %v2719 = vadd.f32 %v2711, 1.0
        %v2720 = vadd.f32 %v2712, 1.0
        %v2721 = vmax.f32 %v2719, 0.0
        %v2722 = vmax.f32 %v2720, 0.0
        %v2723 = vmin.f32 %v2721, 15.0
        %v2724 = vmin.f32 %v2722, 15.0
        %v2725 = vmax.f32 %v2713, 0.0
        %v2726 = vmax.f32 %v2714, 0.0
        %v2727 = vmin.f32 %v2725, 15.0
        %v2728 = vmin.f32 %v2726, 15.0
        %v2729 = vadd.f32 %v2713, 1.0
        %v2730 = vadd.f32 %v2714, 1.0
        %v2731 = vmax.f32 %v2729, 0.0
        %v2732 = vmax.f32 %v2730, 0.0
        %v2733 = vmin.f32 %v2731, 15.0
        %v2734 = vmin.f32 %v2732, 15.0
        %v2735 = vsub.f32 %v2723, %v2685
        %v2736 = vsub.f32 %v2724, %v2686
        %v2737 = vsub.f32 %v2685, %v2717
        %v2738 = vsub.f32 %v2686, %v2718
        %v2739 = vsub.f32 %v2733, %v2689
        %v2740 = vsub.f32 %v2734, %v2690
        %v2741 = vsub.f32 %v2689, %v2727
        %v2742 = vsub.f32 %v2690, %v2728
        %vm2743 = vcmp.eq.f32.partialorder %v187, %v2717
        %vm2744 = vcmp.eq.f32.partialorder %v187, %v2718
        %vm2745 = vcmp.eq.f32.partialorder %v188, %v2717
        %vm2746 = vcmp.eq.f32.partialorder %v188, %v2718
        %v2747 = vsel %vm2743, %v2735, 0.0
        %v2748 = vsel %vm2744, %v2736, 0.0
        %v2749 = vsel %vm2745, %v2735, 0.0
        %v2750 = vsel %vm2746, %v2736, 0.0
        %vm2751 = vcmp.eq.f32.partialorder %v187, %v2723
        %vm2752 = vcmp.eq.f32.partialorder %v187, %v2724
        %vm2753 = vcmp.eq.f32.partialorder %v188, %v2723
        %vm2754 = vcmp.eq.f32.partialorder %v188, %v2724
        %v2755 = vsel %vm2751, %v2737, 0.0
        %v2756 = vsel %vm2752, %v2738, 0.0
        %v2757 = vsel %vm2753, %v2737, 0.0
        %v2758 = vsel %vm2754, %v2738, 0.0
        %v2759 = vadd.f32 %v2747, %v2755
        %v2760 = vadd.f32 %v2748, %v2756
        %v2761 = vadd.f32 %v2749, %v2757
        %v2762 = vadd.f32 %v2750, %v2758
        %vm2763 = vcmp.eq.f32.partialorder %v187, %v2727
        %vm2764 = vcmp.eq.f32.partialorder %v187, %v2728
        %vm2765 = vcmp.eq.f32.partialorder %v188, %v2727
        %vm2766 = vcmp.eq.f32.partialorder %v188, %v2728
        %v2767 = vsel %vm2763, %v2739, 0.0
        %v2768 = vsel %vm2764, %v2740, 0.0
        %v2769 = vsel %vm2765, %v2739, 0.0
        %v2770 = vsel %vm2766, %v2740, 0.0
        %vm2771 = vcmp.eq.f32.partialorder %v187, %v2733
        %vm2772 = vcmp.eq.f32.partialorder %v187, %v2734
        %vm2773 = vcmp.eq.f32.partialorder %v188, %v2733
        %vm2774 = vcmp.eq.f32.partialorder %v188, %v2734
        %v2775 = vsel %vm2771, %v2741, 0.0
        %v2776 = vsel %vm2772, %v2742, 0.0
        %v2777 = vsel %vm2773, %v2741, 0.0
        %v2778 = vsel %vm2774, %v2742, 0.0
        %v2779 = vadd.f32 %v2767, %v2775
        %v2780 = vadd.f32 %v2768, %v2776
        %v2781 = vadd.f32 %v2769, %v2777
        %v2782 = vadd.f32 %v2770, %v2778
        %2783 = vmatprep.subr.mxu0 0.0
        %2784 = vmatpush1.msra.mxu0 0.0
        %2785 = vmatprep.subr.mxu0 0.0
        %2786 = vmatpush1.msra.mxu0 0.0
        %2787 = vmatprep.subr.mxu0 0.0
        %2788 = vmatpush1.msra.mxu0 0.0
        %2789 = vmatprep.subr.mxu0 0.0
        %2790 = vmatpush1.msra.mxu0 0.0
        %2791 = vmatprep.subr.mxu0 0.0
        %2792 = vmatpush1.msra.mxu0 0.0
        %2793 = vmatprep.subr.mxu0 0.0
        %2794 = vmatpush1.msra.mxu0 0.0
        %2795 = vmatprep.subr.mxu0 0.0
        %2796 = vmatpush1.msra.mxu0 0.0
        %2797 = vmatprep.subr.mxu0 0.0
        %2798 = vmatpush1.msra.mxu0 0.0
        %2799 = vmatprep.subr.mxu0 0.0
        %2800 = vmatpush1.msra.mxu0 0.0
        %2801 = vmatprep.subr.mxu0 0.0
        %2802 = vmatpush1.msra.mxu0 0.0
        %2803 = vmatprep.subr.mxu0 0.0
        %2804 = vmatpush1.msra.mxu0 0.0
        %2805 = vmatprep.subr.mxu0 0.0
        %2806 = vmatpush1.msra.mxu0 0.0
        %2807 = vmatprep.subr.mxu0 0.0
        %2808 = vmatpush1.msra.mxu0 0.0
        %2809 = vmatprep.subr.mxu0 0.0
        %2810 = vmatpush1.msra.mxu0 0.0
        %2811 = vmatprep.subr.mxu0 %v2762
        %2812 = vmatpush1.msra.mxu0 %v2761
        %2813 = vmatprep.subr.mxu0 %v2760
        %2814 = vmatpush1.msra.mxu0 %v2759
        %2815 = vmatprep.subr.mxu0 0.0
        %2816 = vmatpush2.msra.mxu0 0.0
        %2817 = vmatprep.subr.mxu0 0.0
        %2818 = vmatpush2.msra.mxu0 0.0
        %2819 = vmatprep.subr.mxu0 0.0
        %2820 = vmatpush2.msra.mxu0 0.0
        %2821 = vmatprep.subr.mxu0 0.0
        %2822 = vmatpush2.msra.mxu0 0.0
        %2823 = vmatprep.subr.mxu0 0.0
        %2824 = vmatpush2.msra.mxu0 0.0
        %2825 = vmatprep.subr.mxu0 0.0
        %2826 = vmatpush2.msra.mxu0 0.0
        %2827 = vmatprep.subr.mxu0 0.0
        %2828 = vmatpush2.msra.mxu0 0.0
        %2829 = vmatprep.subr.mxu0 0.0
        %2830 = vmatpush2.msra.mxu0 0.0
        %2831 = vmatprep.subr.mxu0 0.0
        %2832 = vmatpush2.msra.mxu0 0.0
        %2833 = vmatprep.subr.mxu0 0.0
        %2834 = vmatpush2.msra.mxu0 0.0
        %2835 = vmatprep.subr.mxu0 0.0
        %2836 = vmatpush2.msra.mxu0 0.0
        %2837 = vmatprep.subr.mxu0 0.0
        %2838 = vmatpush2.msra.mxu0 0.0
        %2839 = vmatprep.subr.mxu0 0.0
        %2840 = vmatpush2.msra.mxu0 0.0
        %2841 = vmatprep.subr.mxu0 0.0
        %2842 = vmatpush2.msra.mxu0 0.0
        %2843 = vmatprep.subr.mxu0 0.0
        %2844 = vmatpush2.msra.mxu0 0.0
        %2845 = vmatprep.subr.mxu0 0.0
        %2846 = vmatpush2.msra.mxu0 0.0
        %2847 = vmatprep.mubr.f32.mxu0 0.0
        %2848 = vmatmul.mubr.f32.gmra.mxu0 %v300
        %v2849 = vpop.f32.mrf.mxu0
        %v2850 = vadd.f32 0.0, %v2849
        %v2851 = vpop.f32.mrf.mxu0
        %v2852 = vadd.f32 0.0, %v2851
        %2853 = vmatprep.mubr.f32.mxu0 0.0
        %2854 = vmatmul.mubr.f32.gmra.mxu0 %v303
        %v2855 = vpop.f32.mrf.mxu0
        %v2856 = vadd.f32 0.0, %v2855
        %v2857 = vpop.f32.mrf.mxu0
        %v2858 = vadd.f32 0.0, %v2857
        %2859 = vmatprep.mubr.f32.mxu0 0.0
        %2860 = vmatmul.mubr.f32.gmra.mxu0 %v306
        %v2861 = vpop.f32.mrf.mxu0
        %v2862 = vadd.f32 0.0, %v2861
        %v2863 = vpop.f32.mrf.mxu0
        %v2864 = vadd.f32 0.0, %v2863
        %2865 = vmatprep.mubr.f32.mxu0 0.0
        %2866 = vmatmul.mubr.f32.gmra.mxu0 %v309
        %v2867 = vpop.f32.mrf.mxu0
        %v2868 = vadd.f32 0.0, %v2867
        %v2869 = vpop.f32.mrf.mxu0
        %v2870 = vadd.f32 0.0, %v2869
        %2871 = vdwg.mxu0
        %v2872 = vmul.f32 %v2850, %v2779
        %v2873 = vmul.f32 %v2852, %v2780
        %v2874 = vmul.f32 %v2856, %v2781
        %v2875 = vmul.f32 %v2858, %v2782
        %v2876 = vadd.f32 %v2872, %v2874
        %v2877 = vrot.slane %v2876, 4
        %v2878 = vadd.f32 %v2876, %v2877
        %v2879 = vrot.slane %v2878, 2
        %v2880 = vadd.f32 %v2878, %v2879
        %v2881 = vrot.slane %v2880, 1
        %v2882 = vadd.f32 %v2880, %v2881
        %v2883 = vadd.f32 %v2873, %v2875
        %v2884 = vrot.slane %v2883, 4
        %v2885 = vadd.f32 %v2883, %v2884
        %v2886 = vrot.slane %v2885, 2
        %v2887 = vadd.f32 %v2885, %v2886
        %v2888 = vrot.slane %v2887, 1
        %v2889 = vadd.f32 %v2887, %v2888
        %v2890 = vmul.f32 %v2862, %v2779
        %v2891 = vmul.f32 %v2864, %v2780
        %v2892 = vmul.f32 %v2868, %v2781
        %v2893 = vmul.f32 %v2870, %v2782
        %v2894 = vadd.f32 %v2890, %v2892
        %v2895 = vrot.slane %v2894, 4
        %v2896 = vadd.f32 %v2894, %v2895
        %v2897 = vrot.slane %v2896, 2
        %v2898 = vadd.f32 %v2896, %v2897
        %v2899 = vrot.slane %v2898, 1
        %v2900 = vadd.f32 %v2898, %v2899
        %v2901 = vadd.f32 %v2891, %v2893
        %v2902 = vrot.slane %v2901, 4
        %v2903 = vadd.f32 %v2901, %v2902
        %v2904 = vrot.slane %v2903, 2
        %v2905 = vadd.f32 %v2903, %v2904
        %v2906 = vrot.slane %v2905, 1
        %v2907 = vadd.f32 %v2905, %v2906
        %v2908 = vfloor.f32 %v2693
        %v2909 = vfloor.f32 %v2694
        %v2910 = vfloor.f32 %v2697
        %v2911 = vfloor.f32 %v2698
        %v2912 = vmax.f32 %v2908, 0.0
        %v2913 = vmax.f32 %v2909, 0.0
        %v2914 = vmin.f32 %v2912, 15.0
        %v2915 = vmin.f32 %v2913, 15.0
        %v2916 = vadd.f32 %v2908, 1.0
        %v2917 = vadd.f32 %v2909, 1.0
        %v2918 = vmax.f32 %v2916, 0.0
        %v2919 = vmax.f32 %v2917, 0.0
        %v2920 = vmin.f32 %v2918, 15.0
        %v2921 = vmin.f32 %v2919, 15.0
        %v2922 = vmax.f32 %v2910, 0.0
        %v2923 = vmax.f32 %v2911, 0.0
        %v2924 = vmin.f32 %v2922, 15.0
        %v2925 = vmin.f32 %v2923, 15.0
        %v2926 = vadd.f32 %v2910, 1.0
        %v2927 = vadd.f32 %v2911, 1.0
        %v2928 = vmax.f32 %v2926, 0.0
        %v2929 = vmax.f32 %v2927, 0.0
        %v2930 = vmin.f32 %v2928, 15.0
        %v2931 = vmin.f32 %v2929, 15.0
        %v2932 = vsub.f32 %v2920, %v2693
        %v2933 = vsub.f32 %v2921, %v2694
        %v2934 = vsub.f32 %v2693, %v2914
        %v2935 = vsub.f32 %v2694, %v2915
        %v2936 = vsub.f32 %v2930, %v2697
        %v2937 = vsub.f32 %v2931, %v2698
        %v2938 = vsub.f32 %v2697, %v2924
        %v2939 = vsub.f32 %v2698, %v2925
        %vm2940 = vcmp.eq.f32.partialorder %v187, %v2914
        %vm2941 = vcmp.eq.f32.partialorder %v187, %v2915
        %vm2942 = vcmp.eq.f32.partialorder %v188, %v2914
        %vm2943 = vcmp.eq.f32.partialorder %v188, %v2915
        %v2944 = vsel %vm2940, %v2932, 0.0
        %v2945 = vsel %vm2941, %v2933, 0.0
        %v2946 = vsel %vm2942, %v2932, 0.0
        %v2947 = vsel %vm2943, %v2933, 0.0
        %vm2948 = vcmp.eq.f32.partialorder %v187, %v2920
        %vm2949 = vcmp.eq.f32.partialorder %v187, %v2921
        %vm2950 = vcmp.eq.f32.partialorder %v188, %v2920
        %vm2951 = vcmp.eq.f32.partialorder %v188, %v2921
        %v2952 = vsel %vm2948, %v2934, 0.0
        %v2953 = vsel %vm2949, %v2935, 0.0
        %v2954 = vsel %vm2950, %v2934, 0.0
        %v2955 = vsel %vm2951, %v2935, 0.0
        %v2956 = vadd.f32 %v2944, %v2952
        %v2957 = vadd.f32 %v2945, %v2953
        %v2958 = vadd.f32 %v2946, %v2954
        %v2959 = vadd.f32 %v2947, %v2955
        %vm2960 = vcmp.eq.f32.partialorder %v187, %v2924
        %vm2961 = vcmp.eq.f32.partialorder %v187, %v2925
        %vm2962 = vcmp.eq.f32.partialorder %v188, %v2924
        %vm2963 = vcmp.eq.f32.partialorder %v188, %v2925
        %v2964 = vsel %vm2960, %v2936, 0.0
        %v2965 = vsel %vm2961, %v2937, 0.0
        %v2966 = vsel %vm2962, %v2936, 0.0
        %v2967 = vsel %vm2963, %v2937, 0.0
        %vm2968 = vcmp.eq.f32.partialorder %v187, %v2930
        %vm2969 = vcmp.eq.f32.partialorder %v187, %v2931
        %vm2970 = vcmp.eq.f32.partialorder %v188, %v2930
        %vm2971 = vcmp.eq.f32.partialorder %v188, %v2931
        %v2972 = vsel %vm2968, %v2938, 0.0
        %v2973 = vsel %vm2969, %v2939, 0.0
        %v2974 = vsel %vm2970, %v2938, 0.0
        %v2975 = vsel %vm2971, %v2939, 0.0
        %v2976 = vadd.f32 %v2964, %v2972
        %v2977 = vadd.f32 %v2965, %v2973
        %v2978 = vadd.f32 %v2966, %v2974
        %v2979 = vadd.f32 %v2967, %v2975
        %2980 = vmatprep.subr.mxu0 0.0
        %2981 = vmatpush1.msra.mxu0 0.0
        %2982 = vmatprep.subr.mxu0 0.0
        %2983 = vmatpush1.msra.mxu0 0.0
        %2984 = vmatprep.subr.mxu0 0.0
        %2985 = vmatpush1.msra.mxu0 0.0
        %2986 = vmatprep.subr.mxu0 0.0
        %2987 = vmatpush1.msra.mxu0 0.0
        %2988 = vmatprep.subr.mxu0 0.0
        %2989 = vmatpush1.msra.mxu0 0.0
        %2990 = vmatprep.subr.mxu0 0.0
        %2991 = vmatpush1.msra.mxu0 0.0
        %2992 = vmatprep.subr.mxu0 0.0
        %2993 = vmatpush1.msra.mxu0 0.0
        %2994 = vmatprep.subr.mxu0 0.0
        %2995 = vmatpush1.msra.mxu0 0.0
        %2996 = vmatprep.subr.mxu0 0.0
        %2997 = vmatpush1.msra.mxu0 0.0
        %2998 = vmatprep.subr.mxu0 0.0
        %2999 = vmatpush1.msra.mxu0 0.0
        %3000 = vmatprep.subr.mxu0 0.0
        %3001 = vmatpush1.msra.mxu0 0.0
        %3002 = vmatprep.subr.mxu0 0.0
        %3003 = vmatpush1.msra.mxu0 0.0
        %3004 = vmatprep.subr.mxu0 0.0
        %3005 = vmatpush1.msra.mxu0 0.0
        %3006 = vmatprep.subr.mxu0 0.0
        %3007 = vmatpush1.msra.mxu0 0.0
        %3008 = vmatprep.subr.mxu0 %v2959
        %3009 = vmatpush1.msra.mxu0 %v2958
        %3010 = vmatprep.subr.mxu0 %v2957
        %3011 = vmatpush1.msra.mxu0 %v2956
        %3012 = vmatprep.subr.mxu0 0.0
        %3013 = vmatpush2.msra.mxu0 0.0
        %3014 = vmatprep.subr.mxu0 0.0
        %3015 = vmatpush2.msra.mxu0 0.0
        %3016 = vmatprep.subr.mxu0 0.0
        %3017 = vmatpush2.msra.mxu0 0.0
        %3018 = vmatprep.subr.mxu0 0.0
        %3019 = vmatpush2.msra.mxu0 0.0
        %3020 = vmatprep.subr.mxu0 0.0
        %3021 = vmatpush2.msra.mxu0 0.0
        %3022 = vmatprep.subr.mxu0 0.0
        %3023 = vmatpush2.msra.mxu0 0.0
        %3024 = vmatprep.subr.mxu0 0.0
        %3025 = vmatpush2.msra.mxu0 0.0
        %3026 = vmatprep.subr.mxu0 0.0
        %3027 = vmatpush2.msra.mxu0 0.0
        %3028 = vmatprep.subr.mxu0 0.0
        %3029 = vmatpush2.msra.mxu0 0.0
        %3030 = vmatprep.subr.mxu0 0.0
        %3031 = vmatpush2.msra.mxu0 0.0
        %3032 = vmatprep.subr.mxu0 0.0
        %3033 = vmatpush2.msra.mxu0 0.0
        %3034 = vmatprep.subr.mxu0 0.0
        %3035 = vmatpush2.msra.mxu0 0.0
        %3036 = vmatprep.subr.mxu0 0.0
        %3037 = vmatpush2.msra.mxu0 0.0
        %3038 = vmatprep.subr.mxu0 0.0
        %3039 = vmatpush2.msra.mxu0 0.0
        %3040 = vmatprep.subr.mxu0 0.0
        %3041 = vmatpush2.msra.mxu0 0.0
        %3042 = vmatprep.subr.mxu0 0.0
        %3043 = vmatpush2.msra.mxu0 0.0
        %3044 = vmatprep.mubr.f32.mxu0 0.0
        %3045 = vmatmul.mubr.f32.gmra.mxu0 %v437
        %v3046 = vpop.f32.mrf.mxu0
        %v3047 = vadd.f32 0.0, %v3046
        %v3048 = vpop.f32.mrf.mxu0
        %v3049 = vadd.f32 0.0, %v3048
        %3050 = vmatprep.mubr.f32.mxu0 0.0
        %3051 = vmatmul.mubr.f32.gmra.mxu0 %v440
        %v3052 = vpop.f32.mrf.mxu0
        %v3053 = vadd.f32 0.0, %v3052
        %v3054 = vpop.f32.mrf.mxu0
        %v3055 = vadd.f32 0.0, %v3054
        %3056 = vmatprep.mubr.f32.mxu0 0.0
        %3057 = vmatmul.mubr.f32.gmra.mxu0 %v443
        %v3058 = vpop.f32.mrf.mxu0
        %v3059 = vadd.f32 0.0, %v3058
        %v3060 = vpop.f32.mrf.mxu0
        %v3061 = vadd.f32 0.0, %v3060
        %3062 = vmatprep.mubr.f32.mxu0 0.0
        %3063 = vmatmul.mubr.f32.gmra.mxu0 %v446
        %v3064 = vpop.f32.mrf.mxu0
        %v3065 = vadd.f32 0.0, %v3064
        %v3066 = vpop.f32.mrf.mxu0
        %v3067 = vadd.f32 0.0, %v3066
        %3068 = vdwg.mxu0
        %v3069 = vmul.f32 %v3047, %v2976
        %v3070 = vmul.f32 %v3049, %v2977
        %v3071 = vmul.f32 %v3053, %v2978
        %v3072 = vmul.f32 %v3055, %v2979
        %v3073 = vadd.f32 %v3069, %v3071
        %v3074 = vrot.slane %v3073, 4
        %v3075 = vadd.f32 %v3073, %v3074
        %v3076 = vrot.slane %v3075, 2
        %v3077 = vadd.f32 %v3075, %v3076
        %v3078 = vrot.slane %v3077, 1
        %v3079 = vadd.f32 %v3077, %v3078
        %v3080 = vadd.f32 %v3070, %v3072
        %v3081 = vrot.slane %v3080, 4
        %v3082 = vadd.f32 %v3080, %v3081
        %v3083 = vrot.slane %v3082, 2
        %v3084 = vadd.f32 %v3082, %v3083
        %v3085 = vrot.slane %v3084, 1
        %v3086 = vadd.f32 %v3084, %v3085
        %v3087 = vmul.f32 %v3059, %v2976
        %v3088 = vmul.f32 %v3061, %v2977
        %v3089 = vmul.f32 %v3065, %v2978
        %v3090 = vmul.f32 %v3067, %v2979
        %v3091 = vadd.f32 %v3087, %v3089
        %v3092 = vrot.slane %v3091, 4
        %v3093 = vadd.f32 %v3091, %v3092
        %v3094 = vrot.slane %v3093, 2
        %v3095 = vadd.f32 %v3093, %v3094
        %v3096 = vrot.slane %v3095, 1
        %v3097 = vadd.f32 %v3095, %v3096
        %v3098 = vadd.f32 %v3088, %v3090
        %v3099 = vrot.slane %v3098, 4
        %v3100 = vadd.f32 %v3098, %v3099
        %v3101 = vrot.slane %v3100, 2
        %v3102 = vadd.f32 %v3100, %v3101
        %v3103 = vrot.slane %v3102, 1
        %v3104 = vadd.f32 %v3102, %v3103
        %v3105 = vmul.f32 %v2882, 0.5
        %v3106 = vmul.f32 %v2889, 0.5
        %v3107 = vadd.f32 %v2685, %v3105
        %v3108 = vadd.f32 %v2686, %v3106
        %v3109 = vmul.f32 %v2900, 0.5
        %v3110 = vmul.f32 %v2907, 0.5
        %v3111 = vadd.f32 %v2689, %v3109
        %v3112 = vadd.f32 %v2690, %v3110
        %v3113 = vmul.f32 %v3079, 0.5
        %v3114 = vmul.f32 %v3086, 0.5
        %v3115 = vadd.f32 %v2693, %v3113
        %v3116 = vadd.f32 %v2694, %v3114
        %v3117 = vmul.f32 %v3097, 0.5
        %v3118 = vmul.f32 %v3104, 0.5
        %v3119 = vadd.f32 %v2697, %v3117
        %v3120 = vadd.f32 %v2698, %v3118
        %v3121 = vsub.f32 %v3107, %v3115
        %v3122 = vsub.f32 %v3108, %v3116
        %v3123 = vsub.f32 %v3111, %v3119
        %v3124 = vsub.f32 %v3112, %v3120
        %v3125 = vmul.f32 %v3121, %v3121
        %v3126 = vmul.f32 %v3122, %v3122
        %v3127 = vadd.f32 %v2709, %v3125
        %v3128 = vadd.f32 %v2710, %v3126
        %v3129 = vmul.f32 %v3123, %v3123
        %v3130 = vmul.f32 %v3124, %v3124
        %v3131 = vadd.f32 %v3127, %v3129
        %v3132 = vadd.f32 %v3128, %v3130
        %v3133 = vfloor.f32 %v3107
        %v3134 = vfloor.f32 %v3108
        %v3135 = vfloor.f32 %v3111
        %v3136 = vfloor.f32 %v3112
        %v3137 = vmax.f32 %v3133, 0.0
        %v3138 = vmax.f32 %v3134, 0.0
        %v3139 = vmin.f32 %v3137, 15.0
        %v3140 = vmin.f32 %v3138, 15.0
        %v3141 = vadd.f32 %v3133, 1.0
        %v3142 = vadd.f32 %v3134, 1.0
        %v3143 = vmax.f32 %v3141, 0.0
        %v3144 = vmax.f32 %v3142, 0.0
        %v3145 = vmin.f32 %v3143, 15.0
        %v3146 = vmin.f32 %v3144, 15.0
        %v3147 = vmax.f32 %v3135, 0.0
        %v3148 = vmax.f32 %v3136, 0.0
        %v3149 = vmin.f32 %v3147, 15.0
        %v3150 = vmin.f32 %v3148, 15.0
        %v3151 = vadd.f32 %v3135, 1.0
        %v3152 = vadd.f32 %v3136, 1.0
        %v3153 = vmax.f32 %v3151, 0.0
        %v3154 = vmax.f32 %v3152, 0.0
        %v3155 = vmin.f32 %v3153, 15.0
        %v3156 = vmin.f32 %v3154, 15.0
        %v3157 = vsub.f32 %v3145, %v3107
        %v3158 = vsub.f32 %v3146, %v3108
        %v3159 = vsub.f32 %v3107, %v3139
        %v3160 = vsub.f32 %v3108, %v3140
        %v3161 = vsub.f32 %v3155, %v3111
        %v3162 = vsub.f32 %v3156, %v3112
        %v3163 = vsub.f32 %v3111, %v3149
        %v3164 = vsub.f32 %v3112, %v3150
        %vm3165 = vcmp.eq.f32.partialorder %v187, %v3139
        %vm3166 = vcmp.eq.f32.partialorder %v187, %v3140
        %vm3167 = vcmp.eq.f32.partialorder %v188, %v3139
        %vm3168 = vcmp.eq.f32.partialorder %v188, %v3140
        %v3169 = vsel %vm3165, %v3157, 0.0
        %v3170 = vsel %vm3166, %v3158, 0.0
        %v3171 = vsel %vm3167, %v3157, 0.0
        %v3172 = vsel %vm3168, %v3158, 0.0
        %vm3173 = vcmp.eq.f32.partialorder %v187, %v3145
        %vm3174 = vcmp.eq.f32.partialorder %v187, %v3146
        %vm3175 = vcmp.eq.f32.partialorder %v188, %v3145
        %vm3176 = vcmp.eq.f32.partialorder %v188, %v3146
        %v3177 = vsel %vm3173, %v3159, 0.0
        %v3178 = vsel %vm3174, %v3160, 0.0
        %v3179 = vsel %vm3175, %v3159, 0.0
        %v3180 = vsel %vm3176, %v3160, 0.0
        %v3181 = vadd.f32 %v3169, %v3177
        %v3182 = vadd.f32 %v3170, %v3178
        %v3183 = vadd.f32 %v3171, %v3179
        %v3184 = vadd.f32 %v3172, %v3180
        %vm3185 = vcmp.eq.f32.partialorder %v187, %v3149
        %vm3186 = vcmp.eq.f32.partialorder %v187, %v3150
        %vm3187 = vcmp.eq.f32.partialorder %v188, %v3149
        %vm3188 = vcmp.eq.f32.partialorder %v188, %v3150
        %v3189 = vsel %vm3185, %v3161, 0.0
        %v3190 = vsel %vm3186, %v3162, 0.0
        %v3191 = vsel %vm3187, %v3161, 0.0
        %v3192 = vsel %vm3188, %v3162, 0.0
        %vm3193 = vcmp.eq.f32.partialorder %v187, %v3155
        %vm3194 = vcmp.eq.f32.partialorder %v187, %v3156
        %vm3195 = vcmp.eq.f32.partialorder %v188, %v3155
        %vm3196 = vcmp.eq.f32.partialorder %v188, %v3156
        %v3197 = vsel %vm3193, %v3163, 0.0
        %v3198 = vsel %vm3194, %v3164, 0.0
        %v3199 = vsel %vm3195, %v3163, 0.0
        %v3200 = vsel %vm3196, %v3164, 0.0
        %v3201 = vadd.f32 %v3189, %v3197
        %v3202 = vadd.f32 %v3190, %v3198
        %v3203 = vadd.f32 %v3191, %v3199
        %v3204 = vadd.f32 %v3192, %v3200
        %3205 = vmatprep.subr.mxu0 0.0
        %3206 = vmatpush1.msra.mxu0 0.0
        %3207 = vmatprep.subr.mxu0 0.0
        %3208 = vmatpush1.msra.mxu0 0.0
        %3209 = vmatprep.subr.mxu0 0.0
        %3210 = vmatpush1.msra.mxu0 0.0
        %3211 = vmatprep.subr.mxu0 0.0
        %3212 = vmatpush1.msra.mxu0 0.0
        %3213 = vmatprep.subr.mxu0 0.0
        %3214 = vmatpush1.msra.mxu0 0.0
        %3215 = vmatprep.subr.mxu0 0.0
        %3216 = vmatpush1.msra.mxu0 0.0
        %3217 = vmatprep.subr.mxu0 0.0
        %3218 = vmatpush1.msra.mxu0 0.0
        %3219 = vmatprep.subr.mxu0 0.0
        %3220 = vmatpush1.msra.mxu0 0.0
        %3221 = vmatprep.subr.mxu0 0.0
        %3222 = vmatpush1.msra.mxu0 0.0
        %3223 = vmatprep.subr.mxu0 0.0
        %3224 = vmatpush1.msra.mxu0 0.0
        %3225 = vmatprep.subr.mxu0 0.0
        %3226 = vmatpush1.msra.mxu0 0.0
        %3227 = vmatprep.subr.mxu0 0.0
        %3228 = vmatpush1.msra.mxu0 0.0
        %3229 = vmatprep.subr.mxu0 0.0
        %3230 = vmatpush1.msra.mxu0 0.0
        %3231 = vmatprep.subr.mxu0 0.0
        %3232 = vmatpush1.msra.mxu0 0.0
        %3233 = vmatprep.subr.mxu0 %v3184
        %3234 = vmatpush1.msra.mxu0 %v3183
        %3235 = vmatprep.subr.mxu0 %v3182
        %3236 = vmatpush1.msra.mxu0 %v3181
        %3237 = vmatprep.subr.mxu0 0.0
        %3238 = vmatpush2.msra.mxu0 0.0
        %3239 = vmatprep.subr.mxu0 0.0
        %3240 = vmatpush2.msra.mxu0 0.0
        %3241 = vmatprep.subr.mxu0 0.0
        %3242 = vmatpush2.msra.mxu0 0.0
        %3243 = vmatprep.subr.mxu0 0.0
        %3244 = vmatpush2.msra.mxu0 0.0
        %3245 = vmatprep.subr.mxu0 0.0
        %3246 = vmatpush2.msra.mxu0 0.0
        %3247 = vmatprep.subr.mxu0 0.0
        %3248 = vmatpush2.msra.mxu0 0.0
        %3249 = vmatprep.subr.mxu0 0.0
        %3250 = vmatpush2.msra.mxu0 0.0
        %3251 = vmatprep.subr.mxu0 0.0
        %3252 = vmatpush2.msra.mxu0 0.0
        %3253 = vmatprep.subr.mxu0 0.0
        %3254 = vmatpush2.msra.mxu0 0.0
        %3255 = vmatprep.subr.mxu0 0.0
        %3256 = vmatpush2.msra.mxu0 0.0
        %3257 = vmatprep.subr.mxu0 0.0
        %3258 = vmatpush2.msra.mxu0 0.0
        %3259 = vmatprep.subr.mxu0 0.0
        %3260 = vmatpush2.msra.mxu0 0.0
        %3261 = vmatprep.subr.mxu0 0.0
        %3262 = vmatpush2.msra.mxu0 0.0
        %3263 = vmatprep.subr.mxu0 0.0
        %3264 = vmatpush2.msra.mxu0 0.0
        %3265 = vmatprep.subr.mxu0 0.0
        %3266 = vmatpush2.msra.mxu0 0.0
        %3267 = vmatprep.subr.mxu0 0.0
        %3268 = vmatpush2.msra.mxu0 0.0
        %3269 = vmatprep.mubr.f32.mxu0 0.0
        %3270 = vmatmul.mubr.f32.gmra.mxu0 %v300
        %v3271 = vpop.f32.mrf.mxu0
        %v3272 = vadd.f32 0.0, %v3271
        %v3273 = vpop.f32.mrf.mxu0
        %v3274 = vadd.f32 0.0, %v3273
        %3275 = vmatprep.mubr.f32.mxu0 0.0
        %3276 = vmatmul.mubr.f32.gmra.mxu0 %v303
        %v3277 = vpop.f32.mrf.mxu0
        %v3278 = vadd.f32 0.0, %v3277
        %v3279 = vpop.f32.mrf.mxu0
        %v3280 = vadd.f32 0.0, %v3279
        %3281 = vmatprep.mubr.f32.mxu0 0.0
        %3282 = vmatmul.mubr.f32.gmra.mxu0 %v306
        %v3283 = vpop.f32.mrf.mxu0
        %v3284 = vadd.f32 0.0, %v3283
        %v3285 = vpop.f32.mrf.mxu0
        %v3286 = vadd.f32 0.0, %v3285
        %3287 = vmatprep.mubr.f32.mxu0 0.0
        %3288 = vmatmul.mubr.f32.gmra.mxu0 %v309
        %v3289 = vpop.f32.mrf.mxu0
        %v3290 = vadd.f32 0.0, %v3289
        %v3291 = vpop.f32.mrf.mxu0
        %v3292 = vadd.f32 0.0, %v3291
        %3293 = vdwg.mxu0
        %v3294 = vmul.f32 %v3272, %v3201
        %v3295 = vmul.f32 %v3274, %v3202
        %v3296 = vmul.f32 %v3278, %v3203
        %v3297 = vmul.f32 %v3280, %v3204
        %v3298 = vadd.f32 %v3294, %v3296
        %v3299 = vrot.slane %v3298, 4
        %v3300 = vadd.f32 %v3298, %v3299
        %v3301 = vrot.slane %v3300, 2
        %v3302 = vadd.f32 %v3300, %v3301
        %v3303 = vrot.slane %v3302, 1
        %v3304 = vadd.f32 %v3302, %v3303
        %v3305 = vadd.f32 %v3295, %v3297
        %v3306 = vrot.slane %v3305, 4
        %v3307 = vadd.f32 %v3305, %v3306
        %v3308 = vrot.slane %v3307, 2
        %v3309 = vadd.f32 %v3307, %v3308
        %v3310 = vrot.slane %v3309, 1
        %v3311 = vadd.f32 %v3309, %v3310
        %v3312 = vmul.f32 %v3284, %v3201
        %v3313 = vmul.f32 %v3286, %v3202
        %v3314 = vmul.f32 %v3290, %v3203
        %v3315 = vmul.f32 %v3292, %v3204
        %v3316 = vadd.f32 %v3312, %v3314
        %v3317 = vrot.slane %v3316, 4
        %v3318 = vadd.f32 %v3316, %v3317
        %v3319 = vrot.slane %v3318, 2
        %v3320 = vadd.f32 %v3318, %v3319
        %v3321 = vrot.slane %v3320, 1
        %v3322 = vadd.f32 %v3320, %v3321
        %v3323 = vadd.f32 %v3313, %v3315
        %v3324 = vrot.slane %v3323, 4
        %v3325 = vadd.f32 %v3323, %v3324
        %v3326 = vrot.slane %v3325, 2
        %v3327 = vadd.f32 %v3325, %v3326
        %v3328 = vrot.slane %v3327, 1
        %v3329 = vadd.f32 %v3327, %v3328
        %v3330 = vfloor.f32 %v3115
        %v3331 = vfloor.f32 %v3116
        %v3332 = vfloor.f32 %v3119
        %v3333 = vfloor.f32 %v3120
        %v3334 = vmax.f32 %v3330, 0.0
        %v3335 = vmax.f32 %v3331, 0.0
        %v3336 = vmin.f32 %v3334, 15.0
        %v3337 = vmin.f32 %v3335, 15.0
        %v3338 = vadd.f32 %v3330, 1.0
        %v3339 = vadd.f32 %v3331, 1.0
        %v3340 = vmax.f32 %v3338, 0.0
        %v3341 = vmax.f32 %v3339, 0.0
        %v3342 = vmin.f32 %v3340, 15.0
        %v3343 = vmin.f32 %v3341, 15.0
        %v3344 = vmax.f32 %v3332, 0.0
        %v3345 = vmax.f32 %v3333, 0.0
        %v3346 = vmin.f32 %v3344, 15.0
        %v3347 = vmin.f32 %v3345, 15.0
        %v3348 = vadd.f32 %v3332, 1.0
        %v3349 = vadd.f32 %v3333, 1.0
        %v3350 = vmax.f32 %v3348, 0.0
        %v3351 = vmax.f32 %v3349, 0.0
        %v3352 = vmin.f32 %v3350, 15.0
        %v3353 = vmin.f32 %v3351, 15.0
        %v3354 = vsub.f32 %v3342, %v3115
        %v3355 = vsub.f32 %v3343, %v3116
        %v3356 = vsub.f32 %v3115, %v3336
        %v3357 = vsub.f32 %v3116, %v3337
        %v3358 = vsub.f32 %v3352, %v3119
        %v3359 = vsub.f32 %v3353, %v3120
        %v3360 = vsub.f32 %v3119, %v3346
        %v3361 = vsub.f32 %v3120, %v3347
        %vm3362 = vcmp.eq.f32.partialorder %v187, %v3336
        %vm3363 = vcmp.eq.f32.partialorder %v187, %v3337
        %vm3364 = vcmp.eq.f32.partialorder %v188, %v3336
        %vm3365 = vcmp.eq.f32.partialorder %v188, %v3337
        %v3366 = vsel %vm3362, %v3354, 0.0
        %v3367 = vsel %vm3363, %v3355, 0.0
        %v3368 = vsel %vm3364, %v3354, 0.0
        %v3369 = vsel %vm3365, %v3355, 0.0
        %vm3370 = vcmp.eq.f32.partialorder %v187, %v3342
        %vm3371 = vcmp.eq.f32.partialorder %v187, %v3343
        %vm3372 = vcmp.eq.f32.partialorder %v188, %v3342
        %vm3373 = vcmp.eq.f32.partialorder %v188, %v3343
        %v3374 = vsel %vm3370, %v3356, 0.0
        %v3375 = vsel %vm3371, %v3357, 0.0
        %v3376 = vsel %vm3372, %v3356, 0.0
        %v3377 = vsel %vm3373, %v3357, 0.0
        %v3378 = vadd.f32 %v3366, %v3374
        %v3379 = vadd.f32 %v3367, %v3375
        %v3380 = vadd.f32 %v3368, %v3376
        %v3381 = vadd.f32 %v3369, %v3377
        %vm3382 = vcmp.eq.f32.partialorder %v187, %v3346
        %vm3383 = vcmp.eq.f32.partialorder %v187, %v3347
        %vm3384 = vcmp.eq.f32.partialorder %v188, %v3346
        %vm3385 = vcmp.eq.f32.partialorder %v188, %v3347
        %v3386 = vsel %vm3382, %v3358, 0.0
        %v3387 = vsel %vm3383, %v3359, 0.0
        %v3388 = vsel %vm3384, %v3358, 0.0
        %v3389 = vsel %vm3385, %v3359, 0.0
        %vm3390 = vcmp.eq.f32.partialorder %v187, %v3352
        %vm3391 = vcmp.eq.f32.partialorder %v187, %v3353
        %vm3392 = vcmp.eq.f32.partialorder %v188, %v3352
        %vm3393 = vcmp.eq.f32.partialorder %v188, %v3353
        %v3394 = vsel %vm3390, %v3360, 0.0
        %v3395 = vsel %vm3391, %v3361, 0.0
        %v3396 = vsel %vm3392, %v3360, 0.0
        %v3397 = vsel %vm3393, %v3361, 0.0
        %v3398 = vadd.f32 %v3386, %v3394
        %v3399 = vadd.f32 %v3387, %v3395
        %v3400 = vadd.f32 %v3388, %v3396
        %v3401 = vadd.f32 %v3389, %v3397
        %3402 = vmatprep.subr.mxu0 0.0
        %3403 = vmatpush1.msra.mxu0 0.0
        %3404 = vmatprep.subr.mxu0 0.0
        %3405 = vmatpush1.msra.mxu0 0.0
        %3406 = vmatprep.subr.mxu0 0.0
        %3407 = vmatpush1.msra.mxu0 0.0
        %3408 = vmatprep.subr.mxu0 0.0
        %3409 = vmatpush1.msra.mxu0 0.0
        %3410 = vmatprep.subr.mxu0 0.0
        %3411 = vmatpush1.msra.mxu0 0.0
        %3412 = vmatprep.subr.mxu0 0.0
        %3413 = vmatpush1.msra.mxu0 0.0
        %3414 = vmatprep.subr.mxu0 0.0
        %3415 = vmatpush1.msra.mxu0 0.0
        %3416 = vmatprep.subr.mxu0 0.0
        %3417 = vmatpush1.msra.mxu0 0.0
        %3418 = vmatprep.subr.mxu0 0.0
        %3419 = vmatpush1.msra.mxu0 0.0
        %3420 = vmatprep.subr.mxu0 0.0
        %3421 = vmatpush1.msra.mxu0 0.0
        %3422 = vmatprep.subr.mxu0 0.0
        %3423 = vmatpush1.msra.mxu0 0.0
        %3424 = vmatprep.subr.mxu0 0.0
        %3425 = vmatpush1.msra.mxu0 0.0
        %3426 = vmatprep.subr.mxu0 0.0
        %3427 = vmatpush1.msra.mxu0 0.0
        %3428 = vmatprep.subr.mxu0 0.0
        %3429 = vmatpush1.msra.mxu0 0.0
        %3430 = vmatprep.subr.mxu0 %v3381
        %3431 = vmatpush1.msra.mxu0 %v3380
        %3432 = vmatprep.subr.mxu0 %v3379
        %3433 = vmatpush1.msra.mxu0 %v3378
        %3434 = vmatprep.subr.mxu0 0.0
        %3435 = vmatpush2.msra.mxu0 0.0
        %3436 = vmatprep.subr.mxu0 0.0
        %3437 = vmatpush2.msra.mxu0 0.0
        %3438 = vmatprep.subr.mxu0 0.0
        %3439 = vmatpush2.msra.mxu0 0.0
        %3440 = vmatprep.subr.mxu0 0.0
        %3441 = vmatpush2.msra.mxu0 0.0
        %3442 = vmatprep.subr.mxu0 0.0
        %3443 = vmatpush2.msra.mxu0 0.0
        %3444 = vmatprep.subr.mxu0 0.0
        %3445 = vmatpush2.msra.mxu0 0.0
        %3446 = vmatprep.subr.mxu0 0.0
        %3447 = vmatpush2.msra.mxu0 0.0
        %3448 = vmatprep.subr.mxu0 0.0
        %3449 = vmatpush2.msra.mxu0 0.0
        %3450 = vmatprep.subr.mxu0 0.0
        %3451 = vmatpush2.msra.mxu0 0.0
        %3452 = vmatprep.subr.mxu0 0.0
        %3453 = vmatpush2.msra.mxu0 0.0
        %3454 = vmatprep.subr.mxu0 0.0
        %3455 = vmatpush2.msra.mxu0 0.0
        %3456 = vmatprep.subr.mxu0 0.0
        %3457 = vmatpush2.msra.mxu0 0.0
        %3458 = vmatprep.subr.mxu0 0.0
        %3459 = vmatpush2.msra.mxu0 0.0
        %3460 = vmatprep.subr.mxu0 0.0
        %3461 = vmatpush2.msra.mxu0 0.0
        %3462 = vmatprep.subr.mxu0 0.0
        %3463 = vmatpush2.msra.mxu0 0.0
        %3464 = vmatprep.subr.mxu0 0.0
        %3465 = vmatpush2.msra.mxu0 0.0
        %3466 = vmatprep.mubr.f32.mxu0 0.0
        %3467 = vmatmul.mubr.f32.gmra.mxu0 %v437
        %v3468 = vpop.f32.mrf.mxu0
        %v3469 = vadd.f32 0.0, %v3468
        %v3470 = vpop.f32.mrf.mxu0
        %v3471 = vadd.f32 0.0, %v3470
        %3472 = vmatprep.mubr.f32.mxu0 0.0
        %3473 = vmatmul.mubr.f32.gmra.mxu0 %v440
        %v3474 = vpop.f32.mrf.mxu0
        %v3475 = vadd.f32 0.0, %v3474
        %v3476 = vpop.f32.mrf.mxu0
        %v3477 = vadd.f32 0.0, %v3476
        %3478 = vmatprep.mubr.f32.mxu0 0.0
        %3479 = vmatmul.mubr.f32.gmra.mxu0 %v443
        %v3480 = vpop.f32.mrf.mxu0
        %v3481 = vadd.f32 0.0, %v3480
        %v3482 = vpop.f32.mrf.mxu0
        %v3483 = vadd.f32 0.0, %v3482
        %3484 = vmatprep.mubr.f32.mxu0 0.0
        %3485 = vmatmul.mubr.f32.gmra.mxu0 %v446
        %v3486 = vpop.f32.mrf.mxu0
        %v3487 = vadd.f32 0.0, %v3486
        %v3488 = vpop.f32.mrf.mxu0
        %v3489 = vadd.f32 0.0, %v3488
        %3490 = vdwg.mxu0
        %v3491 = vmul.f32 %v3469, %v3398
        %v3492 = vmul.f32 %v3471, %v3399
        %v3493 = vmul.f32 %v3475, %v3400
        %v3494 = vmul.f32 %v3477, %v3401
        %v3495 = vadd.f32 %v3491, %v3493
        %v3496 = vrot.slane %v3495, 4
        %v3497 = vadd.f32 %v3495, %v3496
        %v3498 = vrot.slane %v3497, 2
        %v3499 = vadd.f32 %v3497, %v3498
        %v3500 = vrot.slane %v3499, 1
        %v3501 = vadd.f32 %v3499, %v3500
        %v3502 = vadd.f32 %v3492, %v3494
        %v3503 = vrot.slane %v3502, 4
        %v3504 = vadd.f32 %v3502, %v3503
        %v3505 = vrot.slane %v3504, 2
        %v3506 = vadd.f32 %v3504, %v3505
        %v3507 = vrot.slane %v3506, 1
        %v3508 = vadd.f32 %v3506, %v3507
        %v3509 = vmul.f32 %v3481, %v3398
        %v3510 = vmul.f32 %v3483, %v3399
        %v3511 = vmul.f32 %v3487, %v3400
        %v3512 = vmul.f32 %v3489, %v3401
        %v3513 = vadd.f32 %v3509, %v3511
        %v3514 = vrot.slane %v3513, 4
        %v3515 = vadd.f32 %v3513, %v3514
        %v3516 = vrot.slane %v3515, 2
        %v3517 = vadd.f32 %v3515, %v3516
        %v3518 = vrot.slane %v3517, 1
        %v3519 = vadd.f32 %v3517, %v3518
        %v3520 = vadd.f32 %v3510, %v3512
        %v3521 = vrot.slane %v3520, 4
        %v3522 = vadd.f32 %v3520, %v3521
        %v3523 = vrot.slane %v3522, 2
        %v3524 = vadd.f32 %v3522, %v3523
        %v3525 = vrot.slane %v3524, 1
        %v3526 = vadd.f32 %v3524, %v3525
        %v3527 = vmul.f32 %v3304, 0.5
        %v3528 = vmul.f32 %v3311, 0.5
        %v3529 = vadd.f32 %v3107, %v3527
        %v3530 = vadd.f32 %v3108, %v3528
        %v3531 = vmul.f32 %v3322, 0.5
        %v3532 = vmul.f32 %v3329, 0.5
        %v3533 = vadd.f32 %v3111, %v3531
        %v3534 = vadd.f32 %v3112, %v3532
        %v3535 = vmul.f32 %v3501, 0.5
        %v3536 = vmul.f32 %v3508, 0.5
        %v3537 = vadd.f32 %v3115, %v3535
        %v3538 = vadd.f32 %v3116, %v3536
        %v3539 = vmul.f32 %v3519, 0.5
        %v3540 = vmul.f32 %v3526, 0.5
        %v3541 = vadd.f32 %v3119, %v3539
        %v3542 = vadd.f32 %v3120, %v3540
        %v3543 = vsub.f32 %v3529, %v3537
        %v3544 = vsub.f32 %v3530, %v3538
        %v3545 = vsub.f32 %v3533, %v3541
        %v3546 = vsub.f32 %v3534, %v3542
        %v3547 = vmul.f32 %v3543, %v3543
        %v3548 = vmul.f32 %v3544, %v3544
        %v3549 = vadd.f32 %v3131, %v3547
        %v3550 = vadd.f32 %v3132, %v3548
        %v3551 = vmul.f32 %v3545, %v3545
        %v3552 = vmul.f32 %v3546, %v3546
        %v3553 = vadd.f32 %v3549, %v3551
        %v3554 = vadd.f32 %v3550, %v3552
        %v3557 = vcombine.low %v3553, %v3554
        %v3559 = vunpack.c.l.s4 1966171168
        %v3560 = vunpack.c.0.s8 %v3559
        %v3561 = vlaneseq
        %v3562 = vshrl.u32 %v3561, 7
        %v3563 = vsub.s32 %v3560, %v3562
        %v3564 = vrot.slane %v3557, %v3563
        %v3566 = vunpack.c.l.s4 1966171168
        %v3567 = vunpack.c.0.s8 %v3566
        %v3568 = vlaneseq
        %v3569 = vshrl.u32 %v3568, 7
        %v3570 = vsub.s32 %v3567, %v3569
        %v3571 = vrot.slane %v3564, %v3570
        %v3573 = vlaneseq
        %vm3574 = vcmp.ge.s32.totalorder %v3573, 0
        %vm3575 = vcmp.lt.s32.totalorder %v3573, 256
        %vm3576 = vmand %vm3574, %vm3575
        %3577 = vst.msk [vmem:[%s165] sm:$0x3] %vm3576, %v3571
        %s3578 = sand.u32 %s90, 1
        %s3579 = scalar_lea.sflag [#allocation3], %s3578
        %s3580 = sand.u32 %s90, 1
        %s3581 = smul.addr %s3580, 2
        %s3582 = scalar_lea.vmem [#allocation2], %s3581
        // Predicated region
        $region29: #{tpu_custom_call.1} parent=27 // pred_check
          %p3583 = pneg %p100
        $region30: #{tpu_custom_call.1} parent=27 // pred_check_branch
          %3585 = sbr.rel (%p3583) target = $region32
        $region31: #{tpu_custom_call.1} parent=27 // pred_region
          %s3587 = ssub.s32 32, 32
          %3588 = vsyncadd %s3579, %s3587
          %s3589 = smul.addr %s21, 2
          %s3590 = smul.addr %s20, 2
          %s3591 = sadd.s32 %s3589, %s3590
          %s3592 = smul.addr %s3591, 16
          %s3593 = scalar_lea.hbm %s2, %s3592
          %s3595 = sshll.u32 %s3582, 4
          %s3596 = int_to_ptr.vmem [resolvable:$true] %s3595
          %3598 = dma.vmem_to_hbm [thread:$0]  %s3596, 32, %s3593, %s3579
        $region32: #{tpu_custom_call.1} parent=27 // pred_fallthru
          _
      $region28: #{tpu_custom_call.1} parent=5 // pred_fallthru
        _
      %p3599 = scmp.le.s32.totalorder 2, %s11
      // Predicated region
      $region33: #{tpu_custom_call.1} parent=5 // pred_check
        %p3600 = pneg %p3599
      $region34: #{tpu_custom_call.1} parent=5 // pred_check_branch
        %3602 = sbr.rel (%p3600) target = $region36
      $region35: #{tpu_custom_call.1} parent=5 // pred_region
        %s3603 = ssub.s32 %s11, 2
        // Predicated region
        $region37: #{tpu_custom_call.1} parent=35 // pred_check
          %p3604 = pneg %p106
        $region38: #{tpu_custom_call.1} parent=35 // pred_check_branch
          %3606 = sbr.rel (%p3604) target = $region40
        $region39: #{tpu_custom_call.1} parent=35 // pred_region
          %s3607 = sand.u32 %s91, 1
          %s3608 = scalar_lea.sflag [#allocation3], %s3607
          %s3609 = sand.u32 %s91, 1
          %s3610 = smul.addr %s3609, 2
          %s3611 = scalar_lea.vmem [#allocation2], %s3610
          %3612 = dma.done %s3608, 32
        $region40: #{tpu_custom_call.1} parent=35 // pred_fallthru
          _
      $region36: #{tpu_custom_call.1} parent=5 // pred_fallthru
        _
    $region6: #{tpu_custom_call.1} parent=1 // loop_footer
      %s15 = sadd.s32 1, %s11
    $region7: #{tpu_custom_call.1} parent=1 // loop_footer_branch
      %10 = sbr.rel target = $region3
    $region8: #{tpu_custom_call.1} parent=1 // loop_exit
      _
    %3613 = vsyncpa [#allocation3], 1
    %s3614 = scalar_lea.sflag [#allocation3], 1
    %3615 = vsyncpa %s3614, 1

</llo_original>
